<compile_context>
chip_gen: v6e
topology: v6e:2x2x1
jax: 0.10.0
libtpu: 0.0.40
codegen_flags: <defaults>
</compile_context>

<pallas_src>
import math
import jax
import jax.numpy as jnp
from jax import lax
from jax.experimental import pallas as pl
from jax.experimental.pallas import tpu as pltpu


INPUT_SIZE = 27
HIDDEN = 64
OUTPUT_SIZE = 1


# -----------------------------------------------------------------------------
# Kernel 1: hoisted input projection for both directions in one matmul.
#   x_ref : [T*B, I]   time-major flattened input
#   w_ref : [I, 8H]    [W_ih_f^T | W_ih_r^T], gate order i, f, g, o per half
#   b_ref : [1, 8H]    [b_ih_f + b_hh_f | b_ih_r + b_hh_r]
#   o_ref : [T*B, 8H]  lane-dense (512-wide) output
# -----------------------------------------------------------------------------
def input_proj_kernel(x_ref, w_ref, b_ref, o_ref):
    o_ref[...] = (
        jnp.dot(x_ref[...], w_ref[...], preferred_element_type=jnp.float32)
        + b_ref[...]
    )


def run_input_proj(x_flat, w_comb, b_comb):
    N, I = x_flat.shape
    G = w_comb.shape[1]
    return pl.pallas_call(
        input_proj_kernel,
        out_shape=jax.ShapeDtypeStruct((N, G), jnp.float32),
        grid=(1,),
        in_specs=[
            pl.BlockSpec((N, I), lambda i: (0, 0)),
            pl.BlockSpec((I, G), lambda i: (0, 0)),
            pl.BlockSpec((1, G), lambda i: (0, 0)),
        ],
        out_specs=pl.BlockSpec((N, G), lambda i: (0, 0)),
        compiler_params=pltpu.CompilerParams(dimension_semantics=("arbitrary",)),
    )(x_flat, w_comb, b_comb)


# -----------------------------------------------------------------------------
# Kernel 2: fused bidirectional recurrence + linear head + sigmoid.
#   gx_ref     : [T, B, 8H]  precomputed input gates (cols 0:4H fwd, 4H:8H rev)
#   whh_f_ref  : [H, 4H]     W_hh_f^T
#   whh_r_ref  : [H, 4H]     W_hh_r^T
#   wlin_f_ref : [1, H]      linear weights acting on the forward hidden
#   wlin_r_ref : [1, H]      linear weights acting on the backward hidden
#   blin_ref   : [1, 1]      linear bias
#   o_ref      : [T, B, 1]   sigmoid(linear(...)) per (t, b)
#   hf_sc/hr_sc: [T, B, H]   VMEM scratch holding per-time hidden states
# PyTorch gate order: i, f, g, o.
# -----------------------------------------------------------------------------
def bilstm_head_kernel(gx_ref, whh_f_ref, whh_r_ref, wlin_f_ref, wlin_r_ref,
                       blin_ref, o_ref, hf_sc, hr_sc):
    T, B, _ = gx_ref.shape
    H = whh_f_ref.shape[0]
    G4 = 4 * H

    def step(t, carry):
        h_f, c_f, h_r, c_r = carry

        row_f = gx_ref[t]           # [B, 8H] input gates at time t
        row_r = gx_ref[T - 1 - t]   # [B, 8H] input gates at time T-1-t
        gx_f = row_f[:, :G4]        # fwd half  (lane offset 0,   128-aligned)
        gx_r = row_r[:, G4:]        # rev half  (lane offset 4H,  128-aligned)

        gates_f = gx_f + jnp.dot(h_f, whh_f_ref[...],
                                 preferred_element_type=jnp.float32)
        gates_r = gx_r + jnp.dot(h_r, whh_r_ref[...],
                                 preferred_element_type=jnp.float32)

        i_f = jax.nn.sigmoid(gates_f[:, 0 * H:1 * H])
        f_f = jax.nn.sigmoid(gates_f[:, 1 * H:2 * H])
        g_f = jnp.tanh(gates_f[:, 2 * H:3 * H])
        o_f = jax.nn.sigmoid(gates_f[:, 3 * H:4 * H])
        c_f = f_f * c_f + i_f * g_f
        h_f = o_f * jnp.tanh(c_f)

        i_r = jax.nn.sigmoid(gates_r[:, 0 * H:1 * H])
        f_r = jax.nn.sigmoid(gates_r[:, 1 * H:2 * H])
        g_r = jnp.tanh(gates_r[:, 2 * H:3 * H])
        o_r = jax.nn.sigmoid(gates_r[:, 3 * H:4 * H])
        c_r = f_r * c_r + i_r * g_r
        h_r = o_r * jnp.tanh(c_r)

        hf_sc[t] = h_f               # forward hidden for time t
        hr_sc[T - 1 - t] = h_r       # backward hidden for time T-1-t
        return (h_f, c_f, h_r, c_r)

    zeros = jnp.zeros((B, H), jnp.float32)
    lax.fori_loop(0, T, step, (zeros, zeros, zeros, zeros), unroll=True)

    # Fused split linear head + sigmoid (VPU multiply + lane reduce; avoids a
    # 1-column MXU matmul and any [B, T, 2H] concat / HBM round trip).
    zf = jnp.sum(hf_sc[...] * wlin_f_ref[...], axis=-1, keepdims=True)  # [T,B,1]
    zr = jnp.sum(hr_sc[...] * wlin_r_ref[...], axis=-1, keepdims=True)  # [T,B,1]
    o_ref[...] = jax.nn.sigmoid(zf + zr + blin_ref[...])


def run_bilstm_head(gx3, whh_f_t, whh_r_t, wlin_f, wlin_r, blin):
    T, B, G8 = gx3.shape
    H = whh_f_t.shape[0]
    return pl.pallas_call(
        bilstm_head_kernel,
        out_shape=jax.ShapeDtypeStruct((T, B, OUTPUT_SIZE), jnp.float32),
        grid=(1,),
        in_specs=[
            pl.BlockSpec((T, B, G8), lambda i: (0, 0, 0)),
            pl.BlockSpec((H, 4 * H), lambda i: (0, 0)),
            pl.BlockSpec((H, 4 * H), lambda i: (0, 0)),
            pl.BlockSpec((1, H), lambda i: (0, 0)),
            pl.BlockSpec((1, H), lambda i: (0, 0)),
            pl.BlockSpec((1, 1), lambda i: (0, 0)),
        ],
        out_specs=pl.BlockSpec((T, B, OUTPUT_SIZE), lambda i: (0, 0, 0)),
        scratch_shapes=[
            pltpu.VMEM((T, B, H), jnp.float32),
            pltpu.VMEM((T, B, H), jnp.float32),
        ],
        compiler_params=pltpu.CompilerParams(dimension_semantics=("arbitrary",)),
    )(gx3, whh_f_t, whh_r_t, wlin_f, wlin_r, blin)


# -----------------------------------------------------------------------------
# Parameter init (deterministic, matching PyTorch default shapes):
#   nn.LSTM:  W_ih_{dir} [4H, I], W_hh_{dir} [4H, H], b_ih/b_hh [4H],
#             all U(-1/sqrt(H), 1/sqrt(H))
#   nn.Linear(2H, 1): W [1, 2H], b [1], U(-1/sqrt(2H), 1/sqrt(2H))
# -----------------------------------------------------------------------------
def init_params(key):
    k_lstm = 1.0 / math.sqrt(HIDDEN)
    k_lin = 1.0 / math.sqrt(2 * HIDDEN)
    keys = jax.random.split(key, 10)

    def u(k, shape, bound):
        return jax.random.uniform(k, shape, jnp.float32, -bound, bound)

    return {
        "w_ih_f": u(keys[0], (4 * HIDDEN, INPUT_SIZE), k_lstm),
        "w_hh_f": u(keys[1], (4 * HIDDEN, HIDDEN), k_lstm),
        "b_ih_f": u(keys[2], (4 * HIDDEN,), k_lstm),
        "b_hh_f": u(keys[3], (4 * HIDDEN,), k_lstm),
        "w_ih_r": u(keys[4], (4 * HIDDEN, INPUT_SIZE), k_lstm),
        "w_hh_r": u(keys[5], (4 * HIDDEN, HIDDEN), k_lstm),
        "b_ih_r": u(keys[6], (4 * HIDDEN,), k_lstm),
        "b_hh_r": u(keys[7], (4 * HIDDEN,), k_lstm),
        "w_lin": u(keys[8], (OUTPUT_SIZE, 2 * HIDDEN), k_lin),
        "b_lin": u(keys[9], (OUTPUT_SIZE,), k_lin),
    }


def lstm_forward(x_bti, params):
    """x_bti: [B, T, I] (batch_first, like PyTorch). Returns [B, T, 1]."""
    B, T, I = x_bti.shape
    H = HIDDEN

    # Time-major layout for the recurrence; tiny wrapper-side transposes only.
    x_tbi = jnp.transpose(x_bti, (1, 0, 2)).astype(jnp.float32)   # [T, B, I]
    x_flat = x_tbi.reshape(T * B, I)                              # [T*B, I]

    # Combined input-projection weights/biases for both directions.
    w_ih_comb = jnp.concatenate(
        [params["w_ih_f"].T, params["w_ih_r"].T], axis=1)          # [I, 8H]
    b_comb = jnp.concatenate(
        [params["b_ih_f"] + params["b_hh_f"],
         params["b_ih_r"] + params["b_hh_r"]]).reshape(1, 8 * H)   # [1, 8H]

    # Kernel 1: hoisted input projection (fully pipelineable, MXU-efficient).
    gx = run_input_proj(x_flat, w_ih_comb, b_comb)                 # [T*B, 8H]
    gx3 = gx.reshape(T, B, 8 * H)                                  # [T, B, 8H]

    # Kernel 2: fused bidirectional recurrence + linear head + sigmoid.
    # Dropout(0.5) -> identity in eval mode.
    out_tb1 = run_bilstm_head(
        gx3,
        params["w_hh_f"].T,                 # [H, 4H]
        params["w_hh_r"].T,                 # [H, 4H]
        params["w_lin"][:, :H],             # [1, H]  acts on forward hidden
        params["w_lin"][:, H:],             # [1, H]  acts on backward hidden
        params["b_lin"].reshape(1, 1),      # [1, 1]
    )                                        # [T, B, 1]

    return jnp.transpose(out_tb1, (1, 0, 2))                       # [B, T, 1]


if __name__ == "__main__":
    key = jax.random.PRNGKey(0)
    k_param, k_x = jax.random.split(key)

    B, T = 2, 8
    x = jax.random.normal(k_x, (B, T, INPUT_SIZE), dtype=jnp.float32)
    params = init_params(k_param)

    fwd = jax.jit(lstm_forward)
    out = jax.block_until_ready(fwd(x, params))

    assert out.shape == (B, T, OUTPUT_SIZE)
    assert bool(jnp.all(jnp.isfinite(out)))
    assert bool(jnp.all((out >= 0.0) & (out <= 1.0)))  # sigmoid range
    print("KERNEL_OK")
</pallas_src>

<mosaic_0001>
module attributes {stable_mosaic.version = 11 : i64} {
  func.func @input_proj_kernel(%arg0: i32, %arg1: memref<16x27xf32, #tpu.memory_space<vmem>>, %arg2: memref<27x512xf32, #tpu.memory_space<vmem>>, %arg3: memref<1x512xf32, #tpu.memory_space<vmem>>, %arg4: memref<16x512xf32, #tpu.memory_space<vmem>>) attributes {dimension_semantics = [#tpu.dimension_semantics<arbitrary>], iteration_bounds = array<i64: 1>, scalar_prefetch = 0 : i64, scratch_operands = 0 : i64, tpu.core_type = #tpu.core_type<tc>, window_params = [{pipeline_mode = #tpu.pipeline_mode<synchronous>, transform_indices = @transform_0, window_bounds = array<i64: 16, 27>}, {pipeline_mode = #tpu.pipeline_mode<synchronous>, transform_indices = @transform_1, window_bounds = array<i64: 27, 512>}, {pipeline_mode = #tpu.pipeline_mode<synchronous>, transform_indices = @transform_2, window_bounds = array<i64: 1, 512>}, {pipeline_mode = #tpu.pipeline_mode<synchronous>, transform_indices = @transform_3, window_bounds = array<i64: 16, 512>}]} {
    %c0 = arith.constant 0 : index
    %c0_0 = arith.constant 0 : index
    %0 = vector.load %arg1[%c0, %c0_0] : memref<16x27xf32, #tpu.memory_space<vmem>>, vector<16x27xf32>
    %c0_1 = arith.constant 0 : index
    %c0_2 = arith.constant 0 : index
    %1 = vector.load %arg2[%c0_1, %c0_2] : memref<27x512xf32, #tpu.memory_space<vmem>>, vector<27x512xf32>
    %cst = arith.constant dense<0.000000e+00> : vector<16x512xf32>
    %2 = tpu.matmul %0, %1, %cst {dimension_numbers = #tpu.dot_dimension_numbers<[1], [0], [0], [1], [0, 0, 1, 1], [], []>} : vector<16x27xf32>, vector<27x512xf32>, vector<16x512xf32> -> vector<16x512xf32>
    %c0_3 = arith.constant 0 : index
    %c0_4 = arith.constant 0 : index
    %3 = vector.load %arg3[%c0_3, %c0_4] : memref<1x512xf32, #tpu.memory_space<vmem>>, vector<1x512xf32>
    %4 = vector.broadcast %3 : vector<1x512xf32> to vector<16x512xf32>
    %5 = arith.addf %2, %4 : vector<16x512xf32>
    %c0_5 = arith.constant 0 : index
    %c0_6 = arith.constant 0 : index
    %6 = vector.load %arg4[%c0_5, %c0_6] : memref<16x512xf32, #tpu.memory_space<vmem>>, vector<16x512xf32>
    tpu.vector_store %arg4[%c0_5, %c0_6], %5 {strides = array<i32>} : memref<16x512xf32, #tpu.memory_space<vmem>>, vector<16x512xf32>,
    return
  }
  func.func @transform_0(%arg0: i32) -> (i32, i32) {
    %c0_i32 = arith.constant 0 : i32
    %c0_i32_0 = arith.constant 0 : i32
    %c0_i32_1 = arith.constant 0 : i32
    return %c0_i32, %c0_i32_0 : i32, i32
  }
  func.func @transform_1(%arg0: i32) -> (i32, i32) {
    %c0_i32 = arith.constant 0 : i32
    %c0_i32_0 = arith.constant 0 : i32
    %c0_i32_1 = arith.constant 0 : i32
    return %c0_i32, %c0_i32_0 : i32, i32
  }
  func.func @transform_2(%arg0: i32) -> (i32, i32) {
    %c0_i32 = arith.constant 0 : i32
    %c0_i32_0 = arith.constant 0 : i32
    %c0_i32_1 = arith.constant 0 : i32
    return %c0_i32, %c0_i32_0 : i32, i32
  }
  func.func @transform_3(%arg0: i32) -> (i32, i32) {
    %c0_i32 = arith.constant 0 : i32
    %c0_i32_0 = arith.constant 0 : i32
    %c0_i32_1 = arith.constant 0 : i32
    return %c0_i32, %c0_i32_0 : i32, i32
  }
}

module attributes {stable_mosaic.version = 11 : i64} {
  func.func @bilstm_head_kernel(%arg0: i32, %arg1: memref<8x2x512xf32, #tpu.memory_space<vmem>>, %arg2: memref<64x256xf32, #tpu.memory_space<vmem>>, %arg3: memref<64x256xf32, #tpu.memory_space<vmem>>, %arg4: memref<1x64xf32, #tpu.memory_space<vmem>>, %arg5: memref<1x64xf32, #tpu.memory_space<vmem>>, %arg6: memref<1x1xf32, #tpu.memory_space<vmem>>, %arg7: memref<8x2x1xf32, #tpu.memory_space<vmem>>, %arg8: memref<8x2x64xf32, #tpu.memory_space<vmem>>, %arg9: memref<8x2x64xf32, #tpu.memory_space<vmem>>) attributes {dimension_semantics = [#tpu.dimension_semantics<arbitrary>], iteration_bounds = array<i64: 1>, scalar_prefetch = 0 : i64, scratch_operands = 2 : i64, tpu.core_type = #tpu.core_type<tc>, window_params = [{pipeline_mode = #tpu.pipeline_mode<synchronous>, transform_indices = @transform_0, window_bounds = array<i64: 8, 2, 512>}, {pipeline_mode = #tpu.pipeline_mode<synchronous>, transform_indices = @transform_1, window_bounds = array<i64: 64, 256>}, {pipeline_mode = #tpu.pipeline_mode<synchronous>, transform_indices = @transform_2, window_bounds = array<i64: 64, 256>}, {pipeline_mode = #tpu.pipeline_mode<synchronous>, transform_indices = @transform_3, window_bounds = array<i64: 1, 64>}, {pipeline_mode = #tpu.pipeline_mode<synchronous>, transform_indices = @transform_4, window_bounds = array<i64: 1, 64>}, {pipeline_mode = #tpu.pipeline_mode<synchronous>, transform_indices = @transform_5, window_bounds = array<i64: 1, 1>}, {pipeline_mode = #tpu.pipeline_mode<synchronous>, transform_indices = @transform_6, window_bounds = array<i64: 8, 2, 1>}]} {
    %cst = arith.constant 0.000000e+00 : f32
    %0 = vector.broadcast %cst : f32 to vector<2x64xf32>
    %c0_i32 = arith.constant 0 : i32
    %1 = arith.index_cast %c0_i32 : i32 to index
    %c0 = arith.constant 0 : index
    %c0_0 = arith.constant 0 : index
    %2 = vector.load %arg1[%1, %c0, %c0_0] : memref<8x2x512xf32, #tpu.memory_space<vmem>>, vector<1x2x512xf32>
    %3 = vector.shape_cast %2 : vector<1x2x512xf32> to vector<2x512xf32>
    %c7_i32 = arith.constant 7 : i32
    %4 = arith.subi %c7_i32, %c0_i32 : i32
    %5 = arith.index_cast %4 : i32 to index
    %c0_1 = arith.constant 0 : index
    %c0_2 = arith.constant 0 : index
    %6 = vector.load %arg1[%5, %c0_1, %c0_2] : memref<8x2x512xf32, #tpu.memory_space<vmem>>, vector<1x2x512xf32>
    %7 = vector.shape_cast %6 : vector<1x2x512xf32> to vector<2x512xf32>
    %8 = vector.extract_strided_slice %3 {offsets = [0, 0], sizes = [2, 256], strides = [1, 1]} : vector<2x512xf32> to vector<2x256xf32>
    %9 = vector.extract_strided_slice %7 {offsets = [0, 256], sizes = [2, 256], strides = [1, 1]} : vector<2x512xf32> to vector<2x256xf32>
    %c0_3 = arith.constant 0 : index
    %c0_4 = arith.constant 0 : index
    %10 = vector.load %arg2[%c0_3, %c0_4] : memref<64x256xf32, #tpu.memory_space<vmem>>, vector<64x256xf32>
    %cst_5 = arith.constant dense<0.000000e+00> : vector<2x256xf32>
    %11 = tpu.matmul %0, %10, %cst_5 {dimension_numbers = #tpu.dot_dimension_numbers<[1], [0], [0], [1], [0, 0, 1, 1], [], []>} : vector<2x64xf32>, vector<64x256xf32>, vector<2x256xf32> -> vector<2x256xf32>
    %12 = arith.addf %8, %11 : vector<2x256xf32>
    %c0_6 = arith.constant 0 : index
    %c0_7 = arith.constant 0 : index
    %13 = vector.load %arg3[%c0_6, %c0_7] : memref<64x256xf32, #tpu.memory_space<vmem>>, vector<64x256xf32>
    %cst_8 = arith.constant dense<0.000000e+00> : vector<2x256xf32>
    %14 = tpu.matmul %0, %13, %cst_8 {dimension_numbers = #tpu.dot_dimension_numbers<[1], [0], [0], [1], [0, 0, 1, 1], [], []>} : vector<2x64xf32>, vector<64x256xf32>, vector<2x256xf32> -> vector<2x256xf32>
    %15 = arith.addf %9, %14 : vector<2x256xf32>
    %16 = vector.extract_strided_slice %12 {offsets = [0, 0], sizes = [2, 64], strides = [1, 1]} : vector<2x256xf32> to vector<2x64xf32>
    %17 = arith.negf %16 : vector<2x64xf32>
    %18 = math.exp %17 : vector<2x64xf32>
    %cst_9 = arith.constant 1.000000e+00 : f32
    %19 = vector.broadcast %cst_9 : f32 to vector<2x64xf32>
    %20 = arith.addf %19, %18 : vector<2x64xf32>
    %21 = arith.divf %19, %20 : vector<2x64xf32>
    %22 = vector.extract_strided_slice %12 {offsets = [0, 64], sizes = [2, 64], strides = [1, 1]} : vector<2x256xf32> to vector<2x64xf32>
    %23 = arith.negf %22 : vector<2x64xf32>
    %24 = math.exp %23 : vector<2x64xf32>
    %cst_10 = arith.constant 1.000000e+00 : f32
    %25 = vector.broadcast %cst_10 : f32 to vector<2x64xf32>
    %26 = arith.addf %25, %24 : vector<2x64xf32>
    %27 = arith.divf %25, %26 : vector<2x64xf32>
    %28 = vector.extract_strided_slice %12 {offsets = [0, 128], sizes = [2, 64], strides = [1, 1]} : vector<2x256xf32> to vector<2x64xf32>
    %29 = math.tanh %28 : vector<2x64xf32>
    %30 = vector.extract_strided_slice %12 {offsets = [0, 192], sizes = [2, 64], strides = [1, 1]} : vector<2x256xf32> to vector<2x64xf32>
    %31 = arith.negf %30 : vector<2x64xf32>
    %32 = math.exp %31 : vector<2x64xf32>
    %cst_11 = arith.constant 1.000000e+00 : f32
    %33 = vector.broadcast %cst_11 : f32 to vector<2x64xf32>
    %34 = arith.addf %33, %32 : vector<2x64xf32>
    %35 = arith.divf %33, %34 : vector<2x64xf32>
    %36 = arith.mulf %27, %0 : vector<2x64xf32>
    %37 = arith.mulf %21, %29 : vector<2x64xf32>
    %38 = arith.addf %36, %37 : vector<2x64xf32>
    %39 = math.tanh %38 : vector<2x64xf32>
    %40 = arith.mulf %35, %39 : vector<2x64xf32>
    %41 = vector.extract_strided_slice %15 {offsets = [0, 0], sizes = [2, 64], strides = [1, 1]} : vector<2x256xf32> to vector<2x64xf32>
    %42 = arith.negf %41 : vector<2x64xf32>
    %43 = math.exp %42 : vector<2x64xf32>
    %cst_12 = arith.constant 1.000000e+00 : f32
    %44 = vector.broadcast %cst_12 : f32 to vector<2x64xf32>
    %45 = arith.addf %44, %43 : vector<2x64xf32>
    %46 = arith.divf %44, %45 : vector<2x64xf32>
    %47 = vector.extract_strided_slice %15 {offsets = [0, 64], sizes = [2, 64], strides = [1, 1]} : vector<2x256xf32> to vector<2x64xf32>
    %48 = arith.negf %47 : vector<2x64xf32>
    %49 = math.exp %48 : vector<2x64xf32>
    %cst_13 = arith.constant 1.000000e+00 : f32
    %50 = vector.broadcast %cst_13 : f32 to vector<2x64xf32>
    %51 = arith.addf %50, %49 : vector<2x64xf32>
    %52 = arith.divf %50, %51 : vector<2x64xf32>
    %53 = vector.extract_strided_slice %15 {offsets = [0, 128], sizes = [2, 64], strides = [1, 1]} : vector<2x256xf32> to vector<2x64xf32>
    %54 = math.tanh %53 : vector<2x64xf32>
    %55 = vector.extract_strided_slice %15 {offsets = [0, 192], sizes = [2, 64], strides = [1, 1]} : vector<2x256xf32> to vector<2x64xf32>
    %56 = arith.negf %55 : vector<2x64xf32>
    %57 = math.exp %56 : vector<2x64xf32>
    %cst_14 = arith.constant 1.000000e+00 : f32
    %58 = vector.broadcast %cst_14 : f32 to vector<2x64xf32>
    %59 = arith.addf %58, %57 : vector<2x64xf32>
    %60 = arith.divf %58, %59 : vector<2x64xf32>
    %61 = arith.mulf %52, %0 : vector<2x64xf32>
    %62 = arith.mulf %46, %54 : vector<2x64xf32>
    %63 = arith.addf %61, %62 : vector<2x64xf32>
    %64 = math.tanh %63 : vector<2x64xf32>
    %65 = arith.mulf %60, %64 : vector<2x64xf32>
    %66 = arith.index_cast %c0_i32 : i32 to index
    %c0_15 = arith.constant 0 : index
    %c0_16 = arith.constant 0 : index
    %67 = vector.load %arg8[%66, %c0_15, %c0_16] : memref<8x2x64xf32, #tpu.memory_space<vmem>>, vector<1x2x64xf32>
    %68 = vector.shape_cast %67 : vector<1x2x64xf32> to vector<2x64xf32>
    %69 = vector.shape_cast %40 : vector<2x64xf32> to vector<1x2x64xf32>
    tpu.vector_store %arg8[%66, %c0_15, %c0_16], %69 {strides = array<i32>} : memref<8x2x64xf32, #tpu.memory_space<vmem>>, vector<1x2x64xf32>,
    %c7_i32_17 = arith.constant 7 : i32
    %70 = arith.subi %c7_i32_17, %c0_i32 : i32
    %71 = arith.index_cast %70 : i32 to index
    %c0_18 = arith.constant 0 : index
    %c0_19 = arith.constant 0 : index
    %72 = vector.load %arg9[%71, %c0_18, %c0_19] : memref<8x2x64xf32, #tpu.memory_space<vmem>>, vector<1x2x64xf32>
    %73 = vector.shape_cast %72 : vector<1x2x64xf32> to vector<2x64xf32>
    %74 = vector.shape_cast %65 : vector<2x64xf32> to vector<1x2x64xf32>
    tpu.vector_store %arg9[%71, %c0_18, %c0_19], %74 {strides = array<i32>} : memref<8x2x64xf32, #tpu.memory_space<vmem>>, vector<1x2x64xf32>,
    %c1_i32 = arith.constant 1 : i32
    %75 = arith.index_cast %c1_i32 : i32 to index
    %c0_20 = arith.constant 0 : index
    %c0_21 = arith.constant 0 : index
    %76 = vector.load %arg1[%75, %c0_20, %c0_21] : memref<8x2x512xf32, #tpu.memory_space<vmem>>, vector<1x2x512xf32>
    %77 = vector.shape_cast %76 : vector<1x2x512xf32> to vector<2x512xf32>
    %c7_i32_22 = arith.constant 7 : i32
    %78 = arith.subi %c7_i32_22, %c1_i32 : i32
    %79 = arith.index_cast %78 : i32 to index
    %c0_23 = arith.constant 0 : index
    %c0_24 = arith.constant 0 : index
    %80 = vector.load %arg1[%79, %c0_23, %c0_24] : memref<8x2x512xf32, #tpu.memory_space<vmem>>, vector<1x2x512xf32>
    %81 = vector.shape_cast %80 : vector<1x2x512xf32> to vector<2x512xf32>
    %82 = vector.extract_strided_slice %77 {offsets = [0, 0], sizes = [2, 256], strides = [1, 1]} : vector<2x512xf32> to vector<2x256xf32>
    %83 = vector.extract_strided_slice %81 {offsets = [0, 256], sizes = [2, 256], strides = [1, 1]} : vector<2x512xf32> to vector<2x256xf32>
    %c0_25 = arith.constant 0 : index
    %c0_26 = arith.constant 0 : index
    %84 = vector.load %arg2[%c0_25, %c0_26] : memref<64x256xf32, #tpu.memory_space<vmem>>, vector<64x256xf32>
    %cst_27 = arith.constant dense<0.000000e+00> : vector<2x256xf32>
    %85 = tpu.matmul %40, %84, %cst_27 {dimension_numbers = #tpu.dot_dimension_numbers<[1], [0], [0], [1], [0, 0, 1, 1], [], []>} : vector<2x64xf32>, vector<64x256xf32>, vector<2x256xf32> -> vector<2x256xf32>
    %86 = arith.addf %82, %85 : vector<2x256xf32>
    %c0_28 = arith.constant 0 : index
    %c0_29 = arith.constant 0 : index
    %87 = vector.load %arg3[%c0_28, %c0_29] : memref<64x256xf32, #tpu.memory_space<vmem>>, vector<64x256xf32>
    %cst_30 = arith.constant dense<0.000000e+00> : vector<2x256xf32>
    %88 = tpu.matmul %65, %87, %cst_30 {dimension_numbers = #tpu.dot_dimension_numbers<[1], [0], [0], [1], [0, 0, 1, 1], [], []>} : vector<2x64xf32>, vector<64x256xf32>, vector<2x256xf32> -> vector<2x256xf32>
    %89 = arith.addf %83, %88 : vector<2x256xf32>
    %90 = vector.extract_strided_slice %86 {offsets = [0, 0], sizes = [2, 64], strides = [1, 1]} : vector<2x256xf32> to vector<2x64xf32>
    %91 = arith.negf %90 : vector<2x64xf32>
    %92 = math.exp %91 : vector<2x64xf32>
    %cst_31 = arith.constant 1.000000e+00 : f32
    %93 = vector.broadcast %cst_31 : f32 to vector<2x64xf32>
    %94 = arith.addf %93, %92 : vector<2x64xf32>
    %95 = arith.divf %93, %94 : vector<2x64xf32>
    %96 = vector.extract_strided_slice %86 {offsets = [0, 64], sizes = [2, 64], strides = [1, 1]} : vector<2x256xf32> to vector<2x64xf32>
    %97 = arith.negf %96 : vector<2x64xf32>
    %98 = math.exp %97 : vector<2x64xf32>
    %cst_32 = arith.constant 1.000000e+00 : f32
    %99 = vector.broadcast %cst_32 : f32 to vector<2x64xf32>
    %100 = arith.addf %99, %98 : vector<2x64xf32>
    %101 = arith.divf %99, %100 : vector<2x64xf32>
    %102 = vector.extract_strided_slice %86 {offsets = [0, 128], sizes = [2, 64], strides = [1, 1]} : vector<2x256xf32> to vector<2x64xf32>
    %103 = math.tanh %102 : vector<2x64xf32>
    %104 = vector.extract_strided_slice %86 {offsets = [0, 192], sizes = [2, 64], strides = [1, 1]} : vector<2x256xf32> to vector<2x64xf32>
    %105 = arith.negf %104 : vector<2x64xf32>
    %106 = math.exp %105 : vector<2x64xf32>
    %cst_33 = arith.constant 1.000000e+00 : f32
    %107 = vector.broadcast %cst_33 : f32 to vector<2x64xf32>
    %108 = arith.addf %107, %106 : vector<2x64xf32>
    %109 = arith.divf %107, %108 : vector<2x64xf32>
    %110 = arith.mulf %101, %38 : vector<2x64xf32>
    %111 = arith.mulf %95, %103 : vector<2x64xf32>
    %112 = arith.addf %110, %111 : vector<2x64xf32>
    %113 = math.tanh %112 : vector<2x64xf32>
    %114 = arith.mulf %109, %113 : vector<2x64xf32>
    %115 = vector.extract_strided_slice %89 {offsets = [0, 0], sizes = [2, 64], strides = [1, 1]} : vector<2x256xf32> to vector<2x64xf32>
    %116 = arith.negf %115 : vector<2x64xf32>
    %117 = math.exp %116 : vector<2x64xf32>
    %cst_34 = arith.constant 1.000000e+00 : f32
    %118 = vector.broadcast %cst_34 : f32 to vector<2x64xf32>
    %119 = arith.addf %118, %117 : vector<2x64xf32>
    %120 = arith.divf %118, %119 : vector<2x64xf32>
    %121 = vector.extract_strided_slice %89 {offsets = [0, 64], sizes = [2, 64], strides = [1, 1]} : vector<2x256xf32> to vector<2x64xf32>
    %122 = arith.negf %121 : vector<2x64xf32>
    %123 = math.exp %122 : vector<2x64xf32>
    %cst_35 = arith.constant 1.000000e+00 : f32
    %124 = vector.broadcast %cst_35 : f32 to vector<2x64xf32>
    %125 = arith.addf %124, %123 : vector<2x64xf32>
    %126 = arith.divf %124, %125 : vector<2x64xf32>
    %127 = vector.extract_strided_slice %89 {offsets = [0, 128], sizes = [2, 64], strides = [1, 1]} : vector<2x256xf32> to vector<2x64xf32>
    %128 = math.tanh %127 : vector<2x64xf32>
    %129 = vector.extract_strided_slice %89 {offsets = [0, 192], sizes = [2, 64], strides = [1, 1]} : vector<2x256xf32> to vector<2x64xf32>
    %130 = arith.negf %129 : vector<2x64xf32>
    %131 = math.exp %130 : vector<2x64xf32>
    %cst_36 = arith.constant 1.000000e+00 : f32
    %132 = vector.broadcast %cst_36 : f32 to vector<2x64xf32>
    %133 = arith.addf %132, %131 : vector<2x64xf32>
    %134 = arith.divf %132, %133 : vector<2x64xf32>
    %135 = arith.mulf %126, %63 : vector<2x64xf32>
    %136 = arith.mulf %120, %128 : vector<2x64xf32>
    %137 = arith.addf %135, %136 : vector<2x64xf32>
    %138 = math.tanh %137 : vector<2x64xf32>
    %139 = arith.mulf %134, %138 : vector<2x64xf32>
    %140 = arith.index_cast %c1_i32 : i32 to index
    %c0_37 = arith.constant 0 : index
    %c0_38 = arith.constant 0 : index
    %141 = vector.load %arg8[%140, %c0_37, %c0_38] : memref<8x2x64xf32, #tpu.memory_space<vmem>>, vector<1x2x64xf32>
    %142 = vector.shape_cast %141 : vector<1x2x64xf32> to vector<2x64xf32>
    %143 = vector.shape_cast %114 : vector<2x64xf32> to vector<1x2x64xf32>
    tpu.vector_store %arg8[%140, %c0_37, %c0_38], %143 {strides = array<i32>} : memref<8x2x64xf32, #tpu.memory_space<vmem>>, vector<1x2x64xf32>,
    %c7_i32_39 = arith.constant 7 : i32
    %144 = arith.subi %c7_i32_39, %c1_i32 : i32
    %145 = arith.index_cast %144 : i32 to index
    %c0_40 = arith.constant 0 : index
    %c0_41 = arith.constant 0 : index
    %146 = vector.load %arg9[%145, %c0_40, %c0_41] : memref<8x2x64xf32, #tpu.memory_space<vmem>>, vector<1x2x64xf32>
    %147 = vector.shape_cast %146 : vector<1x2x64xf32> to vector<2x64xf32>
    %148 = vector.shape_cast %139 : vector<2x64xf32> to vector<1x2x64xf32>
    tpu.vector_store %arg9[%145, %c0_40, %c0_41], %148 {strides = array<i32>} : memref<8x2x64xf32, #tpu.memory_space<vmem>>, vector<1x2x64xf32>,
    %c2_i32 = arith.constant 2 : i32
    %149 = arith.index_cast %c2_i32 : i32 to index
    %c0_42 = arith.constant 0 : index
    %c0_43 = arith.constant 0 : index
    %150 = vector.load %arg1[%149, %c0_42, %c0_43] : memref<8x2x512xf32, #tpu.memory_space<vmem>>, vector<1x2x512xf32>
    %151 = vector.shape_cast %150 : vector<1x2x512xf32> to vector<2x512xf32>
    %c7_i32_44 = arith.constant 7 : i32
    %152 = arith.subi %c7_i32_44, %c2_i32 : i32
    %153 = arith.index_cast %152 : i32 to index
    %c0_45 = arith.constant 0 : index
    %c0_46 = arith.constant 0 : index
    %154 = vector.load %arg1[%153, %c0_45, %c0_46] : memref<8x2x512xf32, #tpu.memory_space<vmem>>, vector<1x2x512xf32>
    %155 = vector.shape_cast %154 : vector<1x2x512xf32> to vector<2x512xf32>
    %156 = vector.extract_strided_slice %151 {offsets = [0, 0], sizes = [2, 256], strides = [1, 1]} : vector<2x512xf32> to vector<2x256xf32>
    %157 = vector.extract_strided_slice %155 {offsets = [0, 256], sizes = [2, 256], strides = [1, 1]} : vector<2x512xf32> to vector<2x256xf32>
    %c0_47 = arith.constant 0 : index
    %c0_48 = arith.constant 0 : index
    %158 = vector.load %arg2[%c0_47, %c0_48] : memref<64x256xf32, #tpu.memory_space<vmem>>, vector<64x256xf32>
    %cst_49 = arith.constant dense<0.000000e+00> : vector<2x256xf32>
    %159 = tpu.matmul %114, %158, %cst_49 {dimension_numbers = #tpu.dot_dimension_numbers<[1], [0], [0], [1], [0, 0, 1, 1], [], []>} : vector<2x64xf32>, vector<64x256xf32>, vector<2x256xf32> -> vector<2x256xf32>
    %160 = arith.addf %156, %159 : vector<2x256xf32>
    %c0_50 = arith.constant 0 : index
    %c0_51 = arith.constant 0 : index
    %161 = vector.load %arg3[%c0_50, %c0_51] : memref<64x256xf32, #tpu.memory_space<vmem>>, vector<64x256xf32>
    %cst_52 = arith.constant dense<0.000000e+00> : vector<2x256xf32>
    %162 = tpu.matmul %139, %161, %cst_52 {dimension_numbers = #tpu.dot_dimension_numbers<[1], [0], [0], [1], [0, 0, 1, 1], [], []>} : vector<2x64xf32>, vector<64x256xf32>, vector<2x256xf32> -> vector<2x256xf32>
    %163 = arith.addf %157, %162 : vector<2x256xf32>
    %164 = vector.extract_strided_slice %160 {offsets = [0, 0], sizes = [2, 64], strides = [1, 1]} : vector<2x256xf32> to vector<2x64xf32>
    %165 = arith.negf %164 : vector<2x64xf32>
    %166 = math.exp %165 : vector<2x64xf32>
    %cst_53 = arith.constant 1.000000e+00 : f32
    %167 = vector.broadcast %cst_53 : f32 to vector<2x64xf32>
    %168 = arith.addf %167, %166 : vector<2x64xf32>
    %169 = arith.divf %167, %168 : vector<2x64xf32>
    %170 = vector.extract_strided_slice %160 {offsets = [0, 64], sizes = [2, 64], strides = [1, 1]} : vector<2x256xf32> to vector<2x64xf32>
    %171 = arith.negf %170 : vector<2x64xf32>
    %172 = math.exp %171 : vector<2x64xf32>
    %cst_54 = arith.constant 1.000000e+00 : f32
    %173 = vector.broadcast %cst_54 : f32 to vector<2x64xf32>
    %174 = arith.addf %173, %172 : vector<2x64xf32>
    %175 = arith.divf %173, %174 : vector<2x64xf32>
    %176 = vector.extract_strided_slice %160 {offsets = [0, 128], sizes = [2, 64], strides = [1, 1]} : vector<2x256xf32> to vector<2x64xf32>
    %177 = math.tanh %176 : vector<2x64xf32>
    %178 = vector.extract_strided_slice %160 {offsets = [0, 192], sizes = [2, 64], strides = [1, 1]} : vector<2x256xf32> to vector<2x64xf32>
    %179 = arith.negf %178 : vector<2x64xf32>
    %180 = math.exp %179 : vector<2x64xf32>
    %cst_55 = arith.constant 1.000000e+00 : f32
    %181 = vector.broadcast %cst_55 : f32 to vector<2x64xf32>
    %182 = arith.addf %181, %180 : vector<2x64xf32>
    %183 = arith.divf %181, %182 : vector<2x64xf32>
    %184 = arith.mulf %175, %112 : vector<2x64xf32>
    %185 = arith.mulf %169, %177 : vector<2x64xf32>
    %186 = arith.addf %184, %185 : vector<2x64xf32>
    %187 = math.tanh %186 : vector<2x64xf32>
    %188 = arith.mulf %183, %187 : vector<2x64xf32>
    %189 = vector.extract_strided_slice %163 {offsets = [0, 0], sizes = [2, 64], strides = [1, 1]} : vector<2x256xf32> to vector<2x64xf32>
    %190 = arith.negf %189 : vector<2x64xf32>
    %191 = math.exp %190 : vector<2x64xf32>
    %cst_56 = arith.constant 1.000000e+00 : f32
    %192 = vector.broadcast %cst_56 : f32 to vector<2x64xf32>
    %193 = arith.addf %192, %191 : vector<2x64xf32>
    %194 = arith.divf %192, %193 : vector<2x64xf32>
    %195 = vector.extract_strided_slice %163 {offsets = [0, 64], sizes = [2, 64], strides = [1, 1]} : vector<2x256xf32> to vector<2x64xf32>
    %196 = arith.negf %195 : vector<2x64xf32>
    %197 = math.exp %196 : vector<2x64xf32>
    %cst_57 = arith.constant 1.000000e+00 : f32
    %198 = vector.broadcast %cst_57 : f32 to vector<2x64xf32>
    %199 = arith.addf %198, %197 : vector<2x64xf32>
    %200 = arith.divf %198, %199 : vector<2x64xf32>
    %201 = vector.extract_strided_slice %163 {offsets = [0, 128], sizes = [2, 64], strides = [1, 1]} : vector<2x256xf32> to vector<2x64xf32>
    %202 = math.tanh %201 : vector<2x64xf32>
    %203 = vector.extract_strided_slice %163 {offsets = [0, 192], sizes = [2, 64], strides = [1, 1]} : vector<2x256xf32> to vector<2x64xf32>
    %204 = arith.negf %203 : vector<2x64xf32>
    %205 = math.exp %204 : vector<2x64xf32>
    %cst_58 = arith.constant 1.000000e+00 : f32
    %206 = vector.broadcast %cst_58 : f32 to vector<2x64xf32>
    %207 = arith.addf %206, %205 : vector<2x64xf32>
    %208 = arith.divf %206, %207 : vector<2x64xf32>
    %209 = arith.mulf %200, %137 : vector<2x64xf32>
    %210 = arith.mulf %194, %202 : vector<2x64xf32>
    %211 = arith.addf %209, %210 : vector<2x64xf32>
    %212 = math.tanh %211 : vector<2x64xf32>
    %213 = arith.mulf %208, %212 : vector<2x64xf32>
    %214 = arith.index_cast %c2_i32 : i32 to index
    %c0_59 = arith.constant 0 : index
    %c0_60 = arith.constant 0 : index
    %215 = vector.load %arg8[%214, %c0_59, %c0_60] : memref<8x2x64xf32, #tpu.memory_space<vmem>>, vector<1x2x64xf32>
    %216 = vector.shape_cast %215 : vector<1x2x64xf32> to vector<2x64xf32>
    %217 = vector.shape_cast %188 : vector<2x64xf32> to vector<1x2x64xf32>
    tpu.vector_store %arg8[%214, %c0_59, %c0_60], %217 {strides = array<i32>} : memref<8x2x64xf32, #tpu.memory_space<vmem>>, vector<1x2x64xf32>,
    %c7_i32_61 = arith.constant 7 : i32
    %218 = arith.subi %c7_i32_61, %c2_i32 : i32
    %219 = arith.index_cast %218 : i32 to index
    %c0_62 = arith.constant 0 : index
    %c0_63 = arith.constant 0 : index
    %220 = vector.load %arg9[%219, %c0_62, %c0_63] : memref<8x2x64xf32, #tpu.memory_space<vmem>>, vector<1x2x64xf32>
    %221 = vector.shape_cast %220 : vector<1x2x64xf32> to vector<2x64xf32>
    %222 = vector.shape_cast %213 : vector<2x64xf32> to vector<1x2x64xf32>
    tpu.vector_store %arg9[%219, %c0_62, %c0_63], %222 {strides = array<i32>} : memref<8x2x64xf32, #tpu.memory_space<vmem>>, vector<1x2x64xf32>,
    %c3_i32 = arith.constant 3 : i32
    %223 = arith.index_cast %c3_i32 : i32 to index
    %c0_64 = arith.constant 0 : index
    %c0_65 = arith.constant 0 : index
    %224 = vector.load %arg1[%223, %c0_64, %c0_65] : memref<8x2x512xf32, #tpu.memory_space<vmem>>, vector<1x2x512xf32>
    %225 = vector.shape_cast %224 : vector<1x2x512xf32> to vector<2x512xf32>
    %c7_i32_66 = arith.constant 7 : i32
    %226 = arith.subi %c7_i32_66, %c3_i32 : i32
    %227 = arith.index_cast %226 : i32 to index
    %c0_67 = arith.constant 0 : index
    %c0_68 = arith.constant 0 : index
    %228 = vector.load %arg1[%227, %c0_67, %c0_68] : memref<8x2x512xf32, #tpu.memory_space<vmem>>, vector<1x2x512xf32>
    %229 = vector.shape_cast %228 : vector<1x2x512xf32> to vector<2x512xf32>
    %230 = vector.extract_strided_slice %225 {offsets = [0, 0], sizes = [2, 256], strides = [1, 1]} : vector<2x512xf32> to vector<2x256xf32>
    %231 = vector.extract_strided_slice %229 {offsets = [0, 256], sizes = [2, 256], strides = [1, 1]} : vector<2x512xf32> to vector<2x256xf32>
    %c0_69 = arith.constant 0 : index
    %c0_70 = arith.constant 0 : index
    %232 = vector.load %arg2[%c0_69, %c0_70] : memref<64x256xf32, #tpu.memory_space<vmem>>, vector<64x256xf32>
    %cst_71 = arith.constant dense<0.000000e+00> : vector<2x256xf32>
    %233 = tpu.matmul %188, %232, %cst_71 {dimension_numbers = #tpu.dot_dimension_numbers<[1], [0], [0], [1], [0, 0, 1, 1], [], []>} : vector<2x64xf32>, vector<64x256xf32>, vector<2x256xf32> -> vector<2x256xf32>
    %234 = arith.addf %230, %233 : vector<2x256xf32>
    %c0_72 = arith.constant 0 : index
    %c0_73 = arith.constant 0 : index
    %235 = vector.load %arg3[%c0_72, %c0_73] : memref<64x256xf32, #tpu.memory_space<vmem>>, vector<64x256xf32>
    %cst_74 = arith.constant dense<0.000000e+00> : vector<2x256xf32>
    %236 = tpu.matmul %213, %235, %cst_74 {dimension_numbers = #tpu.dot_dimension_numbers<[1], [0], [0], [1], [0, 0, 1, 1], [], []>} : vector<2x64xf32>, vector<64x256xf32>, vector<2x256xf32> -> vector<2x256xf32>
    %237 = arith.addf %231, %236 : vector<2x256xf32>
    %238 = vector.extract_strided_slice %234 {offsets = [0, 0], sizes = [2, 64], strides = [1, 1]} : vector<2x256xf32> to vector<2x64xf32>
    %239 = arith.negf %238 : vector<2x64xf32>
    %240 = math.exp %239 : vector<2x64xf32>
    %cst_75 = arith.constant 1.000000e+00 : f32
    %241 = vector.broadcast %cst_75 : f32 to vector<2x64xf32>
    %242 = arith.addf %241, %240 : vector<2x64xf32>
    %243 = arith.divf %241, %242 : vector<2x64xf32>
    %244 = vector.extract_strided_slice %234 {offsets = [0, 64], sizes = [2, 64], strides = [1, 1]} : vector<2x256xf32> to vector<2x64xf32>
    %245 = arith.negf %244 : vector<2x64xf32>
    %246 = math.exp %245 : vector<2x64xf32>
    %cst_76 = arith.constant 1.000000e+00 : f32
    %247 = vector.broadcast %cst_76 : f32 to vector<2x64xf32>
    %248 = arith.addf %247, %246 : vector<2x64xf32>
    %249 = arith.divf %247, %248 : vector<2x64xf32>
    %250 = vector.extract_strided_slice %234 {offsets = [0, 128], sizes = [2, 64], strides = [1, 1]} : vector<2x256xf32> to vector<2x64xf32>
    %251 = math.tanh %250 : vector<2x64xf32>
    %252 = vector.extract_strided_slice %234 {offsets = [0, 192], sizes = [2, 64], strides = [1, 1]} : vector<2x256xf32> to vector<2x64xf32>
    %253 = arith.negf %252 : vector<2x64xf32>
    %254 = math.exp %253 : vector<2x64xf32>
    %cst_77 = arith.constant 1.000000e+00 : f32
    %255 = vector.broadcast %cst_77 : f32 to vector<2x64xf32>
    %256 = arith.addf %255, %254 : vector<2x64xf32>
    %257 = arith.divf %255, %256 : vector<2x64xf32>
    %258 = arith.mulf %249, %186 : vector<2x64xf32>
    %259 = arith.mulf %243, %251 : vector<2x64xf32>
    %260 = arith.addf %258, %259 : vector<2x64xf32>
    %261 = math.tanh %260 : vector<2x64xf32>
    %262 = arith.mulf %257, %261 : vector<2x64xf32>
    %263 = vector.extract_strided_slice %237 {offsets = [0, 0], sizes = [2, 64], strides = [1, 1]} : vector<2x256xf32> to vector<2x64xf32>
    %264 = arith.negf %263 : vector<2x64xf32>
    %265 = math.exp %264 : vector<2x64xf32>
    %cst_78 = arith.constant 1.000000e+00 : f32
    %266 = vector.broadcast %cst_78 : f32 to vector<2x64xf32>
    %267 = arith.addf %266, %265 : vector<2x64xf32>
    %268 = arith.divf %266, %267 : vector<2x64xf32>
    %269 = vector.extract_strided_slice %237 {offsets = [0, 64], sizes = [2, 64], strides = [1, 1]} : vector<2x256xf32> to vector<2x64xf32>
    %270 = arith.negf %269 : vector<2x64xf32>
    %271 = math.exp %270 : vector<2x64xf32>
    %cst_79 = arith.constant 1.000000e+00 : f32
    %272 = vector.broadcast %cst_79 : f32 to vector<2x64xf32>
    %273 = arith.addf %272, %271 : vector<2x64xf32>
    %274 = arith.divf %272, %273 : vector<2x64xf32>
    %275 = vector.extract_strided_slice %237 {offsets = [0, 128], sizes = [2, 64], strides = [1, 1]} : vector<2x256xf32> to vector<2x64xf32>
    %276 = math.tanh %275 : vector<2x64xf32>
    %277 = vector.extract_strided_slice %237 {offsets = [0, 192], sizes = [2, 64], strides = [1, 1]} : vector<2x256xf32> to vector<2x64xf32>
    %278 = arith.negf %277 : vector<2x64xf32>
    %279 = math.exp %278 : vector<2x64xf32>
    %cst_80 = arith.constant 1.000000e+00 : f32
    %280 = vector.broadcast %cst_80 : f32 to vector<2x64xf32>
    %281 = arith.addf %280, %279 : vector<2x64xf32>
    %282 = arith.divf %280, %281 : vector<2x64xf32>
    %283 = arith.mulf %274, %211 : vector<2x64xf32>
    %284 = arith.mulf %268, %276 : vector<2x64xf32>
    %285 = arith.addf %283, %284 : vector<2x64xf32>
    %286 = math.tanh %285 : vector<2x64xf32>
    %287 = arith.mulf %282, %286 : vector<2x64xf32>
    %288 = arith.index_cast %c3_i32 : i32 to index
    %c0_81 = arith.constant 0 : index
    %c0_82 = arith.constant 0 : index
    %289 = vector.load %arg8[%288, %c0_81, %c0_82] : memref<8x2x64xf32, #tpu.memory_space<vmem>>, vector<1x2x64xf32>
    %290 = vector.shape_cast %289 : vector<1x2x64xf32> to vector<2x64xf32>
    %291 = vector.shape_cast %262 : vector<2x64xf32> to vector<1x2x64xf32>
    tpu.vector_store %arg8[%288, %c0_81, %c0_82], %291 {strides = array<i32>} : memref<8x2x64xf32, #tpu.memory_space<vmem>>, vector<1x2x64xf32>,
    %c7_i32_83 = arith.constant 7 : i32
    %292 = arith.subi %c7_i32_83, %c3_i32 : i32
    %293 = arith.index_cast %292 : i32 to index
    %c0_84 = arith.constant 0 : index
    %c0_85 = arith.constant 0 : index
    %294 = vector.load %arg9[%293, %c0_84, %c0_85] : memref<8x2x64xf32, #tpu.memory_space<vmem>>, vector<1x2x64xf32>
    %295 = vector.shape_cast %294 : vector<1x2x64xf32> to vector<2x64xf32>
    %296 = vector.shape_cast %287 : vector<2x64xf32> to vector<1x2x64xf32>
    tpu.vector_store %arg9[%293, %c0_84, %c0_85], %296 {strides = array<i32>} : memref<8x2x64xf32, #tpu.memory_space<vmem>>, vector<1x2x64xf32>,
    %c4_i32 = arith.constant 4 : i32
    %297 = arith.index_cast %c4_i32 : i32 to index
    %c0_86 = arith.constant 0 : index
    %c0_87 = arith.constant 0 : index
    %298 = vector.load %arg1[%297, %c0_86, %c0_87] : memref<8x2x512xf32, #tpu.memory_space<vmem>>, vector<1x2x512xf32>
    %299 = vector.shape_cast %298 : vector<1x2x512xf32> to vector<2x512xf32>
    %c7_i32_88 = arith.constant 7 : i32
    %300 = arith.subi %c7_i32_88, %c4_i32 : i32
    %301 = arith.index_cast %300 : i32 to index
    %c0_89 = arith.constant 0 : index
    %c0_90 = arith.constant 0 : index
    %302 = vector.load %arg1[%301, %c0_89, %c0_90] : memref<8x2x512xf32, #tpu.memory_space<vmem>>, vector<1x2x512xf32>
    %303 = vector.shape_cast %302 : vector<1x2x512xf32> to vector<2x512xf32>
    %304 = vector.extract_strided_slice %299 {offsets = [0, 0], sizes = [2, 256], strides = [1, 1]} : vector<2x512xf32> to vector<2x256xf32>
    %305 = vector.extract_strided_slice %303 {offsets = [0, 256], sizes = [2, 256], strides = [1, 1]} : vector<2x512xf32> to vector<2x256xf32>
    %c0_91 = arith.constant 0 : index
    %c0_92 = arith.constant 0 : index
    %306 = vector.load %arg2[%c0_91, %c0_92] : memref<64x256xf32, #tpu.memory_space<vmem>>, vector<64x256xf32>
    %cst_93 = arith.constant dense<0.000000e+00> : vector<2x256xf32>
    %307 = tpu.matmul %262, %306, %cst_93 {dimension_numbers = #tpu.dot_dimension_numbers<[1], [0], [0], [1], [0, 0, 1, 1], [], []>} : vector<2x64xf32>, vector<64x256xf32>, vector<2x256xf32> -> vector<2x256xf32>
    %308 = arith.addf %304, %307 : vector<2x256xf32>
    %c0_94 = arith.constant 0 : index
    %c0_95 = arith.constant 0 : index
    %309 = vector.load %arg3[%c0_94, %c0_95] : memref<64x256xf32, #tpu.memory_space<vmem>>, vector<64x256xf32>
    %cst_96 = arith.constant dense<0.000000e+00> : vector<2x256xf32>
    %310 = tpu.matmul %287, %309, %cst_96 {dimension_numbers = #tpu.dot_dimension_numbers<[1], [0], [0], [1], [0, 0, 1, 1], [], []>} : vector<2x64xf32>, vector<64x256xf32>, vector<2x256xf32> -> vector<2x256xf32>
    %311 = arith.addf %305, %310 : vector<2x256xf32>
    %312 = vector.extract_strided_slice %308 {offsets = [0, 0], sizes = [2, 64], strides = [1, 1]} : vector<2x256xf32> to vector<2x64xf32>
    %313 = arith.negf %312 : vector<2x64xf32>
    %314 = math.exp %313 : vector<2x64xf32>
    %cst_97 = arith.constant 1.000000e+00 : f32
    %315 = vector.broadcast %cst_97 : f32 to vector<2x64xf32>
    %316 = arith.addf %315, %314 : vector<2x64xf32>
    %317 = arith.divf %315, %316 : vector<2x64xf32>
    %318 = vector.extract_strided_slice %308 {offsets = [0, 64], sizes = [2, 64], strides = [1, 1]} : vector<2x256xf32> to vector<2x64xf32>
    %319 = arith.negf %318 : vector<2x64xf32>
    %320 = math.exp %319 : vector<2x64xf32>
    %cst_98 = arith.constant 1.000000e+00 : f32
    %321 = vector.broadcast %cst_98 : f32 to vector<2x64xf32>
    %322 = arith.addf %321, %320 : vector<2x64xf32>
    %323 = arith.divf %321, %322 : vector<2x64xf32>
    %324 = vector.extract_strided_slice %308 {offsets = [0, 128], sizes = [2, 64], strides = [1, 1]} : vector<2x256xf32> to vector<2x64xf32>
    %325 = math.tanh %324 : vector<2x64xf32>
    %326 = vector.extract_strided_slice %308 {offsets = [0, 192], sizes = [2, 64], strides = [1, 1]} : vector<2x256xf32> to vector<2x64xf32>
    %327 = arith.negf %326 : vector<2x64xf32>
    %328 = math.exp %327 : vector<2x64xf32>
    %cst_99 = arith.constant 1.000000e+00 : f32
    %329 = vector.broadcast %cst_99 : f32 to vector<2x64xf32>
    %330 = arith.addf %329, %328 : vector<2x64xf32>
    %331 = arith.divf %329, %330 : vector<2x64xf32>
    %332 = arith.mulf %323, %260 : vector<2x64xf32>
    %333 = arith.mulf %317, %325 : vector<2x64xf32>
    %334 = arith.addf %332, %333 : vector<2x64xf32>
    %335 = math.tanh %334 : vector<2x64xf32>
    %336 = arith.mulf %331, %335 : vector<2x64xf32>
    %337 = vector.extract_strided_slice %311 {offsets = [0, 0], sizes = [2, 64], strides = [1, 1]} : vector<2x256xf32> to vector<2x64xf32>
    %338 = arith.negf %337 : vector<2x64xf32>
    %339 = math.exp %338 : vector<2x64xf32>
    %cst_100 = arith.constant 1.000000e+00 : f32
    %340 = vector.broadcast %cst_100 : f32 to vector<2x64xf32>
    %341 = arith.addf %340, %339 : vector<2x64xf32>
    %342 = arith.divf %340, %341 : vector<2x64xf32>
    %343 = vector.extract_strided_slice %311 {offsets = [0, 64], sizes = [2, 64], strides = [1, 1]} : vector<2x256xf32> to vector<2x64xf32>
    %344 = arith.negf %343 : vector<2x64xf32>
    %345 = math.exp %344 : vector<2x64xf32>
    %cst_101 = arith.constant 1.000000e+00 : f32
    %346 = vector.broadcast %cst_101 : f32 to vector<2x64xf32>
    %347 = arith.addf %346, %345 : vector<2x64xf32>
    %348 = arith.divf %346, %347 : vector<2x64xf32>
    %349 = vector.extract_strided_slice %311 {offsets = [0, 128], sizes = [2, 64], strides = [1, 1]} : vector<2x256xf32> to vector<2x64xf32>
    %350 = math.tanh %349 : vector<2x64xf32>
    %351 = vector.extract_strided_slice %311 {offsets = [0, 192], sizes = [2, 64], strides = [1, 1]} : vector<2x256xf32> to vector<2x64xf32>
    %352 = arith.negf %351 : vector<2x64xf32>
    %353 = math.exp %352 : vector<2x64xf32>
    %cst_102 = arith.constant 1.000000e+00 : f32
    %354 = vector.broadcast %cst_102 : f32 to vector<2x64xf32>
    %355 = arith.addf %354, %353 : vector<2x64xf32>
    %356 = arith.divf %354, %355 : vector<2x64xf32>
    %357 = arith.mulf %348, %285 : vector<2x64xf32>
    %358 = arith.mulf %342, %350 : vector<2x64xf32>
    %359 = arith.addf %357, %358 : vector<2x64xf32>
    %360 = math.tanh %359 : vector<2x64xf32>
    %361 = arith.mulf %356, %360 : vector<2x64xf32>
    %362 = arith.index_cast %c4_i32 : i32 to index
    %c0_103 = arith.constant 0 : index
    %c0_104 = arith.constant 0 : index
    %363 = vector.load %arg8[%362, %c0_103, %c0_104] : memref<8x2x64xf32, #tpu.memory_space<vmem>>, vector<1x2x64xf32>
    %364 = vector.shape_cast %363 : vector<1x2x64xf32> to vector<2x64xf32>
    %365 = vector.shape_cast %336 : vector<2x64xf32> to vector<1x2x64xf32>
    tpu.vector_store %arg8[%362, %c0_103, %c0_104], %365 {strides = array<i32>} : memref<8x2x64xf32, #tpu.memory_space<vmem>>, vector<1x2x64xf32>,
    %c7_i32_105 = arith.constant 7 : i32
    %366 = arith.subi %c7_i32_105, %c4_i32 : i32
    %367 = arith.index_cast %366 : i32 to index
    %c0_106 = arith.constant 0 : index
    %c0_107 = arith.constant 0 : index
    %368 = vector.load %arg9[%367, %c0_106, %c0_107] : memref<8x2x64xf32, #tpu.memory_space<vmem>>, vector<1x2x64xf32>
    %369 = vector.shape_cast %368 : vector<1x2x64xf32> to vector<2x64xf32>
    %370 = vector.shape_cast %361 : vector<2x64xf32> to vector<1x2x64xf32>
    tpu.vector_store %arg9[%367, %c0_106, %c0_107], %370 {strides = array<i32>} : memref<8x2x64xf32, #tpu.memory_space<vmem>>, vector<1x2x64xf32>,
    %c5_i32 = arith.constant 5 : i32
    %371 = arith.index_cast %c5_i32 : i32 to index
    %c0_108 = arith.constant 0 : index
    %c0_109 = arith.constant 0 : index
    %372 = vector.load %arg1[%371, %c0_108, %c0_109] : memref<8x2x512xf32, #tpu.memory_space<vmem>>, vector<1x2x512xf32>
    %373 = vector.shape_cast %372 : vector<1x2x512xf32> to vector<2x512xf32>
    %c7_i32_110 = arith.constant 7 : i32
    %374 = arith.subi %c7_i32_110, %c5_i32 : i32
    %375 = arith.index_cast %374 : i32 to index
    %c0_111 = arith.constant 0 : index
    %c0_112 = arith.constant 0 : index
    %376 = vector.load %arg1[%375, %c0_111, %c0_112] : memref<8x2x512xf32, #tpu.memory_space<vmem>>, vector<1x2x512xf32>
    %377 = vector.shape_cast %376 : vector<1x2x512xf32> to vector<2x512xf32>
    %378 = vector.extract_strided_slice %373 {offsets = [0, 0], sizes = [2, 256], strides = [1, 1]} : vector<2x512xf32> to vector<2x256xf32>
    %379 = vector.extract_strided_slice %377 {offsets = [0, 256], sizes = [2, 256], strides = [1, 1]} : vector<2x512xf32> to vector<2x256xf32>
    %c0_113 = arith.constant 0 : index
    %c0_114 = arith.constant 0 : index
    %380 = vector.load %arg2[%c0_113, %c0_114] : memref<64x256xf32, #tpu.memory_space<vmem>>, vector<64x256xf32>
    %cst_115 = arith.constant dense<0.000000e+00> : vector<2x256xf32>
    %381 = tpu.matmul %336, %380, %cst_115 {dimension_numbers = #tpu.dot_dimension_numbers<[1], [0], [0], [1], [0, 0, 1, 1], [], []>} : vector<2x64xf32>, vector<64x256xf32>, vector<2x256xf32> -> vector<2x256xf32>
    %382 = arith.addf %378, %381 : vector<2x256xf32>
    %c0_116 = arith.constant 0 : index
    %c0_117 = arith.constant 0 : index
    %383 = vector.load %arg3[%c0_116, %c0_117] : memref<64x256xf32, #tpu.memory_space<vmem>>, vector<64x256xf32>
    %cst_118 = arith.constant dense<0.000000e+00> : vector<2x256xf32>
    %384 = tpu.matmul %361, %383, %cst_118 {dimension_numbers = #tpu.dot_dimension_numbers<[1], [0], [0], [1], [0, 0, 1, 1], [], []>} : vector<2x64xf32>, vector<64x256xf32>, vector<2x256xf32> -> vector<2x256xf32>
    %385 = arith.addf %379, %384 : vector<2x256xf32>
    %386 = vector.extract_strided_slice %382 {offsets = [0, 0], sizes = [2, 64], strides = [1, 1]} : vector<2x256xf32> to vector<2x64xf32>
    %387 = arith.negf %386 : vector<2x64xf32>
    %388 = math.exp %387 : vector<2x64xf32>
    %cst_119 = arith.constant 1.000000e+00 : f32
    %389 = vector.broadcast %cst_119 : f32 to vector<2x64xf32>
    %390 = arith.addf %389, %388 : vector<2x64xf32>
    %391 = arith.divf %389, %390 : vector<2x64xf32>
    %392 = vector.extract_strided_slice %382 {offsets = [0, 64], sizes = [2, 64], strides = [1, 1]} : vector<2x256xf32> to vector<2x64xf32>
    %393 = arith.negf %392 : vector<2x64xf32>
    %394 = math.exp %393 : vector<2x64xf32>
    %cst_120 = arith.constant 1.000000e+00 : f32
    %395 = vector.broadcast %cst_120 : f32 to vector<2x64xf32>
    %396 = arith.addf %395, %394 : vector<2x64xf32>
    %397 = arith.divf %395, %396 : vector<2x64xf32>
    %398 = vector.extract_strided_slice %382 {offsets = [0, 128], sizes = [2, 64], strides = [1, 1]} : vector<2x256xf32> to vector<2x64xf32>
    %399 = math.tanh %398 : vector<2x64xf32>
    %400 = vector.extract_strided_slice %382 {offsets = [0, 192], sizes = [2, 64], strides = [1, 1]} : vector<2x256xf32> to vector<2x64xf32>
    %401 = arith.negf %400 : vector<2x64xf32>
    %402 = math.exp %401 : vector<2x64xf32>
    %cst_121 = arith.constant 1.000000e+00 : f32
    %403 = vector.broadcast %cst_121 : f32 to vector<2x64xf32>
    %404 = arith.addf %403, %402 : vector<2x64xf32>
    %405 = arith.divf %403, %404 : vector<2x64xf32>
    %406 = arith.mulf %397, %334 : vector<2x64xf32>
    %407 = arith.mulf %391, %399 : vector<2x64xf32>
    %408 = arith.addf %406, %407 : vector<2x64xf32>
    %409 = math.tanh %408 : vector<2x64xf32>
    %410 = arith.mulf %405, %409 : vector<2x64xf32>
    %411 = vector.extract_strided_slice %385 {offsets = [0, 0], sizes = [2, 64], strides = [1, 1]} : vector<2x256xf32> to vector<2x64xf32>
    %412 = arith.negf %411 : vector<2x64xf32>
    %413 = math.exp %412 : vector<2x64xf32>
    %cst_122 = arith.constant 1.000000e+00 : f32
    %414 = vector.broadcast %cst_122 : f32 to vector<2x64xf32>
    %415 = arith.addf %414, %413 : vector<2x64xf32>
    %416 = arith.divf %414, %415 : vector<2x64xf32>
    %417 = vector.extract_strided_slice %385 {offsets = [0, 64], sizes = [2, 64], strides = [1, 1]} : vector<2x256xf32> to vector<2x64xf32>
    %418 = arith.negf %417 : vector<2x64xf32>
    %419 = math.exp %418 : vector<2x64xf32>
    %cst_123 = arith.constant 1.000000e+00 : f32
    %420 = vector.broadcast %cst_123 : f32 to vector<2x64xf32>
    %421 = arith.addf %420, %419 : vector<2x64xf32>
    %422 = arith.divf %420, %421 : vector<2x64xf32>
    %423 = vector.extract_strided_slice %385 {offsets = [0, 128], sizes = [2, 64], strides = [1, 1]} : vector<2x256xf32> to vector<2x64xf32>
    %424 = math.tanh %423 : vector<2x64xf32>
    %425 = vector.extract_strided_slice %385 {offsets = [0, 192], sizes = [2, 64], strides = [1, 1]} : vector<2x256xf32> to vector<2x64xf32>
    %426 = arith.negf %425 : vector<2x64xf32>
    %427 = math.exp %426 : vector<2x64xf32>
    %cst_124 = arith.constant 1.000000e+00 : f32
    %428 = vector.broadcast %cst_124 : f32 to vector<2x64xf32>
    %429 = arith.addf %428, %427 : vector<2x64xf32>
    %430 = arith.divf %428, %429 : vector<2x64xf32>
    %431 = arith.mulf %422, %359 : vector<2x64xf32>
    %432 = arith.mulf %416, %424 : vector<2x64xf32>
    %433 = arith.addf %431, %432 : vector<2x64xf32>
    %434 = math.tanh %433 : vector<2x64xf32>
    %435 = arith.mulf %430, %434 : vector<2x64xf32>
    %436 = arith.index_cast %c5_i32 : i32 to index
    %c0_125 = arith.constant 0 : index
    %c0_126 = arith.constant 0 : index
    %437 = vector.load %arg8[%436, %c0_125, %c0_126] : memref<8x2x64xf32, #tpu.memory_space<vmem>>, vector<1x2x64xf32>
    %438 = vector.shape_cast %437 : vector<1x2x64xf32> to vector<2x64xf32>
    %439 = vector.shape_cast %410 : vector<2x64xf32> to vector<1x2x64xf32>
    tpu.vector_store %arg8[%436, %c0_125, %c0_126], %439 {strides = array<i32>} : memref<8x2x64xf32, #tpu.memory_space<vmem>>, vector<1x2x64xf32>,
    %c7_i32_127 = arith.constant 7 : i32
    %440 = arith.subi %c7_i32_127, %c5_i32 : i32
    %441 = arith.index_cast %440 : i32 to index
    %c0_128 = arith.constant 0 : index
    %c0_129 = arith.constant 0 : index
    %442 = vector.load %arg9[%441, %c0_128, %c0_129] : memref<8x2x64xf32, #tpu.memory_space<vmem>>, vector<1x2x64xf32>
    %443 = vector.shape_cast %442 : vector<1x2x64xf32> to vector<2x64xf32>
    %444 = vector.shape_cast %435 : vector<2x64xf32> to vector<1x2x64xf32>
    tpu.vector_store %arg9[%441, %c0_128, %c0_129], %444 {strides = array<i32>} : memref<8x2x64xf32, #tpu.memory_space<vmem>>, vector<1x2x64xf32>,
    %c6_i32 = arith.constant 6 : i32
    %445 = arith.index_cast %c6_i32 : i32 to index
    %c0_130 = arith.constant 0 : index
    %c0_131 = arith.constant 0 : index
    %446 = vector.load %arg1[%445, %c0_130, %c0_131] : memref<8x2x512xf32, #tpu.memory_space<vmem>>, vector<1x2x512xf32>
    %447 = vector.shape_cast %446 : vector<1x2x512xf32> to vector<2x512xf32>
    %c7_i32_132 = arith.constant 7 : i32
    %448 = arith.subi %c7_i32_132, %c6_i32 : i32
    %449 = arith.index_cast %448 : i32 to index
    %c0_133 = arith.constant 0 : index
    %c0_134 = arith.constant 0 : index
    %450 = vector.load %arg1[%449, %c0_133, %c0_134] : memref<8x2x512xf32, #tpu.memory_space<vmem>>, vector<1x2x512xf32>
    %451 = vector.shape_cast %450 : vector<1x2x512xf32> to vector<2x512xf32>
    %452 = vector.extract_strided_slice %447 {offsets = [0, 0], sizes = [2, 256], strides = [1, 1]} : vector<2x512xf32> to vector<2x256xf32>
    %453 = vector.extract_strided_slice %451 {offsets = [0, 256], sizes = [2, 256], strides = [1, 1]} : vector<2x512xf32> to vector<2x256xf32>
    %c0_135 = arith.constant 0 : index
    %c0_136 = arith.constant 0 : index
    %454 = vector.load %arg2[%c0_135, %c0_136] : memref<64x256xf32, #tpu.memory_space<vmem>>, vector<64x256xf32>
    %cst_137 = arith.constant dense<0.000000e+00> : vector<2x256xf32>
    %455 = tpu.matmul %410, %454, %cst_137 {dimension_numbers = #tpu.dot_dimension_numbers<[1], [0], [0], [1], [0, 0, 1, 1], [], []>} : vector<2x64xf32>, vector<64x256xf32>, vector<2x256xf32> -> vector<2x256xf32>
    %456 = arith.addf %452, %455 : vector<2x256xf32>
    %c0_138 = arith.constant 0 : index
    %c0_139 = arith.constant 0 : index
    %457 = vector.load %arg3[%c0_138, %c0_139] : memref<64x256xf32, #tpu.memory_space<vmem>>, vector<64x256xf32>
    %cst_140 = arith.constant dense<0.000000e+00> : vector<2x256xf32>
    %458 = tpu.matmul %435, %457, %cst_140 {dimension_numbers = #tpu.dot_dimension_numbers<[1], [0], [0], [1], [0, 0, 1, 1], [], []>} : vector<2x64xf32>, vector<64x256xf32>, vector<2x256xf32> -> vector<2x256xf32>
    %459 = arith.addf %453, %458 : vector<2x256xf32>
    %460 = vector.extract_strided_slice %456 {offsets = [0, 0], sizes = [2, 64], strides = [1, 1]} : vector<2x256xf32> to vector<2x64xf32>
    %461 = arith.negf %460 : vector<2x64xf32>
    %462 = math.exp %461 : vector<2x64xf32>
    %cst_141 = arith.constant 1.000000e+00 : f32
    %463 = vector.broadcast %cst_141 : f32 to vector<2x64xf32>
    %464 = arith.addf %463, %462 : vector<2x64xf32>
    %465 = arith.divf %463, %464 : vector<2x64xf32>
    %466 = vector.extract_strided_slice %456 {offsets = [0, 64], sizes = [2, 64], strides = [1, 1]} : vector<2x256xf32> to vector<2x64xf32>
    %467 = arith.negf %466 : vector<2x64xf32>
    %468 = math.exp %467 : vector<2x64xf32>
    %cst_142 = arith.constant 1.000000e+00 : f32
    %469 = vector.broadcast %cst_142 : f32 to vector<2x64xf32>
    %470 = arith.addf %469, %468 : vector<2x64xf32>
    %471 = arith.divf %469, %470 : vector<2x64xf32>
    %472 = vector.extract_strided_slice %456 {offsets = [0, 128], sizes = [2, 64], strides = [1, 1]} : vector<2x256xf32> to vector<2x64xf32>
    %473 = math.tanh %472 : vector<2x64xf32>
    %474 = vector.extract_strided_slice %456 {offsets = [0, 192], sizes = [2, 64], strides = [1, 1]} : vector<2x256xf32> to vector<2x64xf32>
    %475 = arith.negf %474 : vector<2x64xf32>
    %476 = math.exp %475 : vector<2x64xf32>
    %cst_143 = arith.constant 1.000000e+00 : f32
    %477 = vector.broadcast %cst_143 : f32 to vector<2x64xf32>
    %478 = arith.addf %477, %476 : vector<2x64xf32>
    %479 = arith.divf %477, %478 : vector<2x64xf32>
    %480 = arith.mulf %471, %408 : vector<2x64xf32>
    %481 = arith.mulf %465, %473 : vector<2x64xf32>
    %482 = arith.addf %480, %481 : vector<2x64xf32>
    %483 = math.tanh %482 : vector<2x64xf32>
    %484 = arith.mulf %479, %483 : vector<2x64xf32>
    %485 = vector.extract_strided_slice %459 {offsets = [0, 0], sizes = [2, 64], strides = [1, 1]} : vector<2x256xf32> to vector<2x64xf32>
    %486 = arith.negf %485 : vector<2x64xf32>
    %487 = math.exp %486 : vector<2x64xf32>
    %cst_144 = arith.constant 1.000000e+00 : f32
    %488 = vector.broadcast %cst_144 : f32 to vector<2x64xf32>
    %489 = arith.addf %488, %487 : vector<2x64xf32>
    %490 = arith.divf %488, %489 : vector<2x64xf32>
    %491 = vector.extract_strided_slice %459 {offsets = [0, 64], sizes = [2, 64], strides = [1, 1]} : vector<2x256xf32> to vector<2x64xf32>
    %492 = arith.negf %491 : vector<2x64xf32>
    %493 = math.exp %492 : vector<2x64xf32>
    %cst_145 = arith.constant 1.000000e+00 : f32
    %494 = vector.broadcast %cst_145 : f32 to vector<2x64xf32>
    %495 = arith.addf %494, %493 : vector<2x64xf32>
    %496 = arith.divf %494, %495 : vector<2x64xf32>
    %497 = vector.extract_strided_slice %459 {offsets = [0, 128], sizes = [2, 64], strides = [1, 1]} : vector<2x256xf32> to vector<2x64xf32>
    %498 = math.tanh %497 : vector<2x64xf32>
    %499 = vector.extract_strided_slice %459 {offsets = [0, 192], sizes = [2, 64], strides = [1, 1]} : vector<2x256xf32> to vector<2x64xf32>
    %500 = arith.negf %499 : vector<2x64xf32>
    %501 = math.exp %500 : vector<2x64xf32>
    %cst_146 = arith.constant 1.000000e+00 : f32
    %502 = vector.broadcast %cst_146 : f32 to vector<2x64xf32>
    %503 = arith.addf %502, %501 : vector<2x64xf32>
    %504 = arith.divf %502, %503 : vector<2x64xf32>
    %505 = arith.mulf %496, %433 : vector<2x64xf32>
    %506 = arith.mulf %490, %498 : vector<2x64xf32>
    %507 = arith.addf %505, %506 : vector<2x64xf32>
    %508 = math.tanh %507 : vector<2x64xf32>
    %509 = arith.mulf %504, %508 : vector<2x64xf32>
    %510 = arith.index_cast %c6_i32 : i32 to index
    %c0_147 = arith.constant 0 : index
    %c0_148 = arith.constant 0 : index
    %511 = vector.load %arg8[%510, %c0_147, %c0_148] : memref<8x2x64xf32, #tpu.memory_space<vmem>>, vector<1x2x64xf32>
    %512 = vector.shape_cast %511 : vector<1x2x64xf32> to vector<2x64xf32>
    %513 = vector.shape_cast %484 : vector<2x64xf32> to vector<1x2x64xf32>
    tpu.vector_store %arg8[%510, %c0_147, %c0_148], %513 {strides = array<i32>} : memref<8x2x64xf32, #tpu.memory_space<vmem>>, vector<1x2x64xf32>,
    %c7_i32_149 = arith.constant 7 : i32
    %514 = arith.subi %c7_i32_149, %c6_i32 : i32
    %515 = arith.index_cast %514 : i32 to index
    %c0_150 = arith.constant 0 : index
    %c0_151 = arith.constant 0 : index
    %516 = vector.load %arg9[%515, %c0_150, %c0_151] : memref<8x2x64xf32, #tpu.memory_space<vmem>>, vector<1x2x64xf32>
    %517 = vector.shape_cast %516 : vector<1x2x64xf32> to vector<2x64xf32>
    %518 = vector.shape_cast %509 : vector<2x64xf32> to vector<1x2x64xf32>
    tpu.vector_store %arg9[%515, %c0_150, %c0_151], %518 {strides = array<i32>} : memref<8x2x64xf32, #tpu.memory_space<vmem>>, vector<1x2x64xf32>,
    %c7_i32_152 = arith.constant 7 : i32
    %519 = arith.index_cast %c7_i32_152 : i32 to index
    %c0_153 = arith.constant 0 : index
    %c0_154 = arith.constant 0 : index
    %520 = vector.load %arg1[%519, %c0_153, %c0_154] : memref<8x2x512xf32, #tpu.memory_space<vmem>>, vector<1x2x512xf32>
    %521 = vector.shape_cast %520 : vector<1x2x512xf32> to vector<2x512xf32>
    %c7_i32_155 = arith.constant 7 : i32
    %522 = arith.subi %c7_i32_155, %c7_i32_152 : i32
    %523 = arith.index_cast %522 : i32 to index
    %c0_156 = arith.constant 0 : index
    %c0_157 = arith.constant 0 : index
    %524 = vector.load %arg1[%523, %c0_156, %c0_157] : memref<8x2x512xf32, #tpu.memory_space<vmem>>, vector<1x2x512xf32>
    %525 = vector.shape_cast %524 : vector<1x2x512xf32> to vector<2x512xf32>
    %526 = vector.extract_strided_slice %521 {offsets = [0, 0], sizes = [2, 256], strides = [1, 1]} : vector<2x512xf32> to vector<2x256xf32>
    %527 = vector.extract_strided_slice %525 {offsets = [0, 256], sizes = [2, 256], strides = [1, 1]} : vector<2x512xf32> to vector<2x256xf32>
    %c0_158 = arith.constant 0 : index
    %c0_159 = arith.constant 0 : index
    %528 = vector.load %arg2[%c0_158, %c0_159] : memref<64x256xf32, #tpu.memory_space<vmem>>, vector<64x256xf32>
    %cst_160 = arith.constant dense<0.000000e+00> : vector<2x256xf32>
    %529 = tpu.matmul %484, %528, %cst_160 {dimension_numbers = #tpu.dot_dimension_numbers<[1], [0], [0], [1], [0, 0, 1, 1], [], []>} : vector<2x64xf32>, vector<64x256xf32>, vector<2x256xf32> -> vector<2x256xf32>
    %530 = arith.addf %526, %529 : vector<2x256xf32>
    %c0_161 = arith.constant 0 : index
    %c0_162 = arith.constant 0 : index
    %531 = vector.load %arg3[%c0_161, %c0_162] : memref<64x256xf32, #tpu.memory_space<vmem>>, vector<64x256xf32>
    %cst_163 = arith.constant dense<0.000000e+00> : vector<2x256xf32>
    %532 = tpu.matmul %509, %531, %cst_163 {dimension_numbers = #tpu.dot_dimension_numbers<[1], [0], [0], [1], [0, 0, 1, 1], [], []>} : vector<2x64xf32>, vector<64x256xf32>, vector<2x256xf32> -> vector<2x256xf32>
    %533 = arith.addf %527, %532 : vector<2x256xf32>
    %534 = vector.extract_strided_slice %530 {offsets = [0, 0], sizes = [2, 64], strides = [1, 1]} : vector<2x256xf32> to vector<2x64xf32>
    %535 = arith.negf %534 : vector<2x64xf32>
    %536 = math.exp %535 : vector<2x64xf32>
    %cst_164 = arith.constant 1.000000e+00 : f32
    %537 = vector.broadcast %cst_164 : f32 to vector<2x64xf32>
    %538 = arith.addf %537, %536 : vector<2x64xf32>
    %539 = arith.divf %537, %538 : vector<2x64xf32>
    %540 = vector.extract_strided_slice %530 {offsets = [0, 64], sizes = [2, 64], strides = [1, 1]} : vector<2x256xf32> to vector<2x64xf32>
    %541 = arith.negf %540 : vector<2x64xf32>
    %542 = math.exp %541 : vector<2x64xf32>
    %cst_165 = arith.constant 1.000000e+00 : f32
    %543 = vector.broadcast %cst_165 : f32 to vector<2x64xf32>
    %544 = arith.addf %543, %542 : vector<2x64xf32>
    %545 = arith.divf %543, %544 : vector<2x64xf32>
    %546 = vector.extract_strided_slice %530 {offsets = [0, 128], sizes = [2, 64], strides = [1, 1]} : vector<2x256xf32> to vector<2x64xf32>
    %547 = math.tanh %546 : vector<2x64xf32>
    %548 = vector.extract_strided_slice %530 {offsets = [0, 192], sizes = [2, 64], strides = [1, 1]} : vector<2x256xf32> to vector<2x64xf32>
    %549 = arith.negf %548 : vector<2x64xf32>
    %550 = math.exp %549 : vector<2x64xf32>
    %cst_166 = arith.constant 1.000000e+00 : f32
    %551 = vector.broadcast %cst_166 : f32 to vector<2x64xf32>
    %552 = arith.addf %551, %550 : vector<2x64xf32>
    %553 = arith.divf %551, %552 : vector<2x64xf32>
    %554 = arith.mulf %545, %482 : vector<2x64xf32>
    %555 = arith.mulf %539, %547 : vector<2x64xf32>
    %556 = arith.addf %554, %555 : vector<2x64xf32>
    %557 = math.tanh %556 : vector<2x64xf32>
    %558 = arith.mulf %553, %557 : vector<2x64xf32>
    %559 = vector.extract_strided_slice %533 {offsets = [0, 0], sizes = [2, 64], strides = [1, 1]} : vector<2x256xf32> to vector<2x64xf32>
    %560 = arith.negf %559 : vector<2x64xf32>
    %561 = math.exp %560 : vector<2x64xf32>
    %cst_167 = arith.constant 1.000000e+00 : f32
    %562 = vector.broadcast %cst_167 : f32 to vector<2x64xf32>
    %563 = arith.addf %562, %561 : vector<2x64xf32>
    %564 = arith.divf %562, %563 : vector<2x64xf32>
    %565 = vector.extract_strided_slice %533 {offsets = [0, 64], sizes = [2, 64], strides = [1, 1]} : vector<2x256xf32> to vector<2x64xf32>
    %566 = arith.negf %565 : vector<2x64xf32>
    %567 = math.exp %566 : vector<2x64xf32>
    %cst_168 = arith.constant 1.000000e+00 : f32
    %568 = vector.broadcast %cst_168 : f32 to vector<2x64xf32>
    %569 = arith.addf %568, %567 : vector<2x64xf32>
    %570 = arith.divf %568, %569 : vector<2x64xf32>
    %571 = vector.extract_strided_slice %533 {offsets = [0, 128], sizes = [2, 64], strides = [1, 1]} : vector<2x256xf32> to vector<2x64xf32>
    %572 = math.tanh %571 : vector<2x64xf32>
    %573 = vector.extract_strided_slice %533 {offsets = [0, 192], sizes = [2, 64], strides = [1, 1]} : vector<2x256xf32> to vector<2x64xf32>
    %574 = arith.negf %573 : vector<2x64xf32>
    %575 = math.exp %574 : vector<2x64xf32>
    %cst_169 = arith.constant 1.000000e+00 : f32
    %576 = vector.broadcast %cst_169 : f32 to vector<2x64xf32>
    %577 = arith.addf %576, %575 : vector<2x64xf32>
    %578 = arith.divf %576, %577 : vector<2x64xf32>
    %579 = arith.mulf %570, %507 : vector<2x64xf32>
    %580 = arith.mulf %564, %572 : vector<2x64xf32>
    %581 = arith.addf %579, %580 : vector<2x64xf32>
    %582 = math.tanh %581 : vector<2x64xf32>
    %583 = arith.mulf %578, %582 : vector<2x64xf32>
    %584 = arith.index_cast %c7_i32_152 : i32 to index
    %c0_170 = arith.constant 0 : index
    %c0_171 = arith.constant 0 : index
    %585 = vector.load %arg8[%584, %c0_170, %c0_171] : memref<8x2x64xf32, #tpu.memory_space<vmem>>, vector<1x2x64xf32>
    %586 = vector.shape_cast %585 : vector<1x2x64xf32> to vector<2x64xf32>
    %587 = vector.shape_cast %558 : vector<2x64xf32> to vector<1x2x64xf32>
    tpu.vector_store %arg8[%584, %c0_170, %c0_171], %587 {strides = array<i32>} : memref<8x2x64xf32, #tpu.memory_space<vmem>>, vector<1x2x64xf32>,
    %c7_i32_172 = arith.constant 7 : i32
    %588 = arith.subi %c7_i32_172, %c7_i32_152 : i32
    %589 = arith.index_cast %588 : i32 to index
    %c0_173 = arith.constant 0 : index
    %c0_174 = arith.constant 0 : index
    %590 = vector.load %arg9[%589, %c0_173, %c0_174] : memref<8x2x64xf32, #tpu.memory_space<vmem>>, vector<1x2x64xf32>
    %591 = vector.shape_cast %590 : vector<1x2x64xf32> to vector<2x64xf32>
    %592 = vector.shape_cast %583 : vector<2x64xf32> to vector<1x2x64xf32>
    tpu.vector_store %arg9[%589, %c0_173, %c0_174], %592 {strides = array<i32>} : memref<8x2x64xf32, #tpu.memory_space<vmem>>, vector<1x2x64xf32>,
    %c8_i32 = arith.constant 8 : i32
    %c0_175 = arith.constant 0 : index
    %c0_176 = arith.constant 0 : index
    %c0_177 = arith.constant 0 : index
    %593 = vector.load %arg8[%c0_175, %c0_176, %c0_177] : memref<8x2x64xf32, #tpu.memory_space<vmem>>, vector<8x2x64xf32>
    %c0_178 = arith.constant 0 : index
    %c0_179 = arith.constant 0 : index
    %594 = vector.load %arg4[%c0_178, %c0_179] : memref<1x64xf32, #tpu.memory_space<vmem>>, vector<1x64xf32>
    %595 = vector.shape_cast %594 : vector<1x64xf32> to vector<1x1x64xf32>
    %596 = vector.broadcast %595 : vector<1x1x64xf32> to vector<8x2x64xf32>
    %597 = arith.mulf %593, %596 : vector<8x2x64xf32>
    %cst_180 = arith.constant dense<0.000000e+00> : vector<8x2xf32>
    %598 = vector.multi_reduction <add>, %597, %cst_180 [2] : vector<8x2x64xf32> to vector<8x2xf32>
    %599 = vector.shape_cast %598 : vector<8x2xf32> to vector<8x2x1xf32>
    %c0_181 = arith.constant 0 : index
    %c0_182 = arith.constant 0 : index
    %c0_183 = arith.constant 0 : index
    %600 = vector.load %arg9[%c0_181, %c0_182, %c0_183] : memref<8x2x64xf32, #tpu.memory_space<vmem>>, vector<8x2x64xf32>
    %c0_184 = arith.constant 0 : index
    %c0_185 = arith.constant 0 : index
    %601 = vector.load %arg5[%c0_184, %c0_185] : memref<1x64xf32, #tpu.memory_space<vmem>>, vector<1x64xf32>
    %602 = vector.shape_cast %601 : vector<1x64xf32> to vector<1x1x64xf32>
    %603 = vector.broadcast %602 : vector<1x1x64xf32> to vector<8x2x64xf32>
    %604 = arith.mulf %600, %603 : vector<8x2x64xf32>
    %cst_186 = arith.constant dense<0.000000e+00> : vector<8x2xf32>
    %605 = vector.multi_reduction <add>, %604, %cst_186 [2] : vector<8x2x64xf32> to vector<8x2xf32>
    %606 = vector.shape_cast %605 : vector<8x2xf32> to vector<8x2x1xf32>
    %607 = arith.addf %599, %606 : vector<8x2x1xf32>
    %c0_187 = arith.constant 0 : index
    %c0_188 = arith.constant 0 : index
    %608 = vector.load %arg6[%c0_187, %c0_188] : memref<1x1xf32, #tpu.memory_space<vmem>>, vector<1x1xf32>
    %609 = vector.shape_cast %608 : vector<1x1xf32> to vector<1x1x1xf32>
    %610 = vector.broadcast %609 : vector<1x1x1xf32> to vector<8x2x1xf32>
    %611 = arith.addf %607, %610 : vector<8x2x1xf32>
    %612 = arith.negf %611 : vector<8x2x1xf32>
    %613 = math.exp %612 : vector<8x2x1xf32>
    %cst_189 = arith.constant 1.000000e+00 : f32
    %614 = vector.broadcast %cst_189 : f32 to vector<8x2x1xf32>
    %615 = arith.addf %614, %613 : vector<8x2x1xf32>
    %616 = arith.divf %614, %615 : vector<8x2x1xf32>
    %c0_190 = arith.constant 0 : index
    %c0_191 = arith.constant 0 : index
    %c0_192 = arith.constant 0 : index
    %617 = vector.load %arg7[%c0_190, %c0_191, %c0_192] : memref<8x2x1xf32, #tpu.memory_space<vmem>>, vector<8x2x1xf32>
    tpu.vector_store %arg7[%c0_190, %c0_191, %c0_192], %616 {strides = array<i32>} : memref<8x2x1xf32, #tpu.memory_space<vmem>>, vector<8x2x1xf32>,
    return
  }
  func.func @transform_0(%arg0: i32) -> (i32, i32, i32) {
    %c0_i32 = arith.constant 0 : i32
    %c0_i32_0 = arith.constant 0 : i32
    %c0_i32_1 = arith.constant 0 : i32
    %c0_i32_2 = arith.constant 0 : i32
    return %c0_i32, %c0_i32_0, %c0_i32_1 : i32, i32, i32
  }
  func.func @transform_1(%arg0: i32) -> (i32, i32) {
    %c0_i32 = arith.constant 0 : i32
    %c0_i32_0 = arith.constant 0 : i32
    %c0_i32_1 = arith.constant 0 : i32
    return %c0_i32, %c0_i32_0 : i32, i32
  }
  func.func @transform_2(%arg0: i32) -> (i32, i32) {
    %c0_i32 = arith.constant 0 : i32
    %c0_i32_0 = arith.constant 0 : i32
    %c0_i32_1 = arith.constant 0 : i32
    return %c0_i32, %c0_i32_0 : i32, i32
  }
  func.func @transform_3(%arg0: i32) -> (i32, i32) {
    %c0_i32 = arith.constant 0 : i32
    %c0_i32_0 = arith.constant 0 : i32
    %c0_i32_1 = arith.constant 0 : i32
    return %c0_i32, %c0_i32_0 : i32, i32
  }
  func.func @transform_4(%arg0: i32) -> (i32, i32) {
    %c0_i32 = arith.constant 0 : i32
    %c0_i32_0 = arith.constant 0 : i32
    %c0_i32_1 = arith.constant 0 : i32
    return %c0_i32, %c0_i32_0 : i32, i32
  }
  func.func @transform_5(%arg0: i32) -> (i32, i32) {
    %c0_i32 = arith.constant 0 : i32
    %c0_i32_0 = arith.constant 0 : i32
    %c0_i32_1 = arith.constant 0 : i32
    return %c0_i32, %c0_i32_0 : i32, i32
  }
  func.func @transform_6(%arg0: i32) -> (i32, i32, i32) {
    %c0_i32 = arith.constant 0 : i32
    %c0_i32_0 = arith.constant 0 : i32
    %c0_i32_1 = arith.constant 0 : i32
    %c0_i32_2 = arith.constant 0 : i32
    return %c0_i32, %c0_i32_0, %c0_i32_1 : i32, i32, i32
  }
}

</mosaic_0001>

<llo_original>
// kernel: lstm_forward.2
$region0: #{lstm_forward.2}
  #allocation0 [shape = 'u32[]', space=smem, size = 0x4, offset = 0x4, fixed_abs, tag = 'smem constant byte address 0x4 - core index']
  #allocation1 [shape = 'u32[144,128]{1,0:T(1,128)}', space=vmem, size = 0x12000, scoped, tag = 'internal scratch']
  %s0 = inlined_call_operand.vmem [shape: f32[16,27], index: 0, kind: input, shape index: {}]
  %s1 = inlined_call_operand.vmem [shape: f32[27,512], index: 1, kind: input, shape index: {}]
  %s2 = inlined_call_operand.vmem [shape: f32[1,512], index: 2, kind: input, shape index: {}]
  %s3 = inlined_call_operand.vmem [shape: f32[16,512], index: 3, kind: output, shape index: {}]
  %s4 = sld [smem:[#allocation0]]
  $region22: #{lstm_forward.2} parent=0
    _
  %s6 = ssub.s32 1, %s4
  %s7 = scalar_select 0, %s6, %s4
  // Predicated region
  $region2: #{lstm_forward.2} parent=0 // pred_check
    _
  $region3: #{lstm_forward.2} parent=0 // pred_check_branch
    %9 = sbr.rel (0) target = $region5
  $region4: #{lstm_forward.2} parent=0 // pred_region
    _
  $region5: #{lstm_forward.2} parent=0 // pred_fallthru
    _
  // Predicated region
  $region6: #{lstm_forward.2} parent=0 // pred_check
    _
  $region7: #{lstm_forward.2} parent=0 // pred_check_branch
    %11 = sbr.rel (0) target = $region9
  $region8: #{lstm_forward.2} parent=0 // pred_region
    _
  $region9: #{lstm_forward.2} parent=0 // pred_fallthru
    _
  // Predicated region
  $region10: #{lstm_forward.2} parent=0 // pred_check
    _
  $region11: #{lstm_forward.2} parent=0 // pred_check_branch
    %13 = sbr.rel (0) target = $region13
  $region12: #{lstm_forward.2} parent=0 // pred_region
    _
  $region13: #{lstm_forward.2} parent=0 // pred_fallthru
    _
  %v14 = vld [vmem:[%s0] sm:$0xff]
  %v15 = vld [vmem:[%s0 + $0x8] sm:$0xff]
  %v16 = vld [vmem:[%s1] sm:$0xff]
  %v17 = vld [vmem:[%s1 + $0x8] sm:$0xff]
  %v18 = vld [vmem:[%s1 + $0x10] sm:$0xff]
  %v19 = vld [vmem:[%s1 + $0x18] sm:$0xff]
  %v20 = vld [vmem:[%s1 + $0x20] sm:$0xff]
  %v21 = vld [vmem:[%s1 + $0x28] sm:$0xff]
  %v22 = vld [vmem:[%s1 + $0x30] sm:$0xff]
  %v23 = vld [vmem:[%s1 + $0x38] sm:$0xff]
  %v24 = vld [vmem:[%s1 + $0x40] sm:$0xff]
  %v25 = vld [vmem:[%s1 + $0x48] sm:$0xff]
  %v26 = vld [vmem:[%s1 + $0x50] sm:$0xff]
  %v27 = vld [vmem:[%s1 + $0x58] sm:$0xff]
  %v28 = vld [vmem:[%s1 + $0x60] sm:$0x7]
  %v29 = vld [vmem:[%s1 + $0x68] sm:$0x7]
  %v30 = vld [vmem:[%s1 + $0x70] sm:$0x7]
  %v31 = vld [vmem:[%s1 + $0x78] sm:$0x7]
  %v32 = vld [vmem:[%s2] sm:$0xf]
  %v34 = vlaneseq
  %v35 = vshrl.u32 %v34, 7
  %v36 = vsub.s32 0, %v35
  %v37 = vrot.slane %v32, %v36
  %v38 = vlaneseq
  %v39 = vshrl.u32 %v38, 7
  %v40 = vsub.s32 1, %v39
  %v41 = vrot.slane %v32, %v40
  %v42 = vlaneseq
  %v43 = vshrl.u32 %v42, 7
  %v44 = vsub.s32 2, %v43
  %v45 = vrot.slane %v32, %v44
  %v46 = vlaneseq
  %v47 = vshrl.u32 %v46, 7
  %v48 = vsub.s32 3, %v47
  %v49 = vrot.slane %v32, %v48
  %vm54 = vcmask 220160
  %v56 = vsel %vm54, %v14, 0
  %v59 = vsel %vm54, %v15, 0
  %vm61 = vcmask 1042432
  %v63 = vsel %vm61, %v28, 0
  %v66 = vsel %vm61, %v29, 0
  %v69 = vsel %vm61, %v30, 0
  %v72 = vsel %vm61, %v31, 0
  %74 = vmatprep.subr.mxu0 0.0
  %75 = vmatpush1.msra.mxu0 0.0
  %76 = vmatprep.subr.mxu0 0.0
  %77 = vmatpush1.msra.mxu0 0.0
  %78 = vmatprep.subr.mxu0 0.0
  %79 = vmatpush1.msra.mxu0 0.0
  %80 = vmatprep.subr.mxu0 0.0
  %81 = vmatpush1.msra.mxu0 0.0
  %82 = vmatprep.subr.mxu0 0.0
  %83 = vmatpush1.msra.mxu0 0.0
  %84 = vmatprep.subr.mxu0 0.0
  %85 = vmatpush1.msra.mxu0 0.0
  %86 = vmatprep.subr.mxu0 0.0
  %87 = vmatpush1.msra.mxu0 0.0
  %88 = vmatprep.subr.mxu0 0.0
  %89 = vmatpush1.msra.mxu0 0.0
  %90 = vmatprep.subr.mxu0 0.0
  %91 = vmatpush1.msra.mxu0 0.0
  %92 = vmatprep.subr.mxu0 0.0
  %93 = vmatpush1.msra.mxu0 0.0
  %94 = vmatprep.subr.mxu0 0.0
  %95 = vmatpush1.msra.mxu0 0.0
  %96 = vmatprep.subr.mxu0 0.0
  %97 = vmatpush1.msra.mxu0 0.0
  %98 = vmatprep.subr.mxu0 %v66
  %99 = vmatpush1.msra.mxu0 %v63
  %100 = vmatprep.subr.mxu0 %v25
  %101 = vmatpush1.msra.mxu0 %v24
  %102 = vmatprep.subr.mxu0 %v21
  %103 = vmatpush1.msra.mxu0 %v20
  %104 = vmatprep.subr.mxu0 %v17
  %105 = vmatpush1.msra.mxu0 %v16
  %106 = vmatprep.subr.mxu0 0.0
  %107 = vmatpush2.msra.mxu0 0.0
  %108 = vmatprep.subr.mxu0 0.0
  %109 = vmatpush2.msra.mxu0 0.0
  %110 = vmatprep.subr.mxu0 0.0
  %111 = vmatpush2.msra.mxu0 0.0
  %112 = vmatprep.subr.mxu0 0.0
  %113 = vmatpush2.msra.mxu0 0.0
  %114 = vmatprep.subr.mxu0 0.0
  %115 = vmatpush2.msra.mxu0 0.0
  %116 = vmatprep.subr.mxu0 0.0
  %117 = vmatpush2.msra.mxu0 0.0
  %118 = vmatprep.subr.mxu0 0.0
  %119 = vmatpush2.msra.mxu0 0.0
  %120 = vmatprep.subr.mxu0 0.0
  %121 = vmatpush2.msra.mxu0 0.0
  %122 = vmatprep.subr.mxu0 0.0
  %123 = vmatpush2.msra.mxu0 0.0
  %124 = vmatprep.subr.mxu0 0.0
  %125 = vmatpush2.msra.mxu0 0.0
  %126 = vmatprep.subr.mxu0 0.0
  %127 = vmatpush2.msra.mxu0 0.0
  %128 = vmatprep.subr.mxu0 0.0
  %129 = vmatpush2.msra.mxu0 0.0
  %130 = vmatprep.subr.mxu0 0.0
  %131 = vmatpush2.msra.mxu0 0.0
  %132 = vmatprep.subr.mxu0 0.0
  %133 = vmatpush2.msra.mxu0 0.0
  %134 = vmatprep.subr.mxu0 0.0
  %135 = vmatpush2.msra.mxu0 0.0
  %136 = vmatprep.subr.mxu0 0.0
  %137 = vmatpush2.msra.mxu0 0.0
  %138 = vmatprep.mubr.f32.mxu0 0.0
  %139 = vmatmul.mubr.f32.gmra.mxu0 %v56
  %v140 = vpop.f32.mrf.mxu0
  %v141 = vadd.f32 %v37, %v140
  %v142 = vpop.f32.mrf.mxu0
  %v143 = vadd.f32 %v41, %v142
  %144 = vmatprep.mubr.f32.mxu0 0.0
  %145 = vmatmul.mubr.f32.gmra.mxu0 %v59
  %v146 = vpop.f32.mrf.mxu0
  %v147 = vadd.f32 %v37, %v146
  %v148 = vpop.f32.mrf.mxu0
  %v149 = vadd.f32 %v41, %v148
  %150 = vdwg.mxu0
  %151 = vmatprep.subr.mxu0 0.0
  %152 = vmatpush1.msra.mxu0 0.0
  %153 = vmatprep.subr.mxu0 0.0
  %154 = vmatpush1.msra.mxu0 0.0
  %155 = vmatprep.subr.mxu0 0.0
  %156 = vmatpush1.msra.mxu0 0.0
  %157 = vmatprep.subr.mxu0 0.0
  %158 = vmatpush1.msra.mxu0 0.0
  %159 = vmatprep.subr.mxu0 0.0
  %160 = vmatpush1.msra.mxu0 0.0
  %161 = vmatprep.subr.mxu0 0.0
  %162 = vmatpush1.msra.mxu0 0.0
  %163 = vmatprep.subr.mxu0 0.0
  %164 = vmatpush1.msra.mxu0 0.0
  %165 = vmatprep.subr.mxu0 0.0
  %166 = vmatpush1.msra.mxu0 0.0
  %167 = vmatprep.subr.mxu0 0.0
  %168 = vmatpush1.msra.mxu0 0.0
  %169 = vmatprep.subr.mxu0 0.0
  %170 = vmatpush1.msra.mxu0 0.0
  %171 = vmatprep.subr.mxu0 0.0
  %172 = vmatpush1.msra.mxu0 0.0
  %173 = vmatprep.subr.mxu0 0.0
  %174 = vmatpush1.msra.mxu0 0.0
  %175 = vmatprep.subr.mxu0 %v72
  %176 = vmatpush1.msra.mxu0 %v69
  %177 = vmatprep.subr.mxu0 %v27
  %178 = vmatpush1.msra.mxu0 %v26
  %179 = vmatprep.subr.mxu0 %v23
  %180 = vmatpush1.msra.mxu0 %v22
  %181 = vmatprep.subr.mxu0 %v19
  %182 = vmatpush1.msra.mxu0 %v18
  %183 = vmatprep.subr.mxu0 0.0
  %184 = vmatpush2.msra.mxu0 0.0
  %185 = vmatprep.subr.mxu0 0.0
  %186 = vmatpush2.msra.mxu0 0.0
  %187 = vmatprep.subr.mxu0 0.0
  %188 = vmatpush2.msra.mxu0 0.0
  %189 = vmatprep.subr.mxu0 0.0
  %190 = vmatpush2.msra.mxu0 0.0
  %191 = vmatprep.subr.mxu0 0.0
  %192 = vmatpush2.msra.mxu0 0.0
  %193 = vmatprep.subr.mxu0 0.0
  %194 = vmatpush2.msra.mxu0 0.0
  %195 = vmatprep.subr.mxu0 0.0
  %196 = vmatpush2.msra.mxu0 0.0
  %197 = vmatprep.subr.mxu0 0.0
  %198 = vmatpush2.msra.mxu0 0.0
  %199 = vmatprep.subr.mxu0 0.0
  %200 = vmatpush2.msra.mxu0 0.0
  %201 = vmatprep.subr.mxu0 0.0
  %202 = vmatpush2.msra.mxu0 0.0
  %203 = vmatprep.subr.mxu0 0.0
  %204 = vmatpush2.msra.mxu0 0.0
  %205 = vmatprep.subr.mxu0 0.0
  %206 = vmatpush2.msra.mxu0 0.0
  %207 = vmatprep.subr.mxu0 0.0
  %208 = vmatpush2.msra.mxu0 0.0
  %209 = vmatprep.subr.mxu0 0.0
  %210 = vmatpush2.msra.mxu0 0.0
  %211 = vmatprep.subr.mxu0 0.0
  %212 = vmatpush2.msra.mxu0 0.0
  %213 = vmatprep.subr.mxu0 0.0
  %214 = vmatpush2.msra.mxu0 0.0
  %215 = vmatprep.mubr.f32.mxu0 0.0
  %216 = vmatmul.mubr.f32.gmra.mxu0 %v56
  %v217 = vpop.f32.mrf.mxu0
  %v218 = vadd.f32 %v45, %v217
  %v219 = vpop.f32.mrf.mxu0
  %v220 = vadd.f32 %v49, %v219
  %221 = vmatprep.mubr.f32.mxu0 0.0
  %222 = vmatmul.mubr.f32.gmra.mxu0 %v59
  %v223 = vpop.f32.mrf.mxu0
  %v224 = vadd.f32 %v45, %v223
  %v225 = vpop.f32.mrf.mxu0
  %v226 = vadd.f32 %v49, %v225
  %227 = vdwg.mxu0
  %228 = vst [vmem:[%s3] sm:$0xff] %v141
  %229 = vst [vmem:[%s3 + $0x8] sm:$0xff] %v143
  %230 = vst [vmem:[%s3 + $0x10] sm:$0xff] %v218
  %231 = vst [vmem:[%s3 + $0x18] sm:$0xff] %v220
  %232 = vst [vmem:[%s3 + $0x20] sm:$0xff] %v147
  %233 = vst [vmem:[%s3 + $0x28] sm:$0xff] %v149
  %234 = vst [vmem:[%s3 + $0x30] sm:$0xff] %v224
  %235 = vst [vmem:[%s3 + $0x38] sm:$0xff] %v226
  // Predicated region
  $region14: #{lstm_forward.2} parent=0 // pred_check
    _
  $region15: #{lstm_forward.2} parent=0 // pred_check_branch
    %237 = sbr.rel (0) target = $region17
  $region16: #{lstm_forward.2} parent=0 // pred_region
    _
  $region17: #{lstm_forward.2} parent=0 // pred_fallthru
    _
  // Predicated region
  $region18: #{lstm_forward.2} parent=0 // pred_check
    _
  $region19: #{lstm_forward.2} parent=0 // pred_check_branch
    %239 = sbr.rel (0) target = $region21
  $region20: #{lstm_forward.2} parent=0 // pred_region
    _
  $region21: #{lstm_forward.2} parent=0 // pred_fallthru
    _

// kernel: lstm_forward.3
$region0: #{lstm_forward.3}
  #allocation0 [shape = 'u32[]', space=smem, size = 0x4, offset = 0x4, fixed_abs, tag = 'smem constant byte address 0x4 - core index']
  #allocation1 [shape = 'u32[144,128]{1,0:T(1,128)}', space=vmem, size = 0x12000, scoped, tag = 'internal scratch']
  #allocation2 [shape = 'f32[8,2,64]{2,1,0:T(2,128)}', space=vmem, size = 0x2000, scoped, tag = 'scratch operand']
  #allocation3 [shape = 'f32[8,2,64]{2,1,0:T(2,128)}', space=vmem, size = 0x2000, scoped, tag = 'scratch operand']
  #allocation4 [shape = 'f32[1,1]{1,0:T(1,128)S(1)}', space=vmem, size = 0x200, scoped, tag = 'scoped memory for lstm_forward.3']
  %s0 = inlined_call_operand.vmem [shape: f32[8,2,512], index: 0, kind: input, shape index: {}]
  %s1 = inlined_call_operand.vmem [shape: f32[64,256], index: 1, kind: input, shape index: {}]
  %s2 = inlined_call_operand.vmem [shape: f32[64,256], index: 2, kind: input, shape index: {}]
  %s3 = inlined_call_operand.vmem [shape: f32[1,64], index: 3, kind: input, shape index: {}]
  %s4 = inlined_call_operand.vmem [shape: f32[1,64], index: 4, kind: input, shape index: {}]
  %s5 = inlined_call_operand.<no memory space> [shape: f32[1,1], index: 5, kind: input, shape index: {}]
  %s6 = inlined_call_operand.vmem [shape: f32[8,2,1], index: 6, kind: output, shape index: {}]
  %s7 = sld [smem:[#allocation0]]
  $region34: #{lstm_forward.3} parent=0
    _
  %s9 = ssub.s32 1, %s7
  %s10 = scalar_select 0, %s9, %s7
  %v11 = vstv %s5
  %12 = vst [vmem:[#allocation4] sm:$0x1] %v11
  // Predicated region
  $region2: #{lstm_forward.3} parent=0 // pred_check
    _
  $region3: #{lstm_forward.3} parent=0 // pred_check_branch
    %14 = sbr.rel (0) target = $region5
  $region4: #{lstm_forward.3} parent=0 // pred_region
    _
  $region5: #{lstm_forward.3} parent=0 // pred_fallthru
    _
  // Predicated region
  $region6: #{lstm_forward.3} parent=0 // pred_check
    _
  $region7: #{lstm_forward.3} parent=0 // pred_check_branch
    %16 = sbr.rel (0) target = $region9
  $region8: #{lstm_forward.3} parent=0 // pred_region
    _
  $region9: #{lstm_forward.3} parent=0 // pred_fallthru
    _
  // Predicated region
  $region10: #{lstm_forward.3} parent=0 // pred_check
    _
  $region11: #{lstm_forward.3} parent=0 // pred_check_branch
    %18 = sbr.rel (0) target = $region13
  $region12: #{lstm_forward.3} parent=0 // pred_region
    _
  $region13: #{lstm_forward.3} parent=0 // pred_fallthru
    _
  // Predicated region
  $region14: #{lstm_forward.3} parent=0 // pred_check
    _
  $region15: #{lstm_forward.3} parent=0 // pred_check_branch
    %20 = sbr.rel (0) target = $region17
  $region16: #{lstm_forward.3} parent=0 // pred_region
    _
  $region17: #{lstm_forward.3} parent=0 // pred_fallthru
    _
  // Predicated region
  $region18: #{lstm_forward.3} parent=0 // pred_check
    _
  $region19: #{lstm_forward.3} parent=0 // pred_check_branch
    %22 = sbr.rel (0) target = $region21
  $region20: #{lstm_forward.3} parent=0 // pred_region
    _
  $region21: #{lstm_forward.3} parent=0 // pred_fallthru
    _
  // Predicated region
  $region22: #{lstm_forward.3} parent=0 // pred_check
    _
  $region23: #{lstm_forward.3} parent=0 // pred_check_branch
    %24 = sbr.rel (0) target = $region25
  $region24: #{lstm_forward.3} parent=0 // pred_region
    _
  $region25: #{lstm_forward.3} parent=0 // pred_fallthru
    _
  %v25 = vld [vmem:[%s0] sm:$0xff]
  %s26 = scalar_lea.vmem %s0, 56
  %v27 = vld [vmem:[%s26] sm:$0xff]
  %v28 = vld [vmem:[%s1] sm:$0xff]
  %v29 = vld [vmem:[%s1 + $0x8] sm:$0xff]
  %v30 = vld [vmem:[%s1 + $0x10] sm:$0xff]
  %v31 = vld [vmem:[%s1 + $0x18] sm:$0xff]
  %v32 = vld [vmem:[%s1 + $0x20] sm:$0xff]
  %v33 = vld [vmem:[%s1 + $0x28] sm:$0xff]
  %v34 = vld [vmem:[%s1 + $0x30] sm:$0xff]
  %v35 = vld [vmem:[%s1 + $0x38] sm:$0xff]
  %v36 = vld [vmem:[%s1 + $0x40] sm:$0xff]
  %v37 = vld [vmem:[%s1 + $0x48] sm:$0xff]
  %v38 = vld [vmem:[%s1 + $0x50] sm:$0xff]
  %v39 = vld [vmem:[%s1 + $0x58] sm:$0xff]
  %v40 = vld [vmem:[%s1 + $0x60] sm:$0xff]
  %v41 = vld [vmem:[%s1 + $0x68] sm:$0xff]
  %v42 = vld [vmem:[%s1 + $0x70] sm:$0xff]
  %v43 = vld [vmem:[%s1 + $0x78] sm:$0xff]
  %vm44 = vcmask 523264
  %v46 = vsel %vm44, 0.0, 0
  %48 = vmatprep.subr.mxu0 0.0
  %49 = vmatpush1.msra.mxu0 0.0
  %50 = vmatprep.subr.mxu0 0.0
  %51 = vmatpush1.msra.mxu0 0.0
  %52 = vmatprep.subr.mxu0 0.0
  %53 = vmatpush1.msra.mxu0 0.0
  %54 = vmatprep.subr.mxu0 0.0
  %55 = vmatpush1.msra.mxu0 0.0
  %56 = vmatprep.subr.mxu0 0.0
  %57 = vmatpush1.msra.mxu0 0.0
  %58 = vmatprep.subr.mxu0 0.0
  %59 = vmatpush1.msra.mxu0 0.0
  %60 = vmatprep.subr.mxu0 0.0
  %61 = vmatpush1.msra.mxu0 0.0
  %62 = vmatprep.subr.mxu0 0.0
  %63 = vmatpush1.msra.mxu0 0.0
  %64 = vmatprep.subr.mxu0 %v43
  %65 = vmatpush1.msra.mxu0 %v42
  %66 = vmatprep.subr.mxu0 %v41
  %67 = vmatpush1.msra.mxu0 %v40
  %68 = vmatprep.subr.mxu0 %v39
  %69 = vmatpush1.msra.mxu0 %v38
  %70 = vmatprep.subr.mxu0 %v37
  %71 = vmatpush1.msra.mxu0 %v36
  %72 = vmatprep.subr.mxu0 %v35
  %73 = vmatpush1.msra.mxu0 %v34
  %74 = vmatprep.subr.mxu0 %v33
  %75 = vmatpush1.msra.mxu0 %v32
  %76 = vmatprep.subr.mxu0 %v31
  %77 = vmatpush1.msra.mxu0 %v30
  %78 = vmatprep.subr.mxu0 %v29
  %79 = vmatpush1.msra.mxu0 %v28
  %80 = vmatprep.subr.mxu0 0.0
  %81 = vmatpush2.msra.mxu0 0.0
  %82 = vmatprep.subr.mxu0 0.0
  %83 = vmatpush2.msra.mxu0 0.0
  %84 = vmatprep.subr.mxu0 0.0
  %85 = vmatpush2.msra.mxu0 0.0
  %86 = vmatprep.subr.mxu0 0.0
  %87 = vmatpush2.msra.mxu0 0.0
  %88 = vmatprep.subr.mxu0 0.0
  %89 = vmatpush2.msra.mxu0 0.0
  %90 = vmatprep.subr.mxu0 0.0
  %91 = vmatpush2.msra.mxu0 0.0
  %92 = vmatprep.subr.mxu0 0.0
  %93 = vmatpush2.msra.mxu0 0.0
  %94 = vmatprep.subr.mxu0 0.0
  %95 = vmatpush2.msra.mxu0 0.0
  %96 = vmatprep.subr.mxu0 0.0
  %97 = vmatpush2.msra.mxu0 0.0
  %98 = vmatprep.subr.mxu0 0.0
  %99 = vmatpush2.msra.mxu0 0.0
  %100 = vmatprep.subr.mxu0 0.0
  %101 = vmatpush2.msra.mxu0 0.0
  %102 = vmatprep.subr.mxu0 0.0
  %103 = vmatpush2.msra.mxu0 0.0
  %104 = vmatprep.subr.mxu0 0.0
  %105 = vmatpush2.msra.mxu0 0.0
  %106 = vmatprep.subr.mxu0 0.0
  %107 = vmatpush2.msra.mxu0 0.0
  %108 = vmatprep.subr.mxu0 0.0
  %109 = vmatpush2.msra.mxu0 0.0
  %110 = vmatprep.subr.mxu0 0.0
  %111 = vmatpush2.msra.mxu0 0.0
  %112 = vmatprep.mubr.f32.mxu0 0.0
  %113 = vmatmul.mubr.f32.gmra.mxu0 %v46
  %v114 = vpop.f32.mrf.mxu0
  %v115 = vadd.f32 0.0, %v114
  %v116 = vpop.f32.mrf.mxu0
  %v117 = vadd.f32 0.0, %v116
  %118 = vdwg.mxu0
  %v121 = vcombine.low %v115, %v117
  %v123 = vunpack.c.l.s4 1983009808
  %v124 = vunpack.c.0.s8 %v123
  %v125 = vlaneseq
  %v126 = vshrl.u32 %v125, 7
  %v127 = vsub.s32 %v124, %v126
  %v128 = vrot.slane %v121, %v127
  %v130 = vadd.f32 %v25, %v128
  %v131 = vld [vmem:[%s2] sm:$0xff]
  %v132 = vld [vmem:[%s2 + $0x8] sm:$0xff]
  %v133 = vld [vmem:[%s2 + $0x10] sm:$0xff]
  %v134 = vld [vmem:[%s2 + $0x18] sm:$0xff]
  %v135 = vld [vmem:[%s2 + $0x20] sm:$0xff]
  %v136 = vld [vmem:[%s2 + $0x28] sm:$0xff]
  %v137 = vld [vmem:[%s2 + $0x30] sm:$0xff]
  %v138 = vld [vmem:[%s2 + $0x38] sm:$0xff]
  %v139 = vld [vmem:[%s2 + $0x40] sm:$0xff]
  %v140 = vld [vmem:[%s2 + $0x48] sm:$0xff]
  %v141 = vld [vmem:[%s2 + $0x50] sm:$0xff]
  %v142 = vld [vmem:[%s2 + $0x58] sm:$0xff]
  %v143 = vld [vmem:[%s2 + $0x60] sm:$0xff]
  %v144 = vld [vmem:[%s2 + $0x68] sm:$0xff]
  %v145 = vld [vmem:[%s2 + $0x70] sm:$0xff]
  %v146 = vld [vmem:[%s2 + $0x78] sm:$0xff]
  %147 = vmatprep.subr.mxu0 0.0
  %148 = vmatpush1.msra.mxu0 0.0
  %149 = vmatprep.subr.mxu0 0.0
  %150 = vmatpush1.msra.mxu0 0.0
  %151 = vmatprep.subr.mxu0 0.0
  %152 = vmatpush1.msra.mxu0 0.0
  %153 = vmatprep.subr.mxu0 0.0
  %154 = vmatpush1.msra.mxu0 0.0
  %155 = vmatprep.subr.mxu0 0.0
  %156 = vmatpush1.msra.mxu0 0.0
  %157 = vmatprep.subr.mxu0 0.0
  %158 = vmatpush1.msra.mxu0 0.0
  %159 = vmatprep.subr.mxu0 0.0
  %160 = vmatpush1.msra.mxu0 0.0
  %161 = vmatprep.subr.mxu0 0.0
  %162 = vmatpush1.msra.mxu0 0.0
  %163 = vmatprep.subr.mxu0 %v146
  %164 = vmatpush1.msra.mxu0 %v145
  %165 = vmatprep.subr.mxu0 %v144
  %166 = vmatpush1.msra.mxu0 %v143
  %167 = vmatprep.subr.mxu0 %v142
  %168 = vmatpush1.msra.mxu0 %v141
  %169 = vmatprep.subr.mxu0 %v140
  %170 = vmatpush1.msra.mxu0 %v139
  %171 = vmatprep.subr.mxu0 %v138
  %172 = vmatpush1.msra.mxu0 %v137
  %173 = vmatprep.subr.mxu0 %v136
  %174 = vmatpush1.msra.mxu0 %v135
  %175 = vmatprep.subr.mxu0 %v134
  %176 = vmatpush1.msra.mxu0 %v133
  %177 = vmatprep.subr.mxu0 %v132
  %178 = vmatpush1.msra.mxu0 %v131
  %179 = vmatprep.subr.mxu0 0.0
  %180 = vmatpush2.msra.mxu0 0.0
  %181 = vmatprep.subr.mxu0 0.0
  %182 = vmatpush2.msra.mxu0 0.0
  %183 = vmatprep.subr.mxu0 0.0
  %184 = vmatpush2.msra.mxu0 0.0
  %185 = vmatprep.subr.mxu0 0.0
  %186 = vmatpush2.msra.mxu0 0.0
  %187 = vmatprep.subr.mxu0 0.0
  %188 = vmatpush2.msra.mxu0 0.0
  %189 = vmatprep.subr.mxu0 0.0
  %190 = vmatpush2.msra.mxu0 0.0
  %191 = vmatprep.subr.mxu0 0.0
  %192 = vmatpush2.msra.mxu0 0.0
  %193 = vmatprep.subr.mxu0 0.0
  %194 = vmatpush2.msra.mxu0 0.0
  %195 = vmatprep.subr.mxu0 0.0
  %196 = vmatpush2.msra.mxu0 0.0
  %197 = vmatprep.subr.mxu0 0.0
  %198 = vmatpush2.msra.mxu0 0.0
  %199 = vmatprep.subr.mxu0 0.0
  %200 = vmatpush2.msra.mxu0 0.0
  %201 = vmatprep.subr.mxu0 0.0
  %202 = vmatpush2.msra.mxu0 0.0
  %203 = vmatprep.subr.mxu0 0.0
  %204 = vmatpush2.msra.mxu0 0.0
  %205 = vmatprep.subr.mxu0 0.0
  %206 = vmatpush2.msra.mxu0 0.0
  %207 = vmatprep.subr.mxu0 0.0
  %208 = vmatpush2.msra.mxu0 0.0
  %209 = vmatprep.subr.mxu0 0.0
  %210 = vmatpush2.msra.mxu0 0.0
  %211 = vmatprep.mubr.f32.mxu0 0.0
  %212 = vmatmul.mubr.f32.gmra.mxu0 %v46
  %v213 = vpop.f32.mrf.mxu0
  %v214 = vadd.f32 0.0, %v213
  %v215 = vpop.f32.mrf.mxu0
  %v216 = vadd.f32 0.0, %v215
  %217 = vdwg.mxu0
  %v219 = vrot.slane %v27, 4
  %v223 = vcombine.low %v214, %v216
  %v225 = vunpack.c.l.s4 1983009808
  %v226 = vunpack.c.0.s8 %v225
  %v227 = vlaneseq
  %v228 = vshrl.u32 %v227, 7
  %v229 = vsub.s32 %v226, %v228
  %v230 = vrot.slane %v223, %v229
  %v232 = vadd.f32 %v219, %v230
  %v233 = vxor.u32 %v130, 2147483648
  %v234 = vmul.f32 %v233, 1.442695
  %v235 = vpow.pop %v234
  %v236 = vadd.f32 %v235, 1.0
  %v237 = vrcp.pop %v236
  %v238 = vmul.f32 1.0, %v237
  %v240 = vrot.slane %v130, 2
  %v242 = vtanh.pop %v240
  %243 = vrot.lane.b32.xlu0 %v130, 64
  %v244 = vpop.permute.xlu0 %243
  %v245 = vrot.slane %v244, 2
  %v247 = vxor.u32 %v245, 2147483648
  %v248 = vmul.f32 %v247, 1.442695
  %v249 = vpow.pop %v248
  %v250 = vadd.f32 %v249, 1.0
  %v251 = vrcp.pop %v250
  %v252 = vmul.f32 1.0, %v251
  %v253 = vmul.f32 %v238, 0.0
  %v254 = vmul.f32 %v238, %v242
  %256 = vrot.lane.b32.xlu0 %v254, 64
  %v257 = vpop.permute.xlu0 %256
  %v259 = vadd.f32 %v253, %v257
  %v260 = vtanh.pop %v259
  %262 = vrot.lane.b32.xlu0 %v260, 64
  %v263 = vpop.permute.xlu0 %262
  %v265 = vmul.f32 %v252, %v263
  %v266 = vxor.u32 %v232, 2147483648
  %v267 = vmul.f32 %v266, 1.442695
  %v268 = vpow.pop %v267
  %v269 = vadd.f32 %v268, 1.0
  %v270 = vrcp.pop %v269
  %v271 = vmul.f32 1.0, %v270
  %v273 = vrot.slane %v232, 2
  %v275 = vtanh.pop %v273
  %276 = vrot.lane.b32.xlu0 %v232, 64
  %v277 = vpop.permute.xlu0 %276
  %v278 = vrot.slane %v277, 2
  %v280 = vxor.u32 %v278, 2147483648
  %v281 = vmul.f32 %v280, 1.442695
  %v282 = vpow.pop %v281
  %v283 = vadd.f32 %v282, 1.0
  %v284 = vrcp.pop %v283
  %v285 = vmul.f32 1.0, %v284
  %v286 = vmul.f32 %v271, 0.0
  %v287 = vmul.f32 %v271, %v275
  %289 = vrot.lane.b32.xlu0 %v287, 64
  %v290 = vpop.permute.xlu0 %289
  %v292 = vadd.f32 %v286, %v290
  %v293 = vtanh.pop %v292
  %295 = vrot.lane.b32.xlu0 %v293, 64
  %v296 = vpop.permute.xlu0 %295
  %v298 = vmul.f32 %v285, %v296
  %vm299 = vcmask 517120
  %300 = vst.msk [vmem:[#allocation2] sm:$0x3] %vm299, %v265
  %s301 = scalar_lea.vmem [#allocation3], 14
  %302 = vst.msk [vmem:[%s301] sm:$0x3] %vm299, %v298
  %s303 = scalar_lea.vmem %s0, 8
  %v304 = vld [vmem:[%s303] sm:$0xff]
  %s305 = scalar_lea.vmem %s0, 48
  %v306 = vld [vmem:[%s305] sm:$0xff]
  %v307 = vld [vmem:[%s1] sm:$0xff]
  %v308 = vld [vmem:[%s1 + $0x8] sm:$0xff]
  %v309 = vld [vmem:[%s1 + $0x10] sm:$0xff]
  %v310 = vld [vmem:[%s1 + $0x18] sm:$0xff]
  %v311 = vld [vmem:[%s1 + $0x20] sm:$0xff]
  %v312 = vld [vmem:[%s1 + $0x28] sm:$0xff]
  %v313 = vld [vmem:[%s1 + $0x30] sm:$0xff]
  %v314 = vld [vmem:[%s1 + $0x38] sm:$0xff]
  %v315 = vld [vmem:[%s1 + $0x40] sm:$0xff]
  %v316 = vld [vmem:[%s1 + $0x48] sm:$0xff]
  %v317 = vld [vmem:[%s1 + $0x50] sm:$0xff]
  %v318 = vld [vmem:[%s1 + $0x58] sm:$0xff]
  %v319 = vld [vmem:[%s1 + $0x60] sm:$0xff]
  %v320 = vld [vmem:[%s1 + $0x68] sm:$0xff]
  %v321 = vld [vmem:[%s1 + $0x70] sm:$0xff]
  %v322 = vld [vmem:[%s1 + $0x78] sm:$0xff]
  %v324 = vsel %vm44, %v265, 0
  %326 = vmatprep.subr.mxu0 0.0
  %327 = vmatpush1.msra.mxu0 0.0
  %328 = vmatprep.subr.mxu0 0.0
  %329 = vmatpush1.msra.mxu0 0.0
  %330 = vmatprep.subr.mxu0 0.0
  %331 = vmatpush1.msra.mxu0 0.0
  %332 = vmatprep.subr.mxu0 0.0
  %333 = vmatpush1.msra.mxu0 0.0
  %334 = vmatprep.subr.mxu0 0.0
  %335 = vmatpush1.msra.mxu0 0.0
  %336 = vmatprep.subr.mxu0 0.0
  %337 = vmatpush1.msra.mxu0 0.0
  %338 = vmatprep.subr.mxu0 0.0
  %339 = vmatpush1.msra.mxu0 0.0
  %340 = vmatprep.subr.mxu0 0.0
  %341 = vmatpush1.msra.mxu0 0.0
  %342 = vmatprep.subr.mxu0 %v322
  %343 = vmatpush1.msra.mxu0 %v321
  %344 = vmatprep.subr.mxu0 %v320
  %345 = vmatpush1.msra.mxu0 %v319
  %346 = vmatprep.subr.mxu0 %v318
  %347 = vmatpush1.msra.mxu0 %v317
  %348 = vmatprep.subr.mxu0 %v316
  %349 = vmatpush1.msra.mxu0 %v315
  %350 = vmatprep.subr.mxu0 %v314
  %351 = vmatpush1.msra.mxu0 %v313
  %352 = vmatprep.subr.mxu0 %v312
  %353 = vmatpush1.msra.mxu0 %v311
  %354 = vmatprep.subr.mxu0 %v310
  %355 = vmatpush1.msra.mxu0 %v309
  %356 = vmatprep.subr.mxu0 %v308
  %357 = vmatpush1.msra.mxu0 %v307
  %358 = vmatprep.subr.mxu0 0.0
  %359 = vmatpush2.msra.mxu0 0.0
  %360 = vmatprep.subr.mxu0 0.0
  %361 = vmatpush2.msra.mxu0 0.0
  %362 = vmatprep.subr.mxu0 0.0
  %363 = vmatpush2.msra.mxu0 0.0
  %364 = vmatprep.subr.mxu0 0.0
  %365 = vmatpush2.msra.mxu0 0.0
  %366 = vmatprep.subr.mxu0 0.0
  %367 = vmatpush2.msra.mxu0 0.0
  %368 = vmatprep.subr.mxu0 0.0
  %369 = vmatpush2.msra.mxu0 0.0
  %370 = vmatprep.subr.mxu0 0.0
  %371 = vmatpush2.msra.mxu0 0.0
  %372 = vmatprep.subr.mxu0 0.0
  %373 = vmatpush2.msra.mxu0 0.0
  %374 = vmatprep.subr.mxu0 0.0
  %375 = vmatpush2.msra.mxu0 0.0
  %376 = vmatprep.subr.mxu0 0.0
  %377 = vmatpush2.msra.mxu0 0.0
  %378 = vmatprep.subr.mxu0 0.0
  %379 = vmatpush2.msra.mxu0 0.0
  %380 = vmatprep.subr.mxu0 0.0
  %381 = vmatpush2.msra.mxu0 0.0
  %382 = vmatprep.subr.mxu0 0.0
  %383 = vmatpush2.msra.mxu0 0.0
  %384 = vmatprep.subr.mxu0 0.0
  %385 = vmatpush2.msra.mxu0 0.0
  %386 = vmatprep.subr.mxu0 0.0
  %387 = vmatpush2.msra.mxu0 0.0
  %388 = vmatprep.subr.mxu0 0.0
  %389 = vmatpush2.msra.mxu0 0.0
  %390 = vmatprep.mubr.f32.mxu0 0.0
  %391 = vmatmul.mubr.f32.gmra.mxu0 %v324
  %v392 = vpop.f32.mrf.mxu0
  %v393 = vadd.f32 0.0, %v392
  %v394 = vpop.f32.mrf.mxu0
  %v395 = vadd.f32 0.0, %v394
  %396 = vdwg.mxu0
  %v399 = vcombine.low %v393, %v395
  %v401 = vunpack.c.l.s4 1983009808
  %v402 = vunpack.c.0.s8 %v401
  %v403 = vlaneseq
  %v404 = vshrl.u32 %v403, 7
  %v405 = vsub.s32 %v402, %v404
  %v406 = vrot.slane %v399, %v405
  %v408 = vadd.f32 %v304, %v406
  %v409 = vld [vmem:[%s2] sm:$0xff]
  %v410 = vld [vmem:[%s2 + $0x8] sm:$0xff]
  %v411 = vld [vmem:[%s2 + $0x10] sm:$0xff]
  %v412 = vld [vmem:[%s2 + $0x18] sm:$0xff]
  %v413 = vld [vmem:[%s2 + $0x20] sm:$0xff]
  %v414 = vld [vmem:[%s2 + $0x28] sm:$0xff]
  %v415 = vld [vmem:[%s2 + $0x30] sm:$0xff]
  %v416 = vld [vmem:[%s2 + $0x38] sm:$0xff]
  %v417 = vld [vmem:[%s2 + $0x40] sm:$0xff]
  %v418 = vld [vmem:[%s2 + $0x48] sm:$0xff]
  %v419 = vld [vmem:[%s2 + $0x50] sm:$0xff]
  %v420 = vld [vmem:[%s2 + $0x58] sm:$0xff]
  %v421 = vld [vmem:[%s2 + $0x60] sm:$0xff]
  %v422 = vld [vmem:[%s2 + $0x68] sm:$0xff]
  %v423 = vld [vmem:[%s2 + $0x70] sm:$0xff]
  %v424 = vld [vmem:[%s2 + $0x78] sm:$0xff]
  %v426 = vsel %vm44, %v298, 0
  %428 = vmatprep.subr.mxu0 0.0
  %429 = vmatpush1.msra.mxu0 0.0
  %430 = vmatprep.subr.mxu0 0.0
  %431 = vmatpush1.msra.mxu0 0.0
  %432 = vmatprep.subr.mxu0 0.0
  %433 = vmatpush1.msra.mxu0 0.0
  %434 = vmatprep.subr.mxu0 0.0
  %435 = vmatpush1.msra.mxu0 0.0
  %436 = vmatprep.subr.mxu0 0.0
  %437 = vmatpush1.msra.mxu0 0.0
  %438 = vmatprep.subr.mxu0 0.0
  %439 = vmatpush1.msra.mxu0 0.0
  %440 = vmatprep.subr.mxu0 0.0
  %441 = vmatpush1.msra.mxu0 0.0
  %442 = vmatprep.subr.mxu0 0.0
  %443 = vmatpush1.msra.mxu0 0.0
  %444 = vmatprep.subr.mxu0 %v424
  %445 = vmatpush1.msra.mxu0 %v423
  %446 = vmatprep.subr.mxu0 %v422
  %447 = vmatpush1.msra.mxu0 %v421
  %448 = vmatprep.subr.mxu0 %v420
  %449 = vmatpush1.msra.mxu0 %v419
  %450 = vmatprep.subr.mxu0 %v418
  %451 = vmatpush1.msra.mxu0 %v417
  %452 = vmatprep.subr.mxu0 %v416
  %453 = vmatpush1.msra.mxu0 %v415
  %454 = vmatprep.subr.mxu0 %v414
  %455 = vmatpush1.msra.mxu0 %v413
  %456 = vmatprep.subr.mxu0 %v412
  %457 = vmatpush1.msra.mxu0 %v411
  %458 = vmatprep.subr.mxu0 %v410
  %459 = vmatpush1.msra.mxu0 %v409
  %460 = vmatprep.subr.mxu0 0.0
  %461 = vmatpush2.msra.mxu0 0.0
  %462 = vmatprep.subr.mxu0 0.0
  %463 = vmatpush2.msra.mxu0 0.0
  %464 = vmatprep.subr.mxu0 0.0
  %465 = vmatpush2.msra.mxu0 0.0
  %466 = vmatprep.subr.mxu0 0.0
  %467 = vmatpush2.msra.mxu0 0.0
  %468 = vmatprep.subr.mxu0 0.0
  %469 = vmatpush2.msra.mxu0 0.0
  %470 = vmatprep.subr.mxu0 0.0
  %471 = vmatpush2.msra.mxu0 0.0
  %472 = vmatprep.subr.mxu0 0.0
  %473 = vmatpush2.msra.mxu0 0.0
  %474 = vmatprep.subr.mxu0 0.0
  %475 = vmatpush2.msra.mxu0 0.0
  %476 = vmatprep.subr.mxu0 0.0
  %477 = vmatpush2.msra.mxu0 0.0
  %478 = vmatprep.subr.mxu0 0.0
  %479 = vmatpush2.msra.mxu0 0.0
  %480 = vmatprep.subr.mxu0 0.0
  %481 = vmatpush2.msra.mxu0 0.0
  %482 = vmatprep.subr.mxu0 0.0
  %483 = vmatpush2.msra.mxu0 0.0
  %484 = vmatprep.subr.mxu0 0.0
  %485 = vmatpush2.msra.mxu0 0.0
  %486 = vmatprep.subr.mxu0 0.0
  %487 = vmatpush2.msra.mxu0 0.0
  %488 = vmatprep.subr.mxu0 0.0
  %489 = vmatpush2.msra.mxu0 0.0
  %490 = vmatprep.subr.mxu0 0.0
  %491 = vmatpush2.msra.mxu0 0.0
  %492 = vmatprep.mubr.f32.mxu0 0.0
  %493 = vmatmul.mubr.f32.gmra.mxu0 %v426
  %v494 = vpop.f32.mrf.mxu0
  %v495 = vadd.f32 0.0, %v494
  %v496 = vpop.f32.mrf.mxu0
  %v497 = vadd.f32 0.0, %v496
  %498 = vdwg.mxu0
  %v500 = vrot.slane %v306, 4
  %v504 = vcombine.low %v495, %v497
  %v506 = vunpack.c.l.s4 1983009808
  %v507 = vunpack.c.0.s8 %v506
  %v508 = vlaneseq
  %v509 = vshrl.u32 %v508, 7
  %v510 = vsub.s32 %v507, %v509
  %v511 = vrot.slane %v504, %v510
  %v513 = vadd.f32 %v500, %v511
  %v514 = vxor.u32 %v408, 2147483648
  %v515 = vmul.f32 %v514, 1.442695
  %v516 = vpow.pop %v515
  %v517 = vadd.f32 %v516, 1.0
  %v518 = vrcp.pop %v517
  %v519 = vmul.f32 1.0, %v518
  %v521 = vrot.slane %v408, 2
  %v523 = vtanh.pop %v521
  %524 = vrot.lane.b32.xlu0 %v408, 64
  %v525 = vpop.permute.xlu0 %524
  %v526 = vrot.slane %v525, 2
  %v528 = vxor.u32 %v526, 2147483648
  %v529 = vmul.f32 %v528, 1.442695
  %v530 = vpow.pop %v529
  %v531 = vadd.f32 %v530, 1.0
  %v532 = vrcp.pop %v531
  %v533 = vmul.f32 1.0, %v532
  %v534 = vmul.f32 %v519, %v259
  %v535 = vmul.f32 %v519, %v523
  %537 = vrot.lane.b32.xlu0 %v535, 64
  %v538 = vpop.permute.xlu0 %537
  %v540 = vadd.f32 %v534, %v538
  %v541 = vtanh.pop %v540
  %543 = vrot.lane.b32.xlu0 %v541, 64
  %v544 = vpop.permute.xlu0 %543
  %v546 = vmul.f32 %v533, %v544
  %v547 = vxor.u32 %v513, 2147483648
  %v548 = vmul.f32 %v547, 1.442695
  %v549 = vpow.pop %v548
  %v550 = vadd.f32 %v549, 1.0
  %v551 = vrcp.pop %v550
  %v552 = vmul.f32 1.0, %v551
  %v554 = vrot.slane %v513, 2
  %v556 = vtanh.pop %v554
  %557 = vrot.lane.b32.xlu0 %v513, 64
  %v558 = vpop.permute.xlu0 %557
  %v559 = vrot.slane %v558, 2
  %v561 = vxor.u32 %v559, 2147483648
  %v562 = vmul.f32 %v561, 1.442695
  %v563 = vpow.pop %v562
  %v564 = vadd.f32 %v563, 1.0
  %v565 = vrcp.pop %v564
  %v566 = vmul.f32 1.0, %v565
  %v567 = vmul.f32 %v552, %v292
  %v568 = vmul.f32 %v552, %v556
  %570 = vrot.lane.b32.xlu0 %v568, 64
  %v571 = vpop.permute.xlu0 %570
  %v573 = vadd.f32 %v567, %v571
  %v574 = vtanh.pop %v573
  %576 = vrot.lane.b32.xlu0 %v574, 64
  %v577 = vpop.permute.xlu0 %576
  %v579 = vmul.f32 %v566, %v577
  %s580 = scalar_lea.vmem [#allocation2], 2
  %581 = vst.msk [vmem:[%s580] sm:$0x3] %vm299, %v546
  %s582 = scalar_lea.vmem [#allocation3], 12
  %583 = vst.msk [vmem:[%s582] sm:$0x3] %vm299, %v579
  %s584 = scalar_lea.vmem %s0, 16
  %v585 = vld [vmem:[%s584] sm:$0xff]
  %s586 = scalar_lea.vmem %s0, 40
  %v587 = vld [vmem:[%s586] sm:$0xff]
  %v588 = vld [vmem:[%s1] sm:$0xff]
  %v589 = vld [vmem:[%s1 + $0x8] sm:$0xff]
  %v590 = vld [vmem:[%s1 + $0x10] sm:$0xff]
  %v591 = vld [vmem:[%s1 + $0x18] sm:$0xff]
  %v592 = vld [vmem:[%s1 + $0x20] sm:$0xff]
  %v593 = vld [vmem:[%s1 + $0x28] sm:$0xff]
  %v594 = vld [vmem:[%s1 + $0x30] sm:$0xff]
  %v595 = vld [vmem:[%s1 + $0x38] sm:$0xff]
  %v596 = vld [vmem:[%s1 + $0x40] sm:$0xff]
  %v597 = vld [vmem:[%s1 + $0x48] sm:$0xff]
  %v598 = vld [vmem:[%s1 + $0x50] sm:$0xff]
  %v599 = vld [vmem:[%s1 + $0x58] sm:$0xff]
  %v600 = vld [vmem:[%s1 + $0x60] sm:$0xff]
  %v601 = vld [vmem:[%s1 + $0x68] sm:$0xff]
  %v602 = vld [vmem:[%s1 + $0x70] sm:$0xff]
  %v603 = vld [vmem:[%s1 + $0x78] sm:$0xff]
  %v605 = vsel %vm44, %v546, 0
  %607 = vmatprep.subr.mxu0 0.0
  %608 = vmatpush1.msra.mxu0 0.0
  %609 = vmatprep.subr.mxu0 0.0
  %610 = vmatpush1.msra.mxu0 0.0
  %611 = vmatprep.subr.mxu0 0.0
  %612 = vmatpush1.msra.mxu0 0.0
  %613 = vmatprep.subr.mxu0 0.0
  %614 = vmatpush1.msra.mxu0 0.0
  %615 = vmatprep.subr.mxu0 0.0
  %616 = vmatpush1.msra.mxu0 0.0
  %617 = vmatprep.subr.mxu0 0.0
  %618 = vmatpush1.msra.mxu0 0.0
  %619 = vmatprep.subr.mxu0 0.0
  %620 = vmatpush1.msra.mxu0 0.0
  %621 = vmatprep.subr.mxu0 0.0
  %622 = vmatpush1.msra.mxu0 0.0
  %623 = vmatprep.subr.mxu0 %v603
  %624 = vmatpush1.msra.mxu0 %v602
  %625 = vmatprep.subr.mxu0 %v601
  %626 = vmatpush1.msra.mxu0 %v600
  %627 = vmatprep.subr.mxu0 %v599
  %628 = vmatpush1.msra.mxu0 %v598
  %629 = vmatprep.subr.mxu0 %v597
  %630 = vmatpush1.msra.mxu0 %v596
  %631 = vmatprep.subr.mxu0 %v595
  %632 = vmatpush1.msra.mxu0 %v594
  %633 = vmatprep.subr.mxu0 %v593
  %634 = vmatpush1.msra.mxu0 %v592
  %635 = vmatprep.subr.mxu0 %v591
  %636 = vmatpush1.msra.mxu0 %v590
  %637 = vmatprep.subr.mxu0 %v589
  %638 = vmatpush1.msra.mxu0 %v588
  %639 = vmatprep.subr.mxu0 0.0
  %640 = vmatpush2.msra.mxu0 0.0
  %641 = vmatprep.subr.mxu0 0.0
  %642 = vmatpush2.msra.mxu0 0.0
  %643 = vmatprep.subr.mxu0 0.0
  %644 = vmatpush2.msra.mxu0 0.0
  %645 = vmatprep.subr.mxu0 0.0
  %646 = vmatpush2.msra.mxu0 0.0
  %647 = vmatprep.subr.mxu0 0.0
  %648 = vmatpush2.msra.mxu0 0.0
  %649 = vmatprep.subr.mxu0 0.0
  %650 = vmatpush2.msra.mxu0 0.0
  %651 = vmatprep.subr.mxu0 0.0
  %652 = vmatpush2.msra.mxu0 0.0
  %653 = vmatprep.subr.mxu0 0.0
  %654 = vmatpush2.msra.mxu0 0.0
  %655 = vmatprep.subr.mxu0 0.0
  %656 = vmatpush2.msra.mxu0 0.0
  %657 = vmatprep.subr.mxu0 0.0
  %658 = vmatpush2.msra.mxu0 0.0
  %659 = vmatprep.subr.mxu0 0.0
  %660 = vmatpush2.msra.mxu0 0.0
  %661 = vmatprep.subr.mxu0 0.0
  %662 = vmatpush2.msra.mxu0 0.0
  %663 = vmatprep.subr.mxu0 0.0
  %664 = vmatpush2.msra.mxu0 0.0
  %665 = vmatprep.subr.mxu0 0.0
  %666 = vmatpush2.msra.mxu0 0.0
  %667 = vmatprep.subr.mxu0 0.0
  %668 = vmatpush2.msra.mxu0 0.0
  %669 = vmatprep.subr.mxu0 0.0
  %670 = vmatpush2.msra.mxu0 0.0
  %671 = vmatprep.mubr.f32.mxu0 0.0
  %672 = vmatmul.mubr.f32.gmra.mxu0 %v605
  %v673 = vpop.f32.mrf.mxu0
  %v674 = vadd.f32 0.0, %v673
  %v675 = vpop.f32.mrf.mxu0
  %v676 = vadd.f32 0.0, %v675
  %677 = vdwg.mxu0
  %v680 = vcombine.low %v674, %v676
  %v682 = vunpack.c.l.s4 1983009808
  %v683 = vunpack.c.0.s8 %v682
  %v684 = vlaneseq
  %v685 = vshrl.u32 %v684, 7
  %v686 = vsub.s32 %v683, %v685
  %v687 = vrot.slane %v680, %v686
  %v689 = vadd.f32 %v585, %v687
  %v690 = vld [vmem:[%s2] sm:$0xff]
  %v691 = vld [vmem:[%s2 + $0x8] sm:$0xff]
  %v692 = vld [vmem:[%s2 + $0x10] sm:$0xff]
  %v693 = vld [vmem:[%s2 + $0x18] sm:$0xff]
  %v694 = vld [vmem:[%s2 + $0x20] sm:$0xff]
  %v695 = vld [vmem:[%s2 + $0x28] sm:$0xff]
  %v696 = vld [vmem:[%s2 + $0x30] sm:$0xff]
  %v697 = vld [vmem:[%s2 + $0x38] sm:$0xff]
  %v698 = vld [vmem:[%s2 + $0x40] sm:$0xff]
  %v699 = vld [vmem:[%s2 + $0x48] sm:$0xff]
  %v700 = vld [vmem:[%s2 + $0x50] sm:$0xff]
  %v701 = vld [vmem:[%s2 + $0x58] sm:$0xff]
  %v702 = vld [vmem:[%s2 + $0x60] sm:$0xff]
  %v703 = vld [vmem:[%s2 + $0x68] sm:$0xff]
  %v704 = vld [vmem:[%s2 + $0x70] sm:$0xff]
  %v705 = vld [vmem:[%s2 + $0x78] sm:$0xff]
  %v707 = vsel %vm44, %v579, 0
  %709 = vmatprep.subr.mxu0 0.0
  %710 = vmatpush1.msra.mxu0 0.0
  %711 = vmatprep.subr.mxu0 0.0
  %712 = vmatpush1.msra.mxu0 0.0
  %713 = vmatprep.subr.mxu0 0.0
  %714 = vmatpush1.msra.mxu0 0.0
  %715 = vmatprep.subr.mxu0 0.0
  %716 = vmatpush1.msra.mxu0 0.0
  %717 = vmatprep.subr.mxu0 0.0
  %718 = vmatpush1.msra.mxu0 0.0
  %719 = vmatprep.subr.mxu0 0.0
  %720 = vmatpush1.msra.mxu0 0.0
  %721 = vmatprep.subr.mxu0 0.0
  %722 = vmatpush1.msra.mxu0 0.0
  %723 = vmatprep.subr.mxu0 0.0
  %724 = vmatpush1.msra.mxu0 0.0
  %725 = vmatprep.subr.mxu0 %v705
  %726 = vmatpush1.msra.mxu0 %v704
  %727 = vmatprep.subr.mxu0 %v703
  %728 = vmatpush1.msra.mxu0 %v702
  %729 = vmatprep.subr.mxu0 %v701
  %730 = vmatpush1.msra.mxu0 %v700
  %731 = vmatprep.subr.mxu0 %v699
  %732 = vmatpush1.msra.mxu0 %v698
  %733 = vmatprep.subr.mxu0 %v697
  %734 = vmatpush1.msra.mxu0 %v696
  %735 = vmatprep.subr.mxu0 %v695
  %736 = vmatpush1.msra.mxu0 %v694
  %737 = vmatprep.subr.mxu0 %v693
  %738 = vmatpush1.msra.mxu0 %v692
  %739 = vmatprep.subr.mxu0 %v691
  %740 = vmatpush1.msra.mxu0 %v690
  %741 = vmatprep.subr.mxu0 0.0
  %742 = vmatpush2.msra.mxu0 0.0
  %743 = vmatprep.subr.mxu0 0.0
  %744 = vmatpush2.msra.mxu0 0.0
  %745 = vmatprep.subr.mxu0 0.0
  %746 = vmatpush2.msra.mxu0 0.0
  %747 = vmatprep.subr.mxu0 0.0
  %748 = vmatpush2.msra.mxu0 0.0
  %749 = vmatprep.subr.mxu0 0.0
  %750 = vmatpush2.msra.mxu0 0.0
  %751 = vmatprep.subr.mxu0 0.0
  %752 = vmatpush2.msra.mxu0 0.0
  %753 = vmatprep.subr.mxu0 0.0
  %754 = vmatpush2.msra.mxu0 0.0
  %755 = vmatprep.subr.mxu0 0.0
  %756 = vmatpush2.msra.mxu0 0.0
  %757 = vmatprep.subr.mxu0 0.0
  %758 = vmatpush2.msra.mxu0 0.0
  %759 = vmatprep.subr.mxu0 0.0
  %760 = vmatpush2.msra.mxu0 0.0
  %761 = vmatprep.subr.mxu0 0.0
  %762 = vmatpush2.msra.mxu0 0.0
  %763 = vmatprep.subr.mxu0 0.0
  %764 = vmatpush2.msra.mxu0 0.0
  %765 = vmatprep.subr.mxu0 0.0
  %766 = vmatpush2.msra.mxu0 0.0
  %767 = vmatprep.subr.mxu0 0.0
  %768 = vmatpush2.msra.mxu0 0.0
  %769 = vmatprep.subr.mxu0 0.0
  %770 = vmatpush2.msra.mxu0 0.0
  %771 = vmatprep.subr.mxu0 0.0
  %772 = vmatpush2.msra.mxu0 0.0
  %773 = vmatprep.mubr.f32.mxu0 0.0
  %774 = vmatmul.mubr.f32.gmra.mxu0 %v707
  %v775 = vpop.f32.mrf.mxu0
  %v776 = vadd.f32 0.0, %v775
  %v777 = vpop.f32.mrf.mxu0
  %v778 = vadd.f32 0.0, %v777
  %779 = vdwg.mxu0
  %v781 = vrot.slane %v587, 4
  %v785 = vcombine.low %v776, %v778
  %v787 = vunpack.c.l.s4 1983009808
  %v788 = vunpack.c.0.s8 %v787
  %v789 = vlaneseq
  %v790 = vshrl.u32 %v789, 7
  %v791 = vsub.s32 %v788, %v790
  %v792 = vrot.slane %v785, %v791
  %v794 = vadd.f32 %v781, %v792
  %v795 = vxor.u32 %v689, 2147483648
  %v796 = vmul.f32 %v795, 1.442695
  %v797 = vpow.pop %v796
  %v798 = vadd.f32 %v797, 1.0
  %v799 = vrcp.pop %v798
  %v800 = vmul.f32 1.0, %v799
  %v802 = vrot.slane %v689, 2
  %v804 = vtanh.pop %v802
  %805 = vrot.lane.b32.xlu0 %v689, 64
  %v806 = vpop.permute.xlu0 %805
  %v807 = vrot.slane %v806, 2
  %v809 = vxor.u32 %v807, 2147483648
  %v810 = vmul.f32 %v809, 1.442695
  %v811 = vpow.pop %v810
  %v812 = vadd.f32 %v811, 1.0
  %v813 = vrcp.pop %v812
  %v814 = vmul.f32 1.0, %v813
  %v815 = vmul.f32 %v800, %v540
  %v816 = vmul.f32 %v800, %v804
  %818 = vrot.lane.b32.xlu0 %v816, 64
  %v819 = vpop.permute.xlu0 %818
  %v821 = vadd.f32 %v815, %v819
  %v822 = vtanh.pop %v821
  %824 = vrot.lane.b32.xlu0 %v822, 64
  %v825 = vpop.permute.xlu0 %824
  %v827 = vmul.f32 %v814, %v825
  %v828 = vxor.u32 %v794, 2147483648
  %v829 = vmul.f32 %v828, 1.442695
  %v830 = vpow.pop %v829
  %v831 = vadd.f32 %v830, 1.0
  %v832 = vrcp.pop %v831
  %v833 = vmul.f32 1.0, %v832
  %v835 = vrot.slane %v794, 2
  %v837 = vtanh.pop %v835
  %838 = vrot.lane.b32.xlu0 %v794, 64
  %v839 = vpop.permute.xlu0 %838
  %v840 = vrot.slane %v839, 2
  %v842 = vxor.u32 %v840, 2147483648
  %v843 = vmul.f32 %v842, 1.442695
  %v844 = vpow.pop %v843
  %v845 = vadd.f32 %v844, 1.0
  %v846 = vrcp.pop %v845
  %v847 = vmul.f32 1.0, %v846
  %v848 = vmul.f32 %v833, %v573
  %v849 = vmul.f32 %v833, %v837
  %851 = vrot.lane.b32.xlu0 %v849, 64
  %v852 = vpop.permute.xlu0 %851
  %v854 = vadd.f32 %v848, %v852
  %v855 = vtanh.pop %v854
  %857 = vrot.lane.b32.xlu0 %v855, 64
  %v858 = vpop.permute.xlu0 %857
  %v860 = vmul.f32 %v847, %v858
  %s861 = scalar_lea.vmem [#allocation2], 4
  %862 = vst.msk [vmem:[%s861] sm:$0x3] %vm299, %v827
  %s863 = scalar_lea.vmem [#allocation3], 10
  %864 = vst.msk [vmem:[%s863] sm:$0x3] %vm299, %v860
  %s865 = scalar_lea.vmem %s0, 24
  %v866 = vld [vmem:[%s865] sm:$0xff]
  %s867 = scalar_lea.vmem %s0, 32
  %v868 = vld [vmem:[%s867] sm:$0xff]
  %v869 = vld [vmem:[%s1] sm:$0xff]
  %v870 = vld [vmem:[%s1 + $0x8] sm:$0xff]
  %v871 = vld [vmem:[%s1 + $0x10] sm:$0xff]
  %v872 = vld [vmem:[%s1 + $0x18] sm:$0xff]
  %v873 = vld [vmem:[%s1 + $0x20] sm:$0xff]
  %v874 = vld [vmem:[%s1 + $0x28] sm:$0xff]
  %v875 = vld [vmem:[%s1 + $0x30] sm:$0xff]
  %v876 = vld [vmem:[%s1 + $0x38] sm:$0xff]
  %v877 = vld [vmem:[%s1 + $0x40] sm:$0xff]
  %v878 = vld [vmem:[%s1 + $0x48] sm:$0xff]
  %v879 = vld [vmem:[%s1 + $0x50] sm:$0xff]
  %v880 = vld [vmem:[%s1 + $0x58] sm:$0xff]
  %v881 = vld [vmem:[%s1 + $0x60] sm:$0xff]
  %v882 = vld [vmem:[%s1 + $0x68] sm:$0xff]
  %v883 = vld [vmem:[%s1 + $0x70] sm:$0xff]
  %v884 = vld [vmem:[%s1 + $0x78] sm:$0xff]
  %v886 = vsel %vm44, %v827, 0
  %888 = vmatprep.subr.mxu0 0.0
  %889 = vmatpush1.msra.mxu0 0.0
  %890 = vmatprep.subr.mxu0 0.0
  %891 = vmatpush1.msra.mxu0 0.0
  %892 = vmatprep.subr.mxu0 0.0
  %893 = vmatpush1.msra.mxu0 0.0
  %894 = vmatprep.subr.mxu0 0.0
  %895 = vmatpush1.msra.mxu0 0.0
  %896 = vmatprep.subr.mxu0 0.0
  %897 = vmatpush1.msra.mxu0 0.0
  %898 = vmatprep.subr.mxu0 0.0
  %899 = vmatpush1.msra.mxu0 0.0
  %900 = vmatprep.subr.mxu0 0.0
  %901 = vmatpush1.msra.mxu0 0.0
  %902 = vmatprep.subr.mxu0 0.0
  %903 = vmatpush1.msra.mxu0 0.0
  %904 = vmatprep.subr.mxu0 %v884
  %905 = vmatpush1.msra.mxu0 %v883
  %906 = vmatprep.subr.mxu0 %v882
  %907 = vmatpush1.msra.mxu0 %v881
  %908 = vmatprep.subr.mxu0 %v880
  %909 = vmatpush1.msra.mxu0 %v879
  %910 = vmatprep.subr.mxu0 %v878
  %911 = vmatpush1.msra.mxu0 %v877
  %912 = vmatprep.subr.mxu0 %v876
  %913 = vmatpush1.msra.mxu0 %v875
  %914 = vmatprep.subr.mxu0 %v874
  %915 = vmatpush1.msra.mxu0 %v873
  %916 = vmatprep.subr.mxu0 %v872
  %917 = vmatpush1.msra.mxu0 %v871
  %918 = vmatprep.subr.mxu0 %v870
  %919 = vmatpush1.msra.mxu0 %v869
  %920 = vmatprep.subr.mxu0 0.0
  %921 = vmatpush2.msra.mxu0 0.0
  %922 = vmatprep.subr.mxu0 0.0
  %923 = vmatpush2.msra.mxu0 0.0
  %924 = vmatprep.subr.mxu0 0.0
  %925 = vmatpush2.msra.mxu0 0.0
  %926 = vmatprep.subr.mxu0 0.0
  %927 = vmatpush2.msra.mxu0 0.0
  %928 = vmatprep.subr.mxu0 0.0
  %929 = vmatpush2.msra.mxu0 0.0
  %930 = vmatprep.subr.mxu0 0.0
  %931 = vmatpush2.msra.mxu0 0.0
  %932 = vmatprep.subr.mxu0 0.0
  %933 = vmatpush2.msra.mxu0 0.0
  %934 = vmatprep.subr.mxu0 0.0
  %935 = vmatpush2.msra.mxu0 0.0
  %936 = vmatprep.subr.mxu0 0.0
  %937 = vmatpush2.msra.mxu0 0.0
  %938 = vmatprep.subr.mxu0 0.0
  %939 = vmatpush2.msra.mxu0 0.0
  %940 = vmatprep.subr.mxu0 0.0
  %941 = vmatpush2.msra.mxu0 0.0
  %942 = vmatprep.subr.mxu0 0.0
  %943 = vmatpush2.msra.mxu0 0.0
  %944 = vmatprep.subr.mxu0 0.0
  %945 = vmatpush2.msra.mxu0 0.0
  %946 = vmatprep.subr.mxu0 0.0
  %947 = vmatpush2.msra.mxu0 0.0
  %948 = vmatprep.subr.mxu0 0.0
  %949 = vmatpush2.msra.mxu0 0.0
  %950 = vmatprep.subr.mxu0 0.0
  %951 = vmatpush2.msra.mxu0 0.0
  %952 = vmatprep.mubr.f32.mxu0 0.0
  %953 = vmatmul.mubr.f32.gmra.mxu0 %v886
  %v954 = vpop.f32.mrf.mxu0
  %v955 = vadd.f32 0.0, %v954
  %v956 = vpop.f32.mrf.mxu0
  %v957 = vadd.f32 0.0, %v956
  %958 = vdwg.mxu0
  %v961 = vcombine.low %v955, %v957
  %v963 = vunpack.c.l.s4 1983009808
  %v964 = vunpack.c.0.s8 %v963
  %v965 = vlaneseq
  %v966 = vshrl.u32 %v965, 7
  %v967 = vsub.s32 %v964, %v966
  %v968 = vrot.slane %v961, %v967
  %v970 = vadd.f32 %v866, %v968
  %v971 = vld [vmem:[%s2] sm:$0xff]
  %v972 = vld [vmem:[%s2 + $0x8] sm:$0xff]
  %v973 = vld [vmem:[%s2 + $0x10] sm:$0xff]
  %v974 = vld [vmem:[%s2 + $0x18] sm:$0xff]
  %v975 = vld [vmem:[%s2 + $0x20] sm:$0xff]
  %v976 = vld [vmem:[%s2 + $0x28] sm:$0xff]
  %v977 = vld [vmem:[%s2 + $0x30] sm:$0xff]
  %v978 = vld [vmem:[%s2 + $0x38] sm:$0xff]
  %v979 = vld [vmem:[%s2 + $0x40] sm:$0xff]
  %v980 = vld [vmem:[%s2 + $0x48] sm:$0xff]
  %v981 = vld [vmem:[%s2 + $0x50] sm:$0xff]
  %v982 = vld [vmem:[%s2 + $0x58] sm:$0xff]
  %v983 = vld [vmem:[%s2 + $0x60] sm:$0xff]
  %v984 = vld [vmem:[%s2 + $0x68] sm:$0xff]
  %v985 = vld [vmem:[%s2 + $0x70] sm:$0xff]
  %v986 = vld [vmem:[%s2 + $0x78] sm:$0xff]
  %v988 = vsel %vm44, %v860, 0
  %990 = vmatprep.subr.mxu0 0.0
  %991 = vmatpush1.msra.mxu0 0.0
  %992 = vmatprep.subr.mxu0 0.0
  %993 = vmatpush1.msra.mxu0 0.0
  %994 = vmatprep.subr.mxu0 0.0
  %995 = vmatpush1.msra.mxu0 0.0
  %996 = vmatprep.subr.mxu0 0.0
  %997 = vmatpush1.msra.mxu0 0.0
  %998 = vmatprep.subr.mxu0 0.0
  %999 = vmatpush1.msra.mxu0 0.0
  %1000 = vmatprep.subr.mxu0 0.0
  %1001 = vmatpush1.msra.mxu0 0.0
  %1002 = vmatprep.subr.mxu0 0.0
  %1003 = vmatpush1.msra.mxu0 0.0
  %1004 = vmatprep.subr.mxu0 0.0
  %1005 = vmatpush1.msra.mxu0 0.0
  %1006 = vmatprep.subr.mxu0 %v986
  %1007 = vmatpush1.msra.mxu0 %v985
  %1008 = vmatprep.subr.mxu0 %v984
  %1009 = vmatpush1.msra.mxu0 %v983
  %1010 = vmatprep.subr.mxu0 %v982
  %1011 = vmatpush1.msra.mxu0 %v981
  %1012 = vmatprep.subr.mxu0 %v980
  %1013 = vmatpush1.msra.mxu0 %v979
  %1014 = vmatprep.subr.mxu0 %v978
  %1015 = vmatpush1.msra.mxu0 %v977
  %1016 = vmatprep.subr.mxu0 %v976
  %1017 = vmatpush1.msra.mxu0 %v975
  %1018 = vmatprep.subr.mxu0 %v974
  %1019 = vmatpush1.msra.mxu0 %v973
  %1020 = vmatprep.subr.mxu0 %v972
  %1021 = vmatpush1.msra.mxu0 %v971
  %1022 = vmatprep.subr.mxu0 0.0
  %1023 = vmatpush2.msra.mxu0 0.0
  %1024 = vmatprep.subr.mxu0 0.0
  %1025 = vmatpush2.msra.mxu0 0.0
  %1026 = vmatprep.subr.mxu0 0.0
  %1027 = vmatpush2.msra.mxu0 0.0
  %1028 = vmatprep.subr.mxu0 0.0
  %1029 = vmatpush2.msra.mxu0 0.0
  %1030 = vmatprep.subr.mxu0 0.0
  %1031 = vmatpush2.msra.mxu0 0.0
  %1032 = vmatprep.subr.mxu0 0.0
  %1033 = vmatpush2.msra.mxu0 0.0
  %1034 = vmatprep.subr.mxu0 0.0
  %1035 = vmatpush2.msra.mxu0 0.0
  %1036 = vmatprep.subr.mxu0 0.0
  %1037 = vmatpush2.msra.mxu0 0.0
  %1038 = vmatprep.subr.mxu0 0.0
  %1039 = vmatpush2.msra.mxu0 0.0
  %1040 = vmatprep.subr.mxu0 0.0
  %1041 = vmatpush2.msra.mxu0 0.0
  %1042 = vmatprep.subr.mxu0 0.0
  %1043 = vmatpush2.msra.mxu0 0.0
  %1044 = vmatprep.subr.mxu0 0.0
  %1045 = vmatpush2.msra.mxu0 0.0
  %1046 = vmatprep.subr.mxu0 0.0
  %1047 = vmatpush2.msra.mxu0 0.0
  %1048 = vmatprep.subr.mxu0 0.0
  %1049 = vmatpush2.msra.mxu0 0.0
  %1050 = vmatprep.subr.mxu0 0.0
  %1051 = vmatpush2.msra.mxu0 0.0
  %1052 = vmatprep.subr.mxu0 0.0
  %1053 = vmatpush2.msra.mxu0 0.0
  %1054 = vmatprep.mubr.f32.mxu0 0.0
  %1055 = vmatmul.mubr.f32.gmra.mxu0 %v988
  %v1056 = vpop.f32.mrf.mxu0
  %v1057 = vadd.f32 0.0, %v1056
  %v1058 = vpop.f32.mrf.mxu0
  %v1059 = vadd.f32 0.0, %v1058
  %1060 = vdwg.mxu0
  %v1062 = vrot.slane %v868, 4
  %v1066 = vcombine.low %v1057, %v1059
  %v1068 = vunpack.c.l.s4 1983009808
  %v1069 = vunpack.c.0.s8 %v1068
  %v1070 = vlaneseq
  %v1071 = vshrl.u32 %v1070, 7
  %v1072 = vsub.s32 %v1069, %v1071
  %v1073 = vrot.slane %v1066, %v1072
  %v1075 = vadd.f32 %v1062, %v1073
  %v1076 = vxor.u32 %v970, 2147483648
  %v1077 = vmul.f32 %v1076, 1.442695
  %v1078 = vpow.pop %v1077
  %v1079 = vadd.f32 %v1078, 1.0
  %v1080 = vrcp.pop %v1079
  %v1081 = vmul.f32 1.0, %v1080
  %v1083 = vrot.slane %v970, 2
  %v1085 = vtanh.pop %v1083
  %1086 = vrot.lane.b32.xlu0 %v970, 64
  %v1087 = vpop.permute.xlu0 %1086
  %v1088 = vrot.slane %v1087, 2
  %v1090 = vxor.u32 %v1088, 2147483648
  %v1091 = vmul.f32 %v1090, 1.442695
  %v1092 = vpow.pop %v1091
  %v1093 = vadd.f32 %v1092, 1.0
  %v1094 = vrcp.pop %v1093
  %v1095 = vmul.f32 1.0, %v1094
  %v1096 = vmul.f32 %v1081, %v821
  %v1097 = vmul.f32 %v1081, %v1085
  %1099 = vrot.lane.b32.xlu0 %v1097, 64
  %v1100 = vpop.permute.xlu0 %1099
  %v1102 = vadd.f32 %v1096, %v1100
  %v1103 = vtanh.pop %v1102
  %1105 = vrot.lane.b32.xlu0 %v1103, 64
  %v1106 = vpop.permute.xlu0 %1105
  %v1108 = vmul.f32 %v1095, %v1106
  %v1109 = vxor.u32 %v1075, 2147483648
  %v1110 = vmul.f32 %v1109, 1.442695
  %v1111 = vpow.pop %v1110
  %v1112 = vadd.f32 %v1111, 1.0
  %v1113 = vrcp.pop %v1112
  %v1114 = vmul.f32 1.0, %v1113
  %v1116 = vrot.slane %v1075, 2
  %v1118 = vtanh.pop %v1116
  %1119 = vrot.lane.b32.xlu0 %v1075, 64
  %v1120 = vpop.permute.xlu0 %1119
  %v1121 = vrot.slane %v1120, 2
  %v1123 = vxor.u32 %v1121, 2147483648
  %v1124 = vmul.f32 %v1123, 1.442695
  %v1125 = vpow.pop %v1124
  %v1126 = vadd.f32 %v1125, 1.0
  %v1127 = vrcp.pop %v1126
  %v1128 = vmul.f32 1.0, %v1127
  %v1129 = vmul.f32 %v1114, %v854
  %v1130 = vmul.f32 %v1114, %v1118
  %1132 = vrot.lane.b32.xlu0 %v1130, 64
  %v1133 = vpop.permute.xlu0 %1132
  %v1135 = vadd.f32 %v1129, %v1133
  %v1136 = vtanh.pop %v1135
  %1138 = vrot.lane.b32.xlu0 %v1136, 64
  %v1139 = vpop.permute.xlu0 %1138
  %v1141 = vmul.f32 %v1128, %v1139
  %s1142 = scalar_lea.vmem [#allocation2], 6
  %1143 = vst.msk [vmem:[%s1142] sm:$0x3] %vm299, %v1108
  %s1144 = scalar_lea.vmem [#allocation3], 8
  %1145 = vst.msk [vmem:[%s1144] sm:$0x3] %vm299, %v1141
  %v1146 = vld [vmem:[%s867] sm:$0xff]
  %v1147 = vld [vmem:[%s865] sm:$0xff]
  %v1148 = vld [vmem:[%s1] sm:$0xff]
  %v1149 = vld [vmem:[%s1 + $0x8] sm:$0xff]
  %v1150 = vld [vmem:[%s1 + $0x10] sm:$0xff]
  %v1151 = vld [vmem:[%s1 + $0x18] sm:$0xff]
  %v1152 = vld [vmem:[%s1 + $0x20] sm:$0xff]
  %v1153 = vld [vmem:[%s1 + $0x28] sm:$0xff]
  %v1154 = vld [vmem:[%s1 + $0x30] sm:$0xff]
  %v1155 = vld [vmem:[%s1 + $0x38] sm:$0xff]
  %v1156 = vld [vmem:[%s1 + $0x40] sm:$0xff]
  %v1157 = vld [vmem:[%s1 + $0x48] sm:$0xff]
  %v1158 = vld [vmem:[%s1 + $0x50] sm:$0xff]
  %v1159 = vld [vmem:[%s1 + $0x58] sm:$0xff]
  %v1160 = vld [vmem:[%s1 + $0x60] sm:$0xff]
  %v1161 = vld [vmem:[%s1 + $0x68] sm:$0xff]
  %v1162 = vld [vmem:[%s1 + $0x70] sm:$0xff]
  %v1163 = vld [vmem:[%s1 + $0x78] sm:$0xff]
  %v1165 = vsel %vm44, %v1108, 0
  %1167 = vmatprep.subr.mxu0 0.0
  %1168 = vmatpush1.msra.mxu0 0.0
  %1169 = vmatprep.subr.mxu0 0.0
  %1170 = vmatpush1.msra.mxu0 0.0
  %1171 = vmatprep.subr.mxu0 0.0
  %1172 = vmatpush1.msra.mxu0 0.0
  %1173 = vmatprep.subr.mxu0 0.0
  %1174 = vmatpush1.msra.mxu0 0.0
  %1175 = vmatprep.subr.mxu0 0.0
  %1176 = vmatpush1.msra.mxu0 0.0
  %1177 = vmatprep.subr.mxu0 0.0
  %1178 = vmatpush1.msra.mxu0 0.0
  %1179 = vmatprep.subr.mxu0 0.0
  %1180 = vmatpush1.msra.mxu0 0.0
  %1181 = vmatprep.subr.mxu0 0.0
  %1182 = vmatpush1.msra.mxu0 0.0
  %1183 = vmatprep.subr.mxu0 %v1163
  %1184 = vmatpush1.msra.mxu0 %v1162
  %1185 = vmatprep.subr.mxu0 %v1161
  %1186 = vmatpush1.msra.mxu0 %v1160
  %1187 = vmatprep.subr.mxu0 %v1159
  %1188 = vmatpush1.msra.mxu0 %v1158
  %1189 = vmatprep.subr.mxu0 %v1157
  %1190 = vmatpush1.msra.mxu0 %v1156
  %1191 = vmatprep.subr.mxu0 %v1155
  %1192 = vmatpush1.msra.mxu0 %v1154
  %1193 = vmatprep.subr.mxu0 %v1153
  %1194 = vmatpush1.msra.mxu0 %v1152
  %1195 = vmatprep.subr.mxu0 %v1151
  %1196 = vmatpush1.msra.mxu0 %v1150
  %1197 = vmatprep.subr.mxu0 %v1149
  %1198 = vmatpush1.msra.mxu0 %v1148
  %1199 = vmatprep.subr.mxu0 0.0
  %1200 = vmatpush2.msra.mxu0 0.0
  %1201 = vmatprep.subr.mxu0 0.0
  %1202 = vmatpush2.msra.mxu0 0.0
  %1203 = vmatprep.subr.mxu0 0.0
  %1204 = vmatpush2.msra.mxu0 0.0
  %1205 = vmatprep.subr.mxu0 0.0
  %1206 = vmatpush2.msra.mxu0 0.0
  %1207 = vmatprep.subr.mxu0 0.0
  %1208 = vmatpush2.msra.mxu0 0.0
  %1209 = vmatprep.subr.mxu0 0.0
  %1210 = vmatpush2.msra.mxu0 0.0
  %1211 = vmatprep.subr.mxu0 0.0
  %1212 = vmatpush2.msra.mxu0 0.0
  %1213 = vmatprep.subr.mxu0 0.0
  %1214 = vmatpush2.msra.mxu0 0.0
  %1215 = vmatprep.subr.mxu0 0.0
  %1216 = vmatpush2.msra.mxu0 0.0
  %1217 = vmatprep.subr.mxu0 0.0
  %1218 = vmatpush2.msra.mxu0 0.0
  %1219 = vmatprep.subr.mxu0 0.0
  %1220 = vmatpush2.msra.mxu0 0.0
  %1221 = vmatprep.subr.mxu0 0.0
  %1222 = vmatpush2.msra.mxu0 0.0
  %1223 = vmatprep.subr.mxu0 0.0
  %1224 = vmatpush2.msra.mxu0 0.0
  %1225 = vmatprep.subr.mxu0 0.0
  %1226 = vmatpush2.msra.mxu0 0.0
  %1227 = vmatprep.subr.mxu0 0.0
  %1228 = vmatpush2.msra.mxu0 0.0
  %1229 = vmatprep.subr.mxu0 0.0
  %1230 = vmatpush2.msra.mxu0 0.0
  %1231 = vmatprep.mubr.f32.mxu0 0.0
  %1232 = vmatmul.mubr.f32.gmra.mxu0 %v1165
  %v1233 = vpop.f32.mrf.mxu0
  %v1234 = vadd.f32 0.0, %v1233
  %v1235 = vpop.f32.mrf.mxu0
  %v1236 = vadd.f32 0.0, %v1235
  %1237 = vdwg.mxu0
  %v1240 = vcombine.low %v1234, %v1236
  %v1242 = vunpack.c.l.s4 1983009808
  %v1243 = vunpack.c.0.s8 %v1242
  %v1244 = vlaneseq
  %v1245 = vshrl.u32 %v1244, 7
  %v1246 = vsub.s32 %v1243, %v1245
  %v1247 = vrot.slane %v1240, %v1246
  %v1249 = vadd.f32 %v1146, %v1247
  %v1250 = vld [vmem:[%s2] sm:$0xff]
  %v1251 = vld [vmem:[%s2 + $0x8] sm:$0xff]
  %v1252 = vld [vmem:[%s2 + $0x10] sm:$0xff]
  %v1253 = vld [vmem:[%s2 + $0x18] sm:$0xff]
  %v1254 = vld [vmem:[%s2 + $0x20] sm:$0xff]
  %v1255 = vld [vmem:[%s2 + $0x28] sm:$0xff]
  %v1256 = vld [vmem:[%s2 + $0x30] sm:$0xff]
  %v1257 = vld [vmem:[%s2 + $0x38] sm:$0xff]
  %v1258 = vld [vmem:[%s2 + $0x40] sm:$0xff]
  %v1259 = vld [vmem:[%s2 + $0x48] sm:$0xff]
  %v1260 = vld [vmem:[%s2 + $0x50] sm:$0xff]
  %v1261 = vld [vmem:[%s2 + $0x58] sm:$0xff]
  %v1262 = vld [vmem:[%s2 + $0x60] sm:$0xff]
  %v1263 = vld [vmem:[%s2 + $0x68] sm:$0xff]
  %v1264 = vld [vmem:[%s2 + $0x70] sm:$0xff]
  %v1265 = vld [vmem:[%s2 + $0x78] sm:$0xff]
  %v1267 = vsel %vm44, %v1141, 0
  %1269 = vmatprep.subr.mxu0 0.0
  %1270 = vmatpush1.msra.mxu0 0.0
  %1271 = vmatprep.subr.mxu0 0.0
  %1272 = vmatpush1.msra.mxu0 0.0
  %1273 = vmatprep.subr.mxu0 0.0
  %1274 = vmatpush1.msra.mxu0 0.0
  %1275 = vmatprep.subr.mxu0 0.0
  %1276 = vmatpush1.msra.mxu0 0.0
  %1277 = vmatprep.subr.mxu0 0.0
  %1278 = vmatpush1.msra.mxu0 0.0
  %1279 = vmatprep.subr.mxu0 0.0
  %1280 = vmatpush1.msra.mxu0 0.0
  %1281 = vmatprep.subr.mxu0 0.0
  %1282 = vmatpush1.msra.mxu0 0.0
  %1283 = vmatprep.subr.mxu0 0.0
  %1284 = vmatpush1.msra.mxu0 0.0
  %1285 = vmatprep.subr.mxu0 %v1265
  %1286 = vmatpush1.msra.mxu0 %v1264
  %1287 = vmatprep.subr.mxu0 %v1263
  %1288 = vmatpush1.msra.mxu0 %v1262
  %1289 = vmatprep.subr.mxu0 %v1261
  %1290 = vmatpush1.msra.mxu0 %v1260
  %1291 = vmatprep.subr.mxu0 %v1259
  %1292 = vmatpush1.msra.mxu0 %v1258
  %1293 = vmatprep.subr.mxu0 %v1257
  %1294 = vmatpush1.msra.mxu0 %v1256
  %1295 = vmatprep.subr.mxu0 %v1255
  %1296 = vmatpush1.msra.mxu0 %v1254
  %1297 = vmatprep.subr.mxu0 %v1253
  %1298 = vmatpush1.msra.mxu0 %v1252
  %1299 = vmatprep.subr.mxu0 %v1251
  %1300 = vmatpush1.msra.mxu0 %v1250
  %1301 = vmatprep.subr.mxu0 0.0
  %1302 = vmatpush2.msra.mxu0 0.0
  %1303 = vmatprep.subr.mxu0 0.0
  %1304 = vmatpush2.msra.mxu0 0.0
  %1305 = vmatprep.subr.mxu0 0.0
  %1306 = vmatpush2.msra.mxu0 0.0
  %1307 = vmatprep.subr.mxu0 0.0
  %1308 = vmatpush2.msra.mxu0 0.0
  %1309 = vmatprep.subr.mxu0 0.0
  %1310 = vmatpush2.msra.mxu0 0.0
  %1311 = vmatprep.subr.mxu0 0.0
  %1312 = vmatpush2.msra.mxu0 0.0
  %1313 = vmatprep.subr.mxu0 0.0
  %1314 = vmatpush2.msra.mxu0 0.0
  %1315 = vmatprep.subr.mxu0 0.0
  %1316 = vmatpush2.msra.mxu0 0.0
  %1317 = vmatprep.subr.mxu0 0.0
  %1318 = vmatpush2.msra.mxu0 0.0
  %1319 = vmatprep.subr.mxu0 0.0
  %1320 = vmatpush2.msra.mxu0 0.0
  %1321 = vmatprep.subr.mxu0 0.0
  %1322 = vmatpush2.msra.mxu0 0.0
  %1323 = vmatprep.subr.mxu0 0.0
  %1324 = vmatpush2.msra.mxu0 0.0
  %1325 = vmatprep.subr.mxu0 0.0
  %1326 = vmatpush2.msra.mxu0 0.0
  %1327 = vmatprep.subr.mxu0 0.0
  %1328 = vmatpush2.msra.mxu0 0.0
  %1329 = vmatprep.subr.mxu0 0.0
  %1330 = vmatpush2.msra.mxu0 0.0
  %1331 = vmatprep.subr.mxu0 0.0
  %1332 = vmatpush2.msra.mxu0 0.0
  %1333 = vmatprep.mubr.f32.mxu0 0.0
  %1334 = vmatmul.mubr.f32.gmra.mxu0 %v1267
  %v1335 = vpop.f32.mrf.mxu0
  %v1336 = vadd.f32 0.0, %v1335
  %v1337 = vpop.f32.mrf.mxu0
  %v1338 = vadd.f32 0.0, %v1337
  %1339 = vdwg.mxu0
  %v1341 = vrot.slane %v1147, 4
  %v1345 = vcombine.low %v1336, %v1338
  %v1347 = vunpack.c.l.s4 1983009808
  %v1348 = vunpack.c.0.s8 %v1347
  %v1349 = vlaneseq
  %v1350 = vshrl.u32 %v1349, 7
  %v1351 = vsub.s32 %v1348, %v1350
  %v1352 = vrot.slane %v1345, %v1351
  %v1354 = vadd.f32 %v1341, %v1352
  %v1355 = vxor.u32 %v1249, 2147483648
  %v1356 = vmul.f32 %v1355, 1.442695
  %v1357 = vpow.pop %v1356
  %v1358 = vadd.f32 %v1357, 1.0
  %v1359 = vrcp.pop %v1358
  %v1360 = vmul.f32 1.0, %v1359
  %v1362 = vrot.slane %v1249, 2
  %v1364 = vtanh.pop %v1362
  %1365 = vrot.lane.b32.xlu0 %v1249, 64
  %v1366 = vpop.permute.xlu0 %1365
  %v1367 = vrot.slane %v1366, 2
  %v1369 = vxor.u32 %v1367, 2147483648
  %v1370 = vmul.f32 %v1369, 1.442695
  %v1371 = vpow.pop %v1370
  %v1372 = vadd.f32 %v1371, 1.0
  %v1373 = vrcp.pop %v1372
  %v1374 = vmul.f32 1.0, %v1373
  %v1375 = vmul.f32 %v1360, %v1102
  %v1376 = vmul.f32 %v1360, %v1364
  %1378 = vrot.lane.b32.xlu0 %v1376, 64
  %v1379 = vpop.permute.xlu0 %1378
  %v1381 = vadd.f32 %v1375, %v1379
  %v1382 = vtanh.pop %v1381
  %1384 = vrot.lane.b32.xlu0 %v1382, 64
  %v1385 = vpop.permute.xlu0 %1384
  %v1387 = vmul.f32 %v1374, %v1385
  %v1388 = vxor.u32 %v1354, 2147483648
  %v1389 = vmul.f32 %v1388, 1.442695
  %v1390 = vpow.pop %v1389
  %v1391 = vadd.f32 %v1390, 1.0
  %v1392 = vrcp.pop %v1391
  %v1393 = vmul.f32 1.0, %v1392
  %v1395 = vrot.slane %v1354, 2
  %v1397 = vtanh.pop %v1395
  %1398 = vrot.lane.b32.xlu0 %v1354, 64
  %v1399 = vpop.permute.xlu0 %1398
  %v1400 = vrot.slane %v1399, 2
  %v1402 = vxor.u32 %v1400, 2147483648
  %v1403 = vmul.f32 %v1402, 1.442695
  %v1404 = vpow.pop %v1403
  %v1405 = vadd.f32 %v1404, 1.0
  %v1406 = vrcp.pop %v1405
  %v1407 = vmul.f32 1.0, %v1406
  %v1408 = vmul.f32 %v1393, %v1135
  %v1409 = vmul.f32 %v1393, %v1397
  %1411 = vrot.lane.b32.xlu0 %v1409, 64
  %v1412 = vpop.permute.xlu0 %1411
  %v1414 = vadd.f32 %v1408, %v1412
  %v1415 = vtanh.pop %v1414
  %1417 = vrot.lane.b32.xlu0 %v1415, 64
  %v1418 = vpop.permute.xlu0 %1417
  %v1420 = vmul.f32 %v1407, %v1418
  %s1421 = scalar_lea.vmem [#allocation2], 8
  %1422 = vst.msk [vmem:[%s1421] sm:$0x3] %vm299, %v1387
  %s1423 = scalar_lea.vmem [#allocation3], 6
  %1424 = vst.msk [vmem:[%s1423] sm:$0x3] %vm299, %v1420
  %v1425 = vld [vmem:[%s586] sm:$0xff]
  %v1426 = vld [vmem:[%s584] sm:$0xff]
  %v1427 = vld [vmem:[%s1] sm:$0xff]
  %v1428 = vld [vmem:[%s1 + $0x8] sm:$0xff]
  %v1429 = vld [vmem:[%s1 + $0x10] sm:$0xff]
  %v1430 = vld [vmem:[%s1 + $0x18] sm:$0xff]
  %v1431 = vld [vmem:[%s1 + $0x20] sm:$0xff]
  %v1432 = vld [vmem:[%s1 + $0x28] sm:$0xff]
  %v1433 = vld [vmem:[%s1 + $0x30] sm:$0xff]
  %v1434 = vld [vmem:[%s1 + $0x38] sm:$0xff]
  %v1435 = vld [vmem:[%s1 + $0x40] sm:$0xff]
  %v1436 = vld [vmem:[%s1 + $0x48] sm:$0xff]
  %v1437 = vld [vmem:[%s1 + $0x50] sm:$0xff]
  %v1438 = vld [vmem:[%s1 + $0x58] sm:$0xff]
  %v1439 = vld [vmem:[%s1 + $0x60] sm:$0xff]
  %v1440 = vld [vmem:[%s1 + $0x68] sm:$0xff]
  %v1441 = vld [vmem:[%s1 + $0x70] sm:$0xff]
  %v1442 = vld [vmem:[%s1 + $0x78] sm:$0xff]
  %v1444 = vsel %vm44, %v1387, 0
  %1446 = vmatprep.subr.mxu0 0.0
  %1447 = vmatpush1.msra.mxu0 0.0
  %1448 = vmatprep.subr.mxu0 0.0
  %1449 = vmatpush1.msra.mxu0 0.0
  %1450 = vmatprep.subr.mxu0 0.0
  %1451 = vmatpush1.msra.mxu0 0.0
  %1452 = vmatprep.subr.mxu0 0.0
  %1453 = vmatpush1.msra.mxu0 0.0
  %1454 = vmatprep.subr.mxu0 0.0
  %1455 = vmatpush1.msra.mxu0 0.0
  %1456 = vmatprep.subr.mxu0 0.0
  %1457 = vmatpush1.msra.mxu0 0.0
  %1458 = vmatprep.subr.mxu0 0.0
  %1459 = vmatpush1.msra.mxu0 0.0
  %1460 = vmatprep.subr.mxu0 0.0
  %1461 = vmatpush1.msra.mxu0 0.0
  %1462 = vmatprep.subr.mxu0 %v1442
  %1463 = vmatpush1.msra.mxu0 %v1441
  %1464 = vmatprep.subr.mxu0 %v1440
  %1465 = vmatpush1.msra.mxu0 %v1439
  %1466 = vmatprep.subr.mxu0 %v1438
  %1467 = vmatpush1.msra.mxu0 %v1437
  %1468 = vmatprep.subr.mxu0 %v1436
  %1469 = vmatpush1.msra.mxu0 %v1435
  %1470 = vmatprep.subr.mxu0 %v1434
  %1471 = vmatpush1.msra.mxu0 %v1433
  %1472 = vmatprep.subr.mxu0 %v1432
  %1473 = vmatpush1.msra.mxu0 %v1431
  %1474 = vmatprep.subr.mxu0 %v1430
  %1475 = vmatpush1.msra.mxu0 %v1429
  %1476 = vmatprep.subr.mxu0 %v1428
  %1477 = vmatpush1.msra.mxu0 %v1427
  %1478 = vmatprep.subr.mxu0 0.0
  %1479 = vmatpush2.msra.mxu0 0.0
  %1480 = vmatprep.subr.mxu0 0.0
  %1481 = vmatpush2.msra.mxu0 0.0
  %1482 = vmatprep.subr.mxu0 0.0
  %1483 = vmatpush2.msra.mxu0 0.0
  %1484 = vmatprep.subr.mxu0 0.0
  %1485 = vmatpush2.msra.mxu0 0.0
  %1486 = vmatprep.subr.mxu0 0.0
  %1487 = vmatpush2.msra.mxu0 0.0
  %1488 = vmatprep.subr.mxu0 0.0
  %1489 = vmatpush2.msra.mxu0 0.0
  %1490 = vmatprep.subr.mxu0 0.0
  %1491 = vmatpush2.msra.mxu0 0.0
  %1492 = vmatprep.subr.mxu0 0.0
  %1493 = vmatpush2.msra.mxu0 0.0
  %1494 = vmatprep.subr.mxu0 0.0
  %1495 = vmatpush2.msra.mxu0 0.0
  %1496 = vmatprep.subr.mxu0 0.0
  %1497 = vmatpush2.msra.mxu0 0.0
  %1498 = vmatprep.subr.mxu0 0.0
  %1499 = vmatpush2.msra.mxu0 0.0
  %1500 = vmatprep.subr.mxu0 0.0
  %1501 = vmatpush2.msra.mxu0 0.0
  %1502 = vmatprep.subr.mxu0 0.0
  %1503 = vmatpush2.msra.mxu0 0.0
  %1504 = vmatprep.subr.mxu0 0.0
  %1505 = vmatpush2.msra.mxu0 0.0
  %1506 = vmatprep.subr.mxu0 0.0
  %1507 = vmatpush2.msra.mxu0 0.0
  %1508 = vmatprep.subr.mxu0 0.0
  %1509 = vmatpush2.msra.mxu0 0.0
  %1510 = vmatprep.mubr.f32.mxu0 0.0
  %1511 = vmatmul.mubr.f32.gmra.mxu0 %v1444
  %v1512 = vpop.f32.mrf.mxu0
  %v1513 = vadd.f32 0.0, %v1512
  %v1514 = vpop.f32.mrf.mxu0
  %v1515 = vadd.f32 0.0, %v1514
  %1516 = vdwg.mxu0
  %v1519 = vcombine.low %v1513, %v1515
  %v1521 = vunpack.c.l.s4 1983009808
  %v1522 = vunpack.c.0.s8 %v1521
  %v1523 = vlaneseq
  %v1524 = vshrl.u32 %v1523, 7
  %v1525 = vsub.s32 %v1522, %v1524
  %v1526 = vrot.slane %v1519, %v1525
  %v1528 = vadd.f32 %v1425, %v1526
  %v1529 = vld [vmem:[%s2] sm:$0xff]
  %v1530 = vld [vmem:[%s2 + $0x8] sm:$0xff]
  %v1531 = vld [vmem:[%s2 + $0x10] sm:$0xff]
  %v1532 = vld [vmem:[%s2 + $0x18] sm:$0xff]
  %v1533 = vld [vmem:[%s2 + $0x20] sm:$0xff]
  %v1534 = vld [vmem:[%s2 + $0x28] sm:$0xff]
  %v1535 = vld [vmem:[%s2 + $0x30] sm:$0xff]
  %v1536 = vld [vmem:[%s2 + $0x38] sm:$0xff]
  %v1537 = vld [vmem:[%s2 + $0x40] sm:$0xff]
  %v1538 = vld [vmem:[%s2 + $0x48] sm:$0xff]
  %v1539 = vld [vmem:[%s2 + $0x50] sm:$0xff]
  %v1540 = vld [vmem:[%s2 + $0x58] sm:$0xff]
  %v1541 = vld [vmem:[%s2 + $0x60] sm:$0xff]
  %v1542 = vld [vmem:[%s2 + $0x68] sm:$0xff]
  %v1543 = vld [vmem:[%s2 + $0x70] sm:$0xff]
  %v1544 = vld [vmem:[%s2 + $0x78] sm:$0xff]
  %v1546 = vsel %vm44, %v1420, 0
  %1548 = vmatprep.subr.mxu0 0.0
  %1549 = vmatpush1.msra.mxu0 0.0
  %1550 = vmatprep.subr.mxu0 0.0
  %1551 = vmatpush1.msra.mxu0 0.0
  %1552 = vmatprep.subr.mxu0 0.0
  %1553 = vmatpush1.msra.mxu0 0.0
  %1554 = vmatprep.subr.mxu0 0.0
  %1555 = vmatpush1.msra.mxu0 0.0
  %1556 = vmatprep.subr.mxu0 0.0
  %1557 = vmatpush1.msra.mxu0 0.0
  %1558 = vmatprep.subr.mxu0 0.0
  %1559 = vmatpush1.msra.mxu0 0.0
  %1560 = vmatprep.subr.mxu0 0.0
  %1561 = vmatpush1.msra.mxu0 0.0
  %1562 = vmatprep.subr.mxu0 0.0
  %1563 = vmatpush1.msra.mxu0 0.0
  %1564 = vmatprep.subr.mxu0 %v1544
  %1565 = vmatpush1.msra.mxu0 %v1543
  %1566 = vmatprep.subr.mxu0 %v1542
  %1567 = vmatpush1.msra.mxu0 %v1541
  %1568 = vmatprep.subr.mxu0 %v1540
  %1569 = vmatpush1.msra.mxu0 %v1539
  %1570 = vmatprep.subr.mxu0 %v1538
  %1571 = vmatpush1.msra.mxu0 %v1537
  %1572 = vmatprep.subr.mxu0 %v1536
  %1573 = vmatpush1.msra.mxu0 %v1535
  %1574 = vmatprep.subr.mxu0 %v1534
  %1575 = vmatpush1.msra.mxu0 %v1533
  %1576 = vmatprep.subr.mxu0 %v1532
  %1577 = vmatpush1.msra.mxu0 %v1531
  %1578 = vmatprep.subr.mxu0 %v1530
  %1579 = vmatpush1.msra.mxu0 %v1529
  %1580 = vmatprep.subr.mxu0 0.0
  %1581 = vmatpush2.msra.mxu0 0.0
  %1582 = vmatprep.subr.mxu0 0.0
  %1583 = vmatpush2.msra.mxu0 0.0
  %1584 = vmatprep.subr.mxu0 0.0
  %1585 = vmatpush2.msra.mxu0 0.0
  %1586 = vmatprep.subr.mxu0 0.0
  %1587 = vmatpush2.msra.mxu0 0.0
  %1588 = vmatprep.subr.mxu0 0.0
  %1589 = vmatpush2.msra.mxu0 0.0
  %1590 = vmatprep.subr.mxu0 0.0
  %1591 = vmatpush2.msra.mxu0 0.0
  %1592 = vmatprep.subr.mxu0 0.0
  %1593 = vmatpush2.msra.mxu0 0.0
  %1594 = vmatprep.subr.mxu0 0.0
  %1595 = vmatpush2.msra.mxu0 0.0
  %1596 = vmatprep.subr.mxu0 0.0
  %1597 = vmatpush2.msra.mxu0 0.0
  %1598 = vmatprep.subr.mxu0 0.0
  %1599 = vmatpush2.msra.mxu0 0.0
  %1600 = vmatprep.subr.mxu0 0.0
  %1601 = vmatpush2.msra.mxu0 0.0
  %1602 = vmatprep.subr.mxu0 0.0
  %1603 = vmatpush2.msra.mxu0 0.0
  %1604 = vmatprep.subr.mxu0 0.0
  %1605 = vmatpush2.msra.mxu0 0.0
  %1606 = vmatprep.subr.mxu0 0.0
  %1607 = vmatpush2.msra.mxu0 0.0
  %1608 = vmatprep.subr.mxu0 0.0
  %1609 = vmatpush2.msra.mxu0 0.0
  %1610 = vmatprep.subr.mxu0 0.0
  %1611 = vmatpush2.msra.mxu0 0.0
  %1612 = vmatprep.mubr.f32.mxu0 0.0
  %1613 = vmatmul.mubr.f32.gmra.mxu0 %v1546
  %v1614 = vpop.f32.mrf.mxu0
  %v1615 = vadd.f32 0.0, %v1614
  %v1616 = vpop.f32.mrf.mxu0
  %v1617 = vadd.f32 0.0, %v1616
  %1618 = vdwg.mxu0
  %v1620 = vrot.slane %v1426, 4
  %v1624 = vcombine.low %v1615, %v1617
  %v1626 = vunpack.c.l.s4 1983009808
  %v1627 = vunpack.c.0.s8 %v1626
  %v1628 = vlaneseq
  %v1629 = vshrl.u32 %v1628, 7
  %v1630 = vsub.s32 %v1627, %v1629
  %v1631 = vrot.slane %v1624, %v1630
  %v1633 = vadd.f32 %v1620, %v1631
  %v1634 = vxor.u32 %v1528, 2147483648
  %v1635 = vmul.f32 %v1634, 1.442695
  %v1636 = vpow.pop %v1635
  %v1637 = vadd.f32 %v1636, 1.0
  %v1638 = vrcp.pop %v1637
  %v1639 = vmul.f32 1.0, %v1638
  %v1641 = vrot.slane %v1528, 2
  %v1643 = vtanh.pop %v1641
  %1644 = vrot.lane.b32.xlu0 %v1528, 64
  %v1645 = vpop.permute.xlu0 %1644
  %v1646 = vrot.slane %v1645, 2
  %v1648 = vxor.u32 %v1646, 2147483648
  %v1649 = vmul.f32 %v1648, 1.442695
  %v1650 = vpow.pop %v1649
  %v1651 = vadd.f32 %v1650, 1.0
  %v1652 = vrcp.pop %v1651
  %v1653 = vmul.f32 1.0, %v1652
  %v1654 = vmul.f32 %v1639, %v1381
  %v1655 = vmul.f32 %v1639, %v1643
  %1657 = vrot.lane.b32.xlu0 %v1655, 64
  %v1658 = vpop.permute.xlu0 %1657
  %v1660 = vadd.f32 %v1654, %v1658
  %v1661 = vtanh.pop %v1660
  %1663 = vrot.lane.b32.xlu0 %v1661, 64
  %v1664 = vpop.permute.xlu0 %1663
  %v1666 = vmul.f32 %v1653, %v1664
  %v1667 = vxor.u32 %v1633, 2147483648
  %v1668 = vmul.f32 %v1667, 1.442695
  %v1669 = vpow.pop %v1668
  %v1670 = vadd.f32 %v1669, 1.0
  %v1671 = vrcp.pop %v1670
  %v1672 = vmul.f32 1.0, %v1671
  %v1674 = vrot.slane %v1633, 2
  %v1676 = vtanh.pop %v1674
  %1677 = vrot.lane.b32.xlu0 %v1633, 64
  %v1678 = vpop.permute.xlu0 %1677
  %v1679 = vrot.slane %v1678, 2
  %v1681 = vxor.u32 %v1679, 2147483648
  %v1682 = vmul.f32 %v1681, 1.442695
  %v1683 = vpow.pop %v1682
  %v1684 = vadd.f32 %v1683, 1.0
  %v1685 = vrcp.pop %v1684
  %v1686 = vmul.f32 1.0, %v1685
  %v1687 = vmul.f32 %v1672, %v1414
  %v1688 = vmul.f32 %v1672, %v1676
  %1690 = vrot.lane.b32.xlu0 %v1688, 64
  %v1691 = vpop.permute.xlu0 %1690
  %v1693 = vadd.f32 %v1687, %v1691
  %v1694 = vtanh.pop %v1693
  %1696 = vrot.lane.b32.xlu0 %v1694, 64
  %v1697 = vpop.permute.xlu0 %1696
  %v1699 = vmul.f32 %v1686, %v1697
  %s1700 = scalar_lea.vmem [#allocation2], 10
  %1701 = vst.msk [vmem:[%s1700] sm:$0x3] %vm299, %v1666
  %s1702 = scalar_lea.vmem [#allocation3], 4
  %1703 = vst.msk [vmem:[%s1702] sm:$0x3] %vm299, %v1699
  %v1704 = vld [vmem:[%s305] sm:$0xff]
  %v1705 = vld [vmem:[%s303] sm:$0xff]
  %v1706 = vld [vmem:[%s1] sm:$0xff]
  %v1707 = vld [vmem:[%s1 + $0x8] sm:$0xff]
  %v1708 = vld [vmem:[%s1 + $0x10] sm:$0xff]
  %v1709 = vld [vmem:[%s1 + $0x18] sm:$0xff]
  %v1710 = vld [vmem:[%s1 + $0x20] sm:$0xff]
  %v1711 = vld [vmem:[%s1 + $0x28] sm:$0xff]
  %v1712 = vld [vmem:[%s1 + $0x30] sm:$0xff]
  %v1713 = vld [vmem:[%s1 + $0x38] sm:$0xff]
  %v1714 = vld [vmem:[%s1 + $0x40] sm:$0xff]
  %v1715 = vld [vmem:[%s1 + $0x48] sm:$0xff]
  %v1716 = vld [vmem:[%s1 + $0x50] sm:$0xff]
  %v1717 = vld [vmem:[%s1 + $0x58] sm:$0xff]
  %v1718 = vld [vmem:[%s1 + $0x60] sm:$0xff]
  %v1719 = vld [vmem:[%s1 + $0x68] sm:$0xff]
  %v1720 = vld [vmem:[%s1 + $0x70] sm:$0xff]
  %v1721 = vld [vmem:[%s1 + $0x78] sm:$0xff]
  %v1723 = vsel %vm44, %v1666, 0
  %1725 = vmatprep.subr.mxu0 0.0
  %1726 = vmatpush1.msra.mxu0 0.0
  %1727 = vmatprep.subr.mxu0 0.0
  %1728 = vmatpush1.msra.mxu0 0.0
  %1729 = vmatprep.subr.mxu0 0.0
  %1730 = vmatpush1.msra.mxu0 0.0
  %1731 = vmatprep.subr.mxu0 0.0
  %1732 = vmatpush1.msra.mxu0 0.0
  %1733 = vmatprep.subr.mxu0 0.0
  %1734 = vmatpush1.msra.mxu0 0.0
  %1735 = vmatprep.subr.mxu0 0.0
  %1736 = vmatpush1.msra.mxu0 0.0
  %1737 = vmatprep.subr.mxu0 0.0
  %1738 = vmatpush1.msra.mxu0 0.0
  %1739 = vmatprep.subr.mxu0 0.0
  %1740 = vmatpush1.msra.mxu0 0.0
  %1741 = vmatprep.subr.mxu0 %v1721
  %1742 = vmatpush1.msra.mxu0 %v1720
  %1743 = vmatprep.subr.mxu0 %v1719
  %1744 = vmatpush1.msra.mxu0 %v1718
  %1745 = vmatprep.subr.mxu0 %v1717
  %1746 = vmatpush1.msra.mxu0 %v1716
  %1747 = vmatprep.subr.mxu0 %v1715
  %1748 = vmatpush1.msra.mxu0 %v1714
  %1749 = vmatprep.subr.mxu0 %v1713
  %1750 = vmatpush1.msra.mxu0 %v1712
  %1751 = vmatprep.subr.mxu0 %v1711
  %1752 = vmatpush1.msra.mxu0 %v1710
  %1753 = vmatprep.subr.mxu0 %v1709
  %1754 = vmatpush1.msra.mxu0 %v1708
  %1755 = vmatprep.subr.mxu0 %v1707
  %1756 = vmatpush1.msra.mxu0 %v1706
  %1757 = vmatprep.subr.mxu0 0.0
  %1758 = vmatpush2.msra.mxu0 0.0
  %1759 = vmatprep.subr.mxu0 0.0
  %1760 = vmatpush2.msra.mxu0 0.0
  %1761 = vmatprep.subr.mxu0 0.0
  %1762 = vmatpush2.msra.mxu0 0.0
  %1763 = vmatprep.subr.mxu0 0.0
  %1764 = vmatpush2.msra.mxu0 0.0
  %1765 = vmatprep.subr.mxu0 0.0
  %1766 = vmatpush2.msra.mxu0 0.0
  %1767 = vmatprep.subr.mxu0 0.0
  %1768 = vmatpush2.msra.mxu0 0.0
  %1769 = vmatprep.subr.mxu0 0.0
  %1770 = vmatpush2.msra.mxu0 0.0
  %1771 = vmatprep.subr.mxu0 0.0
  %1772 = vmatpush2.msra.mxu0 0.0
  %1773 = vmatprep.subr.mxu0 0.0
  %1774 = vmatpush2.msra.mxu0 0.0
  %1775 = vmatprep.subr.mxu0 0.0
  %1776 = vmatpush2.msra.mxu0 0.0
  %1777 = vmatprep.subr.mxu0 0.0
  %1778 = vmatpush2.msra.mxu0 0.0
  %1779 = vmatprep.subr.mxu0 0.0
  %1780 = vmatpush2.msra.mxu0 0.0
  %1781 = vmatprep.subr.mxu0 0.0
  %1782 = vmatpush2.msra.mxu0 0.0
  %1783 = vmatprep.subr.mxu0 0.0
  %1784 = vmatpush2.msra.mxu0 0.0
  %1785 = vmatprep.subr.mxu0 0.0
  %1786 = vmatpush2.msra.mxu0 0.0
  %1787 = vmatprep.subr.mxu0 0.0
  %1788 = vmatpush2.msra.mxu0 0.0
  %1789 = vmatprep.mubr.f32.mxu0 0.0
  %1790 = vmatmul.mubr.f32.gmra.mxu0 %v1723
  %v1791 = vpop.f32.mrf.mxu0
  %v1792 = vadd.f32 0.0, %v1791
  %v1793 = vpop.f32.mrf.mxu0
  %v1794 = vadd.f32 0.0, %v1793
  %1795 = vdwg.mxu0
  %v1798 = vcombine.low %v1792, %v1794
  %v1800 = vunpack.c.l.s4 1983009808
  %v1801 = vunpack.c.0.s8 %v1800
  %v1802 = vlaneseq
  %v1803 = vshrl.u32 %v1802, 7
  %v1804 = vsub.s32 %v1801, %v1803
  %v1805 = vrot.slane %v1798, %v1804
  %v1807 = vadd.f32 %v1704, %v1805
  %v1808 = vld [vmem:[%s2] sm:$0xff]
  %v1809 = vld [vmem:[%s2 + $0x8] sm:$0xff]
  %v1810 = vld [vmem:[%s2 + $0x10] sm:$0xff]
  %v1811 = vld [vmem:[%s2 + $0x18] sm:$0xff]
  %v1812 = vld [vmem:[%s2 + $0x20] sm:$0xff]
  %v1813 = vld [vmem:[%s2 + $0x28] sm:$0xff]
  %v1814 = vld [vmem:[%s2 + $0x30] sm:$0xff]
  %v1815 = vld [vmem:[%s2 + $0x38] sm:$0xff]
  %v1816 = vld [vmem:[%s2 + $0x40] sm:$0xff]
  %v1817 = vld [vmem:[%s2 + $0x48] sm:$0xff]
  %v1818 = vld [vmem:[%s2 + $0x50] sm:$0xff]
  %v1819 = vld [vmem:[%s2 + $0x58] sm:$0xff]
  %v1820 = vld [vmem:[%s2 + $0x60] sm:$0xff]
  %v1821 = vld [vmem:[%s2 + $0x68] sm:$0xff]
  %v1822 = vld [vmem:[%s2 + $0x70] sm:$0xff]
  %v1823 = vld [vmem:[%s2 + $0x78] sm:$0xff]
  %v1825 = vsel %vm44, %v1699, 0
  %1827 = vmatprep.subr.mxu0 0.0
  %1828 = vmatpush1.msra.mxu0 0.0
  %1829 = vmatprep.subr.mxu0 0.0
  %1830 = vmatpush1.msra.mxu0 0.0
  %1831 = vmatprep.subr.mxu0 0.0
  %1832 = vmatpush1.msra.mxu0 0.0
  %1833 = vmatprep.subr.mxu0 0.0
  %1834 = vmatpush1.msra.mxu0 0.0
  %1835 = vmatprep.subr.mxu0 0.0
  %1836 = vmatpush1.msra.mxu0 0.0
  %1837 = vmatprep.subr.mxu0 0.0
  %1838 = vmatpush1.msra.mxu0 0.0
  %1839 = vmatprep.subr.mxu0 0.0
  %1840 = vmatpush1.msra.mxu0 0.0
  %1841 = vmatprep.subr.mxu0 0.0
  %1842 = vmatpush1.msra.mxu0 0.0
  %1843 = vmatprep.subr.mxu0 %v1823
  %1844 = vmatpush1.msra.mxu0 %v1822
  %1845 = vmatprep.subr.mxu0 %v1821
  %1846 = vmatpush1.msra.mxu0 %v1820
  %1847 = vmatprep.subr.mxu0 %v1819
  %1848 = vmatpush1.msra.mxu0 %v1818
  %1849 = vmatprep.subr.mxu0 %v1817
  %1850 = vmatpush1.msra.mxu0 %v1816
  %1851 = vmatprep.subr.mxu0 %v1815
  %1852 = vmatpush1.msra.mxu0 %v1814
  %1853 = vmatprep.subr.mxu0 %v1813
  %1854 = vmatpush1.msra.mxu0 %v1812
  %1855 = vmatprep.subr.mxu0 %v1811
  %1856 = vmatpush1.msra.mxu0 %v1810
  %1857 = vmatprep.subr.mxu0 %v1809
  %1858 = vmatpush1.msra.mxu0 %v1808
  %1859 = vmatprep.subr.mxu0 0.0
  %1860 = vmatpush2.msra.mxu0 0.0
  %1861 = vmatprep.subr.mxu0 0.0
  %1862 = vmatpush2.msra.mxu0 0.0
  %1863 = vmatprep.subr.mxu0 0.0
  %1864 = vmatpush2.msra.mxu0 0.0
  %1865 = vmatprep.subr.mxu0 0.0
  %1866 = vmatpush2.msra.mxu0 0.0
  %1867 = vmatprep.subr.mxu0 0.0
  %1868 = vmatpush2.msra.mxu0 0.0
  %1869 = vmatprep.subr.mxu0 0.0
  %1870 = vmatpush2.msra.mxu0 0.0
  %1871 = vmatprep.subr.mxu0 0.0
  %1872 = vmatpush2.msra.mxu0 0.0
  %1873 = vmatprep.subr.mxu0 0.0
  %1874 = vmatpush2.msra.mxu0 0.0
  %1875 = vmatprep.subr.mxu0 0.0
  %1876 = vmatpush2.msra.mxu0 0.0
  %1877 = vmatprep.subr.mxu0 0.0
  %1878 = vmatpush2.msra.mxu0 0.0
  %1879 = vmatprep.subr.mxu0 0.0
  %1880 = vmatpush2.msra.mxu0 0.0
  %1881 = vmatprep.subr.mxu0 0.0
  %1882 = vmatpush2.msra.mxu0 0.0
  %1883 = vmatprep.subr.mxu0 0.0
  %1884 = vmatpush2.msra.mxu0 0.0
  %1885 = vmatprep.subr.mxu0 0.0
  %1886 = vmatpush2.msra.mxu0 0.0
  %1887 = vmatprep.subr.mxu0 0.0
  %1888 = vmatpush2.msra.mxu0 0.0
  %1889 = vmatprep.subr.mxu0 0.0
  %1890 = vmatpush2.msra.mxu0 0.0
  %1891 = vmatprep.mubr.f32.mxu0 0.0
  %1892 = vmatmul.mubr.f32.gmra.mxu0 %v1825
  %v1893 = vpop.f32.mrf.mxu0
  %v1894 = vadd.f32 0.0, %v1893
  %v1895 = vpop.f32.mrf.mxu0
  %v1896 = vadd.f32 0.0, %v1895
  %1897 = vdwg.mxu0
  %v1899 = vrot.slane %v1705, 4
  %v1903 = vcombine.low %v1894, %v1896
  %v1905 = vunpack.c.l.s4 1983009808
  %v1906 = vunpack.c.0.s8 %v1905
  %v1907 = vlaneseq
  %v1908 = vshrl.u32 %v1907, 7
  %v1909 = vsub.s32 %v1906, %v1908
  %v1910 = vrot.slane %v1903, %v1909
  %v1912 = vadd.f32 %v1899, %v1910
  %v1913 = vxor.u32 %v1807, 2147483648
  %v1914 = vmul.f32 %v1913, 1.442695
  %v1915 = vpow.pop %v1914
  %v1916 = vadd.f32 %v1915, 1.0
  %v1917 = vrcp.pop %v1916
  %v1918 = vmul.f32 1.0, %v1917
  %v1920 = vrot.slane %v1807, 2
  %v1922 = vtanh.pop %v1920
  %1923 = vrot.lane.b32.xlu0 %v1807, 64
  %v1924 = vpop.permute.xlu0 %1923
  %v1925 = vrot.slane %v1924, 2
  %v1927 = vxor.u32 %v1925, 2147483648
  %v1928 = vmul.f32 %v1927, 1.442695
  %v1929 = vpow.pop %v1928
  %v1930 = vadd.f32 %v1929, 1.0
  %v1931 = vrcp.pop %v1930
  %v1932 = vmul.f32 1.0, %v1931
  %v1933 = vmul.f32 %v1918, %v1660
  %v1934 = vmul.f32 %v1918, %v1922
  %1936 = vrot.lane.b32.xlu0 %v1934, 64
  %v1937 = vpop.permute.xlu0 %1936
  %v1939 = vadd.f32 %v1933, %v1937
  %v1940 = vtanh.pop %v1939
  %1942 = vrot.lane.b32.xlu0 %v1940, 64
  %v1943 = vpop.permute.xlu0 %1942
  %v1945 = vmul.f32 %v1932, %v1943
  %v1946 = vxor.u32 %v1912, 2147483648
  %v1947 = vmul.f32 %v1946, 1.442695
  %v1948 = vpow.pop %v1947
  %v1949 = vadd.f32 %v1948, 1.0
  %v1950 = vrcp.pop %v1949
  %v1951 = vmul.f32 1.0, %v1950
  %v1953 = vrot.slane %v1912, 2
  %v1955 = vtanh.pop %v1953
  %1956 = vrot.lane.b32.xlu0 %v1912, 64
  %v1957 = vpop.permute.xlu0 %1956
  %v1958 = vrot.slane %v1957, 2
  %v1960 = vxor.u32 %v1958, 2147483648
  %v1961 = vmul.f32 %v1960, 1.442695
  %v1962 = vpow.pop %v1961
  %v1963 = vadd.f32 %v1962, 1.0
  %v1964 = vrcp.pop %v1963
  %v1965 = vmul.f32 1.0, %v1964
  %v1966 = vmul.f32 %v1951, %v1693
  %v1967 = vmul.f32 %v1951, %v1955
  %1969 = vrot.lane.b32.xlu0 %v1967, 64
  %v1970 = vpop.permute.xlu0 %1969
  %v1972 = vadd.f32 %v1966, %v1970
  %v1973 = vtanh.pop %v1972
  %1975 = vrot.lane.b32.xlu0 %v1973, 64
  %v1976 = vpop.permute.xlu0 %1975
  %v1978 = vmul.f32 %v1965, %v1976
  %s1979 = scalar_lea.vmem [#allocation2], 12
  %1980 = vst.msk [vmem:[%s1979] sm:$0x3] %vm299, %v1945
  %s1981 = scalar_lea.vmem [#allocation3], 2
  %1982 = vst.msk [vmem:[%s1981] sm:$0x3] %vm299, %v1978
  %v1983 = vld [vmem:[%s26] sm:$0xff]
  %v1984 = vld [vmem:[%s0] sm:$0xff]
  %v1985 = vld [vmem:[%s1] sm:$0xff]
  %v1986 = vld [vmem:[%s1 + $0x8] sm:$0xff]
  %v1987 = vld [vmem:[%s1 + $0x10] sm:$0xff]
  %v1988 = vld [vmem:[%s1 + $0x18] sm:$0xff]
  %v1989 = vld [vmem:[%s1 + $0x20] sm:$0xff]
  %v1990 = vld [vmem:[%s1 + $0x28] sm:$0xff]
  %v1991 = vld [vmem:[%s1 + $0x30] sm:$0xff]
  %v1992 = vld [vmem:[%s1 + $0x38] sm:$0xff]
  %v1993 = vld [vmem:[%s1 + $0x40] sm:$0xff]
  %v1994 = vld [vmem:[%s1 + $0x48] sm:$0xff]
  %v1995 = vld [vmem:[%s1 + $0x50] sm:$0xff]
  %v1996 = vld [vmem:[%s1 + $0x58] sm:$0xff]
  %v1997 = vld [vmem:[%s1 + $0x60] sm:$0xff]
  %v1998 = vld [vmem:[%s1 + $0x68] sm:$0xff]
  %v1999 = vld [vmem:[%s1 + $0x70] sm:$0xff]
  %v2000 = vld [vmem:[%s1 + $0x78] sm:$0xff]
  %v2002 = vsel %vm44, %v1945, 0
  %2004 = vmatprep.subr.mxu0 0.0
  %2005 = vmatpush1.msra.mxu0 0.0
  %2006 = vmatprep.subr.mxu0 0.0
  %2007 = vmatpush1.msra.mxu0 0.0
  %2008 = vmatprep.subr.mxu0 0.0
  %2009 = vmatpush1.msra.mxu0 0.0
  %2010 = vmatprep.subr.mxu0 0.0
  %2011 = vmatpush1.msra.mxu0 0.0
  %2012 = vmatprep.subr.mxu0 0.0
  %2013 = vmatpush1.msra.mxu0 0.0
  %2014 = vmatprep.subr.mxu0 0.0
  %2015 = vmatpush1.msra.mxu0 0.0
  %2016 = vmatprep.subr.mxu0 0.0
  %2017 = vmatpush1.msra.mxu0 0.0
  %2018 = vmatprep.subr.mxu0 0.0
  %2019 = vmatpush1.msra.mxu0 0.0
  %2020 = vmatprep.subr.mxu0 %v2000
  %2021 = vmatpush1.msra.mxu0 %v1999
  %2022 = vmatprep.subr.mxu0 %v1998
  %2023 = vmatpush1.msra.mxu0 %v1997
  %2024 = vmatprep.subr.mxu0 %v1996
  %2025 = vmatpush1.msra.mxu0 %v1995
  %2026 = vmatprep.subr.mxu0 %v1994
  %2027 = vmatpush1.msra.mxu0 %v1993
  %2028 = vmatprep.subr.mxu0 %v1992
  %2029 = vmatpush1.msra.mxu0 %v1991
  %2030 = vmatprep.subr.mxu0 %v1990
  %2031 = vmatpush1.msra.mxu0 %v1989
  %2032 = vmatprep.subr.mxu0 %v1988
  %2033 = vmatpush1.msra.mxu0 %v1987
  %2034 = vmatprep.subr.mxu0 %v1986
  %2035 = vmatpush1.msra.mxu0 %v1985
  %2036 = vmatprep.subr.mxu0 0.0
  %2037 = vmatpush2.msra.mxu0 0.0
  %2038 = vmatprep.subr.mxu0 0.0
  %2039 = vmatpush2.msra.mxu0 0.0
  %2040 = vmatprep.subr.mxu0 0.0
  %2041 = vmatpush2.msra.mxu0 0.0
  %2042 = vmatprep.subr.mxu0 0.0
  %2043 = vmatpush2.msra.mxu0 0.0
  %2044 = vmatprep.subr.mxu0 0.0
  %2045 = vmatpush2.msra.mxu0 0.0
  %2046 = vmatprep.subr.mxu0 0.0
  %2047 = vmatpush2.msra.mxu0 0.0
  %2048 = vmatprep.subr.mxu0 0.0
  %2049 = vmatpush2.msra.mxu0 0.0
  %2050 = vmatprep.subr.mxu0 0.0
  %2051 = vmatpush2.msra.mxu0 0.0
  %2052 = vmatprep.subr.mxu0 0.0
  %2053 = vmatpush2.msra.mxu0 0.0
  %2054 = vmatprep.subr.mxu0 0.0
  %2055 = vmatpush2.msra.mxu0 0.0
  %2056 = vmatprep.subr.mxu0 0.0
  %2057 = vmatpush2.msra.mxu0 0.0
  %2058 = vmatprep.subr.mxu0 0.0
  %2059 = vmatpush2.msra.mxu0 0.0
  %2060 = vmatprep.subr.mxu0 0.0
  %2061 = vmatpush2.msra.mxu0 0.0
  %2062 = vmatprep.subr.mxu0 0.0
  %2063 = vmatpush2.msra.mxu0 0.0
  %2064 = vmatprep.subr.mxu0 0.0
  %2065 = vmatpush2.msra.mxu0 0.0
  %2066 = vmatprep.subr.mxu0 0.0
  %2067 = vmatpush2.msra.mxu0 0.0
  %2068 = vmatprep.mubr.f32.mxu0 0.0
  %2069 = vmatmul.mubr.f32.gmra.mxu0 %v2002
  %v2070 = vpop.f32.mrf.mxu0
  %v2071 = vadd.f32 0.0, %v2070
  %v2072 = vpop.f32.mrf.mxu0
  %v2073 = vadd.f32 0.0, %v2072
  %2074 = vdwg.mxu0
  %v2077 = vcombine.low %v2071, %v2073
  %v2079 = vunpack.c.l.s4 1983009808
  %v2080 = vunpack.c.0.s8 %v2079
  %v2081 = vlaneseq
  %v2082 = vshrl.u32 %v2081, 7
  %v2083 = vsub.s32 %v2080, %v2082
  %v2084 = vrot.slane %v2077, %v2083
  %v2086 = vadd.f32 %v1983, %v2084
  %v2087 = vld [vmem:[%s2] sm:$0xff]
  %v2088 = vld [vmem:[%s2 + $0x8] sm:$0xff]
  %v2089 = vld [vmem:[%s2 + $0x10] sm:$0xff]
  %v2090 = vld [vmem:[%s2 + $0x18] sm:$0xff]
  %v2091 = vld [vmem:[%s2 + $0x20] sm:$0xff]
  %v2092 = vld [vmem:[%s2 + $0x28] sm:$0xff]
  %v2093 = vld [vmem:[%s2 + $0x30] sm:$0xff]
  %v2094 = vld [vmem:[%s2 + $0x38] sm:$0xff]
  %v2095 = vld [vmem:[%s2 + $0x40] sm:$0xff]
  %v2096 = vld [vmem:[%s2 + $0x48] sm:$0xff]
  %v2097 = vld [vmem:[%s2 + $0x50] sm:$0xff]
  %v2098 = vld [vmem:[%s2 + $0x58] sm:$0xff]
  %v2099 = vld [vmem:[%s2 + $0x60] sm:$0xff]
  %v2100 = vld [vmem:[%s2 + $0x68] sm:$0xff]
  %v2101 = vld [vmem:[%s2 + $0x70] sm:$0xff]
  %v2102 = vld [vmem:[%s2 + $0x78] sm:$0xff]
  %v2104 = vsel %vm44, %v1978, 0
  %2106 = vmatprep.subr.mxu0 0.0
  %2107 = vmatpush1.msra.mxu0 0.0
  %2108 = vmatprep.subr.mxu0 0.0
  %2109 = vmatpush1.msra.mxu0 0.0
  %2110 = vmatprep.subr.mxu0 0.0
  %2111 = vmatpush1.msra.mxu0 0.0
  %2112 = vmatprep.subr.mxu0 0.0
  %2113 = vmatpush1.msra.mxu0 0.0
  %2114 = vmatprep.subr.mxu0 0.0
  %2115 = vmatpush1.msra.mxu0 0.0
  %2116 = vmatprep.subr.mxu0 0.0
  %2117 = vmatpush1.msra.mxu0 0.0
  %2118 = vmatprep.subr.mxu0 0.0
  %2119 = vmatpush1.msra.mxu0 0.0
  %2120 = vmatprep.subr.mxu0 0.0
  %2121 = vmatpush1.msra.mxu0 0.0
  %2122 = vmatprep.subr.mxu0 %v2102
  %2123 = vmatpush1.msra.mxu0 %v2101
  %2124 = vmatprep.subr.mxu0 %v2100
  %2125 = vmatpush1.msra.mxu0 %v2099
  %2126 = vmatprep.subr.mxu0 %v2098
  %2127 = vmatpush1.msra.mxu0 %v2097
  %2128 = vmatprep.subr.mxu0 %v2096
  %2129 = vmatpush1.msra.mxu0 %v2095
  %2130 = vmatprep.subr.mxu0 %v2094
  %2131 = vmatpush1.msra.mxu0 %v2093
  %2132 = vmatprep.subr.mxu0 %v2092
  %2133 = vmatpush1.msra.mxu0 %v2091
  %2134 = vmatprep.subr.mxu0 %v2090
  %2135 = vmatpush1.msra.mxu0 %v2089
  %2136 = vmatprep.subr.mxu0 %v2088
  %2137 = vmatpush1.msra.mxu0 %v2087
  %2138 = vmatprep.subr.mxu0 0.0
  %2139 = vmatpush2.msra.mxu0 0.0
  %2140 = vmatprep.subr.mxu0 0.0
  %2141 = vmatpush2.msra.mxu0 0.0
  %2142 = vmatprep.subr.mxu0 0.0
  %2143 = vmatpush2.msra.mxu0 0.0
  %2144 = vmatprep.subr.mxu0 0.0
  %2145 = vmatpush2.msra.mxu0 0.0
  %2146 = vmatprep.subr.mxu0 0.0
  %2147 = vmatpush2.msra.mxu0 0.0
  %2148 = vmatprep.subr.mxu0 0.0
  %2149 = vmatpush2.msra.mxu0 0.0
  %2150 = vmatprep.subr.mxu0 0.0
  %2151 = vmatpush2.msra.mxu0 0.0
  %2152 = vmatprep.subr.mxu0 0.0
  %2153 = vmatpush2.msra.mxu0 0.0
  %2154 = vmatprep.subr.mxu0 0.0
  %2155 = vmatpush2.msra.mxu0 0.0
  %2156 = vmatprep.subr.mxu0 0.0
  %2157 = vmatpush2.msra.mxu0 0.0
  %2158 = vmatprep.subr.mxu0 0.0
  %2159 = vmatpush2.msra.mxu0 0.0
  %2160 = vmatprep.subr.mxu0 0.0
  %2161 = vmatpush2.msra.mxu0 0.0
  %2162 = vmatprep.subr.mxu0 0.0
  %2163 = vmatpush2.msra.mxu0 0.0
  %2164 = vmatprep.subr.mxu0 0.0
  %2165 = vmatpush2.msra.mxu0 0.0
  %2166 = vmatprep.subr.mxu0 0.0
  %2167 = vmatpush2.msra.mxu0 0.0
  %2168 = vmatprep.subr.mxu0 0.0
  %2169 = vmatpush2.msra.mxu0 0.0
  %2170 = vmatprep.mubr.f32.mxu0 0.0
  %2171 = vmatmul.mubr.f32.gmra.mxu0 %v2104
  %v2172 = vpop.f32.mrf.mxu0
  %v2173 = vadd.f32 0.0, %v2172
  %v2174 = vpop.f32.mrf.mxu0
  %v2175 = vadd.f32 0.0, %v2174
  %2176 = vdwg.mxu0
  %v2178 = vrot.slane %v1984, 4
  %v2182 = vcombine.low %v2173, %v2175
  %v2184 = vunpack.c.l.s4 1983009808
  %v2185 = vunpack.c.0.s8 %v2184
  %v2186 = vlaneseq
  %v2187 = vshrl.u32 %v2186, 7
  %v2188 = vsub.s32 %v2185, %v2187
  %v2189 = vrot.slane %v2182, %v2188
  %v2191 = vadd.f32 %v2178, %v2189
  %v2192 = vxor.u32 %v2086, 2147483648
  %v2193 = vmul.f32 %v2192, 1.442695
  %v2194 = vpow.pop %v2193
  %v2195 = vadd.f32 %v2194, 1.0
  %v2196 = vrcp.pop %v2195
  %v2197 = vmul.f32 1.0, %v2196
  %v2199 = vrot.slane %v2086, 2
  %v2201 = vtanh.pop %v2199
  %2202 = vrot.lane.b32.xlu0 %v2086, 64
  %v2203 = vpop.permute.xlu0 %2202
  %v2204 = vrot.slane %v2203, 2
  %v2206 = vxor.u32 %v2204, 2147483648
  %v2207 = vmul.f32 %v2206, 1.442695
  %v2208 = vpow.pop %v2207
  %v2209 = vadd.f32 %v2208, 1.0
  %v2210 = vrcp.pop %v2209
  %v2211 = vmul.f32 1.0, %v2210
  %v2212 = vmul.f32 %v2197, %v1939
  %v2213 = vmul.f32 %v2197, %v2201
  %2215 = vrot.lane.b32.xlu0 %v2213, 64
  %v2216 = vpop.permute.xlu0 %2215
  %v2218 = vadd.f32 %v2212, %v2216
  %v2219 = vtanh.pop %v2218
  %2221 = vrot.lane.b32.xlu0 %v2219, 64
  %v2222 = vpop.permute.xlu0 %2221
  %v2224 = vmul.f32 %v2211, %v2222
  %v2225 = vxor.u32 %v2191, 2147483648
  %v2226 = vmul.f32 %v2225, 1.442695
  %v2227 = vpow.pop %v2226
  %v2228 = vadd.f32 %v2227, 1.0
  %v2229 = vrcp.pop %v2228
  %v2230 = vmul.f32 1.0, %v2229
  %v2232 = vrot.slane %v2191, 2
  %v2234 = vtanh.pop %v2232
  %2235 = vrot.lane.b32.xlu0 %v2191, 64
  %v2236 = vpop.permute.xlu0 %2235
  %v2237 = vrot.slane %v2236, 2
  %v2239 = vxor.u32 %v2237, 2147483648
  %v2240 = vmul.f32 %v2239, 1.442695
  %v2241 = vpow.pop %v2240
  %v2242 = vadd.f32 %v2241, 1.0
  %v2243 = vrcp.pop %v2242
  %v2244 = vmul.f32 1.0, %v2243
  %v2245 = vmul.f32 %v2230, %v1972
  %v2246 = vmul.f32 %v2230, %v2234
  %2248 = vrot.lane.b32.xlu0 %v2246, 64
  %v2249 = vpop.permute.xlu0 %2248
  %v2251 = vadd.f32 %v2245, %v2249
  %v2252 = vtanh.pop %v2251
  %2254 = vrot.lane.b32.xlu0 %v2252, 64
  %v2255 = vpop.permute.xlu0 %2254
  %v2257 = vmul.f32 %v2244, %v2255
  %s2258 = scalar_lea.vmem [#allocation2], 14
  %2259 = vst.msk [vmem:[%s2258] sm:$0x3] %vm299, %v2224
  %2260 = vst.msk [vmem:[#allocation3] sm:$0x3] %vm299, %v2257
  %v2261 = vld [vmem:[#allocation2] sm:$0x3]
  %v2262 = vld [vmem:[#allocation2 + $0x2] sm:$0x3]
  %v2263 = vld [vmem:[#allocation2 + $0x4] sm:$0x3]
  %v2264 = vld [vmem:[#allocation2 + $0x6] sm:$0x3]
  %v2265 = vld [vmem:[#allocation2 + $0x8] sm:$0x3]
  %v2266 = vld [vmem:[#allocation2 + $0xa] sm:$0x3]
  %v2267 = vld [vmem:[#allocation2 + $0xc] sm:$0x3]
  %v2268 = vld [vmem:[#allocation2 + $0xe] sm:$0x3]
  %v2269 = vld [vmem:[%s3] sm:$0x1]
  %v2271 = vlaneseq
  %v2272 = vshrl.u32 %v2271, 7
  %v2273 = vsub.s32 0, %v2272
  %v2274 = vrot.slane %v2269, %v2273
  %v2276 = vmul.f32 %v2261, %v2274
  %v2277 = vmul.f32 %v2262, %v2274
  %v2278 = vmul.f32 %v2263, %v2274
  %v2279 = vmul.f32 %v2264, %v2274
  %v2280 = vmul.f32 %v2265, %v2274
  %v2281 = vmul.f32 %v2266, %v2274
  %v2282 = vmul.f32 %v2267, %v2274
  %v2283 = vmul.f32 %v2268, %v2274
  %v2284 = vsel %vm299, %v2276, 0.0
  %2285 = vadd.xlane.f32.xlu0 %v2284
  %v2286 = vpop.xlane.xlu0 %2285
  %v2287 = vsel %vm299, %v2277, 0.0
  %2288 = vadd.xlane.f32.xlu0 %v2287
  %v2289 = vpop.xlane.xlu0 %2288
  %v2290 = vsel %vm299, %v2278, 0.0
  %2291 = vadd.xlane.f32.xlu0 %v2290
  %v2292 = vpop.xlane.xlu0 %2291
  %v2293 = vsel %vm299, %v2279, 0.0
  %2294 = vadd.xlane.f32.xlu0 %v2293
  %v2295 = vpop.xlane.xlu0 %2294
  %v2296 = vsel %vm299, %v2280, 0.0
  %2297 = vadd.xlane.f32.xlu0 %v2296
  %v2298 = vpop.xlane.xlu0 %2297
  %v2299 = vsel %vm299, %v2281, 0.0
  %2300 = vadd.xlane.f32.xlu0 %v2299
  %v2301 = vpop.xlane.xlu0 %2300
  %v2302 = vsel %vm299, %v2282, 0.0
  %2303 = vadd.xlane.f32.xlu0 %v2302
  %v2304 = vpop.xlane.xlu0 %2303
  %v2305 = vsel %vm299, %v2283, 0.0
  %2306 = vadd.xlane.f32.xlu0 %v2305
  %v2307 = vpop.xlane.xlu0 %2306
  %v2308 = vld [vmem:[#allocation3] sm:$0x3]
  %v2309 = vld [vmem:[#allocation3 + $0x2] sm:$0x3]
  %v2310 = vld [vmem:[#allocation3 + $0x4] sm:$0x3]
  %v2311 = vld [vmem:[#allocation3 + $0x6] sm:$0x3]
  %v2312 = vld [vmem:[#allocation3 + $0x8] sm:$0x3]
  %v2313 = vld [vmem:[#allocation3 + $0xa] sm:$0x3]
  %v2314 = vld [vmem:[#allocation3 + $0xc] sm:$0x3]
  %v2315 = vld [vmem:[#allocation3 + $0xe] sm:$0x3]
  %v2316 = vld [vmem:[%s4] sm:$0x1]
  %v2318 = vlaneseq
  %v2319 = vshrl.u32 %v2318, 7
  %v2320 = vsub.s32 0, %v2319
  %v2321 = vrot.slane %v2316, %v2320
  %v2323 = vmul.f32 %v2308, %v2321
  %v2324 = vmul.f32 %v2309, %v2321
  %v2325 = vmul.f32 %v2310, %v2321
  %v2326 = vmul.f32 %v2311, %v2321
  %v2327 = vmul.f32 %v2312, %v2321
  %v2328 = vmul.f32 %v2313, %v2321
  %v2329 = vmul.f32 %v2314, %v2321
  %v2330 = vmul.f32 %v2315, %v2321
  %v2331 = vsel %vm299, %v2323, 0.0
  %2332 = vadd.xlane.f32.xlu0 %v2331
  %v2333 = vpop.xlane.xlu0 %2332
  %v2334 = vsel %vm299, %v2324, 0.0
  %2335 = vadd.xlane.f32.xlu0 %v2334
  %v2336 = vpop.xlane.xlu0 %2335
  %v2337 = vsel %vm299, %v2325, 0.0
  %2338 = vadd.xlane.f32.xlu0 %v2337
  %v2339 = vpop.xlane.xlu0 %2338
  %v2340 = vsel %vm299, %v2326, 0.0
  %2341 = vadd.xlane.f32.xlu0 %v2340
  %v2342 = vpop.xlane.xlu0 %2341
  %v2343 = vsel %vm299, %v2327, 0.0
  %2344 = vadd.xlane.f32.xlu0 %v2343
  %v2345 = vpop.xlane.xlu0 %2344
  %v2346 = vsel %vm299, %v2328, 0.0
  %2347 = vadd.xlane.f32.xlu0 %v2346
  %v2348 = vpop.xlane.xlu0 %2347
  %v2349 = vsel %vm299, %v2329, 0.0
  %2350 = vadd.xlane.f32.xlu0 %v2349
  %v2351 = vpop.xlane.xlu0 %2350
  %v2352 = vsel %vm299, %v2330, 0.0
  %2353 = vadd.xlane.f32.xlu0 %v2352
  %v2354 = vpop.xlane.xlu0 %2353
  %v2355 = vadd.f32 %v2286, %v2333
  %v2356 = vadd.f32 %v2289, %v2336
  %v2357 = vadd.f32 %v2292, %v2339
  %v2358 = vadd.f32 %v2295, %v2342
  %v2359 = vadd.f32 %v2298, %v2345
  %v2360 = vadd.f32 %v2301, %v2348
  %v2361 = vadd.f32 %v2304, %v2351
  %v2362 = vadd.f32 %v2307, %v2354
  %v2363 = vld [vmem:[#allocation4] sm:$0x1]
  %v2365 = vlaneseq
  %v2366 = vshrl.u32 %v2365, 7
  %v2367 = vsub.s32 0, %v2366
  %v2368 = vrot.slane %v2363, %v2367
  %v2370 = vadd.f32 %v2355, %v2368
  %v2371 = vadd.f32 %v2356, %v2368
  %v2372 = vadd.f32 %v2357, %v2368
  %v2373 = vadd.f32 %v2358, %v2368
  %v2374 = vadd.f32 %v2359, %v2368
  %v2375 = vadd.f32 %v2360, %v2368
  %v2376 = vadd.f32 %v2361, %v2368
  %v2377 = vadd.f32 %v2362, %v2368
  %v2378 = vxor.u32 %v2370, 2147483648
  %v2379 = vxor.u32 %v2371, 2147483648
  %v2380 = vxor.u32 %v2372, 2147483648
  %v2381 = vxor.u32 %v2373, 2147483648
  %v2382 = vxor.u32 %v2374, 2147483648
  %v2383 = vxor.u32 %v2375, 2147483648
  %v2384 = vxor.u32 %v2376, 2147483648
  %v2385 = vxor.u32 %v2377, 2147483648
  %v2386 = vmul.f32 %v2378, 1.442695
  %v2387 = vpow.pop %v2386
  %v2388 = vmul.f32 %v2379, 1.442695
  %v2389 = vpow.pop %v2388
  %v2390 = vmul.f32 %v2380, 1.442695
  %v2391 = vpow.pop %v2390
  %v2392 = vmul.f32 %v2381, 1.442695
  %v2393 = vpow.pop %v2392
  %v2394 = vmul.f32 %v2382, 1.442695
  %v2395 = vpow.pop %v2394
  %v2396 = vmul.f32 %v2383, 1.442695
  %v2397 = vpow.pop %v2396
  %v2398 = vmul.f32 %v2384, 1.442695
  %v2399 = vpow.pop %v2398
  %v2400 = vmul.f32 %v2385, 1.442695
  %v2401 = vpow.pop %v2400
  %v2402 = vadd.f32 %v2387, 1.0
  %v2403 = vadd.f32 %v2389, 1.0
  %v2404 = vadd.f32 %v2391, 1.0
  %v2405 = vadd.f32 %v2393, 1.0
  %v2406 = vadd.f32 %v2395, 1.0
  %v2407 = vadd.f32 %v2397, 1.0
  %v2408 = vadd.f32 %v2399, 1.0
  %v2409 = vadd.f32 %v2401, 1.0
  %v2410 = vrcp.pop %v2402
  %v2411 = vmul.f32 1.0, %v2410
  %v2412 = vrcp.pop %v2403
  %v2413 = vmul.f32 1.0, %v2412
  %v2414 = vrcp.pop %v2404
  %v2415 = vmul.f32 1.0, %v2414
  %v2416 = vrcp.pop %v2405
  %v2417 = vmul.f32 1.0, %v2416
  %v2418 = vrcp.pop %v2406
  %v2419 = vmul.f32 1.0, %v2418
  %v2420 = vrcp.pop %v2407
  %v2421 = vmul.f32 1.0, %v2420
  %v2422 = vrcp.pop %v2408
  %v2423 = vmul.f32 1.0, %v2422
  %v2424 = vrcp.pop %v2409
  %v2425 = vmul.f32 1.0, %v2424
  %vm2426 = vcmask 1024
  %2427 = vst.msk [vmem:[%s6] sm:$0x3] %vm2426, %v2411
  %2428 = vst.msk [vmem:[%s6 + $0x2] sm:$0x3] %vm2426, %v2413
  %2429 = vst.msk [vmem:[%s6 + $0x4] sm:$0x3] %vm2426, %v2415
  %2430 = vst.msk [vmem:[%s6 + $0x6] sm:$0x3] %vm2426, %v2417
  %2431 = vst.msk [vmem:[%s6 + $0x8] sm:$0x3] %vm2426, %v2419
  %2432 = vst.msk [vmem:[%s6 + $0xa] sm:$0x3] %vm2426, %v2421
  %2433 = vst.msk [vmem:[%s6 + $0xc] sm:$0x3] %vm2426, %v2423
  %2434 = vst.msk [vmem:[%s6 + $0xe] sm:$0x3] %vm2426, %v2425
  // Predicated region
  $region26: #{lstm_forward.3} parent=0 // pred_check
    _
  $region27: #{lstm_forward.3} parent=0 // pred_check_branch
    %2436 = sbr.rel (0) target = $region29
  $region28: #{lstm_forward.3} parent=0 // pred_region
    _
  $region29: #{lstm_forward.3} parent=0 // pred_fallthru
    _
  // Predicated region
  $region30: #{lstm_forward.3} parent=0 // pred_check
    _
  $region31: #{lstm_forward.3} parent=0 // pred_check_branch
    %2438 = sbr.rel (0) target = $region33
  $region32: #{lstm_forward.3} parent=0 // pred_region
    _
  $region33: #{lstm_forward.3} parent=0 // pred_fallthru
    _

</llo_original>
